<compile_context>
chip_gen: v7x
topology: tpu7x:2x2x1
jax: 0.10.0
libtpu: 0.0.40
codegen_flags: <defaults>
</compile_context>

<pallas_src>
import functools

import numpy as np
import jax
import jax.numpy as jnp
from jax import lax
from jax.experimental import pallas as pl
from jax.experimental.pallas import tpu as pltpu


# ----------------------------------------------------------------------------
# Host-side triplet selector (equivalent of an "AllTripletSelector"):
# for every label l, all anchor/positive pairs (a < p) with label l are
# combined with every negative whose label != l.  Deterministic, no RNG.
# ----------------------------------------------------------------------------
def all_triplets_selector(target_np):
    target_np = np.asarray(target_np)
    triplets = []
    for lbl in np.unique(target_np):
        pos_idx = np.where(target_np == lbl)[0]
        neg_idx = np.where(target_np != lbl)[0]
        if len(pos_idx) < 2 or len(neg_idx) == 0:
            continue
        for ai in range(len(pos_idx)):
            for pi in range(ai + 1, len(pos_idx)):
                for n in neg_idx:
                    triplets.append((pos_idx[ai], pos_idx[pi], n))
    if not triplets:
        return np.zeros((0, 3), dtype=np.int32)
    return np.asarray(triplets, dtype=np.int32)


# ----------------------------------------------------------------------------
# Pallas kernel: one independent grid step per block of `block_t` triplets.
#   emb_ref : VMEM (Npad, Dpad) f32   (constant-index resident embeddings)
#   idx_ref : VMEM (TB, 3)   int32    (packed anchor/positive/negative block)
#   out_ref : VMEM (TB, 1)   f32      (masked per-triplet squared hinge loss)
# ----------------------------------------------------------------------------
def _triplet_loss_kernel(emb_ref, idx_ref, out_ref, *, margin, num_triplets,
                         block_t):
    n_pad = emb_ref.shape[0]
    e = emb_ref[...]                                           # (Npad, Dpad)

    a_idx = idx_ref[:, 0:1]                                    # (TB, 1) int32
    p_idx = idx_ref[:, 1:2]
    n_idx = idx_ref[:, 2:3]

    # One-hot selectors (exact 0.0/1.0 rows) -> MXU row gathers of E.
    lane = lax.broadcasted_iota(jnp.int32, (block_t, n_pad), 1)
    oh_a = (a_idx == lane).astype(jnp.float32)                 # (TB, Npad)
    oh_p = (p_idx == lane).astype(jnp.float32)
    oh_n = (n_idx == lane).astype(jnp.float32)

    ga = jnp.dot(oh_a, e, preferred_element_type=jnp.float32)  # (TB, Dpad)
    gp = jnp.dot(oh_p, e, preferred_element_type=jnp.float32)
    gn = jnp.dot(oh_n, e, preferred_element_type=jnp.float32)

    # Direct (a-p)^2 / (a-n)^2 distances (numerically safe, no cancellation).
    dap = ga - gp
    dan = ga - gn
    d2_ap = jnp.sum(dap * dap, axis=1, keepdims=True)          # (TB, 1)
    d2_an = jnp.sum(dan * dan, axis=1, keepdims=True)

    # Single EUP sqrt on a packed (TB, 2) tile instead of two (TB, 1) calls.
    d = jnp.sqrt(jnp.concatenate([d2_ap, d2_an], axis=1))      # (TB, 2)
    hinge = jnp.maximum(d[:, 0:1] - d[:, 1:2] + margin, 0.0)   # (TB, 1)

    # In-kernel validity mask: global triplet row < true triplet count.
    row = (pl.program_id(0) * block_t
           + lax.broadcasted_iota(jnp.int32, (block_t, 1), 0))
    valid = row < num_triplets
    out_ref[...] = jnp.where(valid, hinge * hinge, 0.0)


def online_triplet_loss_v2(embeddings, triplets, margin, *, block_t=512):
    """Pallas implementation of OnlineTripletLossV2.forward given mined triplets.

    Returns (mean_loss: f32 scalar, num_triplets: int).
    """
    n, d = embeddings.shape
    t = int(triplets.shape[0])
    if t == 0:
        # No valid triplets mined: guard the 1/T division (kernel not launched).
        return jnp.zeros((), jnp.float32), 0

    n_pad = max(128, pl.cdiv(n, 128) * 128)   # lane dim of one-hots / MXU K dim
    d_pad = max(128, pl.cdiv(d, 128) * 128)
    t_pad = pl.cdiv(t, block_t) * block_t
    num_blocks = t_pad // block_t

    emb = jnp.zeros((n_pad, d_pad), jnp.float32)
    emb = emb.at[:n, :d].set(embeddings.astype(jnp.float32))

    # One packed index table (padded rows use index 0; masked in-kernel).
    idx = jnp.zeros((t_pad, 3), jnp.int32).at[:t, :].set(
        triplets.astype(jnp.int32))

    kernel = functools.partial(
        _triplet_loss_kernel,
        margin=float(margin), num_triplets=t, block_t=block_t)

    # Rough VMEM budget: double-buffered emb + idx + out tiles, plus headroom
    # for the (TB, Npad)/(TB, Dpad) kernel temps.  Floor of 16 MiB is safe on
    # v5e/v6e/v7x and scales up automatically for large N / D / block_t.
    vmem_bytes = (2 * n_pad * d_pad * 4
                  + 4 * block_t * 128 * 4
                  + 8 * block_t * max(n_pad, d_pad) * 4
                  + (2 << 20))
    vmem_limit = int(max(vmem_bytes, 16 << 20))

    per_triplet = pl.pallas_call(
        kernel,
        out_shape=jax.ShapeDtypeStruct((t_pad, 1), jnp.float32),
        grid_spec=pltpu.PrefetchScalarGridSpec(
            num_scalar_prefetch=0,
            grid=(num_blocks,),
            in_specs=[
                pl.BlockSpec((n_pad, d_pad), lambda i: (0, 0)),   # resident E
                pl.BlockSpec((block_t, 3), lambda i: (i, 0)),     # packed a/p/n
            ],
            out_specs=pl.BlockSpec((block_t, 1), lambda i: (i, 0)),
        ),
        compiler_params=pltpu.CompilerParams(
            dimension_semantics=("parallel",),    # blocks are independent
            vmem_limit_bytes=vmem_limit,
        ),
    )(emb, idx)

    loss = jnp.sum(per_triplet) * (1.0 / float(t))
    return loss, t


def _reference(embeddings, triplets, margin):
    a = embeddings[triplets[:, 0]]
    p = embeddings[triplets[:, 1]]
    n = embeddings[triplets[:, 2]]
    ap = jnp.sqrt(jnp.sum((a - p) ** 2, axis=1))
    an = jnp.sqrt(jnp.sum((a - n) ** 2, axis=1))
    return jnp.mean(jnp.maximum(ap - an + margin, 0.0) ** 2)


if __name__ == "__main__":
    margin = 1.0

    # Deterministic inputs: 24 embeddings of dim 64, 2 classes of 12
    # -> 2 * (C(12,2) * 12) = 1584 triplets.  With block_t=512 that is 4 grid
    # blocks (last block 48 real + 464 padded triplets), exercising both the
    # multi-block parallel grid and the in-kernel padded-triplet masking, plus
    # D-dimension zero-padding (64 -> 128).
    key = jax.random.PRNGKey(0)
    embeddings = jax.random.normal(key, (24, 64), dtype=jnp.float32)
    target = np.array([0] * 12 + [1] * 12, dtype=np.int32)

    # Host-side triplet mining (stands in for triplet_selector.get_triplets).
    triplets = all_triplets_selector(target)            # (1584, 3) int32
    triplets = jnp.asarray(triplets, dtype=jnp.int32)

    loss, num_triplets = online_triplet_loss_v2(embeddings, triplets, margin)
    loss = jax.block_until_ready(loss)

    ref = _reference(embeddings, triplets, margin)
    assert num_triplets == triplets.shape[0]
    # The one-hot MXU gather is exact in f32; only reduction-order rounding
    # differs from the direct reference.
    assert np.allclose(np.asarray(loss), np.asarray(ref), rtol=1e-3, atol=1e-3), (
        loss, ref)

    print("KERNEL_OK")
</pallas_src>

<mosaic_0001>
module attributes {stable_mosaic.version = 11 : i64} {
  func.func @_triplet_loss_kernel(%arg0: i32, %arg1: memref<128x128xf32, #tpu.memory_space<vmem>>, %arg2: memref<512x3xi32, #tpu.memory_space<vmem>>, %arg3: memref<512x1xf32, #tpu.memory_space<vmem>>) attributes {dimension_semantics = [#tpu.dimension_semantics<parallel>], iteration_bounds = array<i64: 4>, scalar_prefetch = 0 : i64, scratch_operands = 0 : i64, tpu.core_type = #tpu.core_type<tc>, window_params = [{pipeline_mode = #tpu.pipeline_mode<synchronous>, transform_indices = @transform_0, window_bounds = array<i64: 128, 128>}, {transform_indices = @transform_1, window_bounds = array<i64: 512, 3>}, {transform_indices = @transform_2, window_bounds = array<i64: 512, 1>}]} {
    %c0 = arith.constant 0 : index
    %c0_0 = arith.constant 0 : index
    %0 = vector.load %arg1[%c0, %c0_0] : memref<128x128xf32, #tpu.memory_space<vmem>>, vector<128x128xf32>
    %c0_1 = arith.constant 0 : index
    %c0_2 = arith.constant 0 : index
    %1 = vector.load %arg2[%c0_1, %c0_2] : memref<512x3xi32, #tpu.memory_space<vmem>>, vector<512x1xi32>
    %c0_3 = arith.constant 0 : index
    %c1 = arith.constant 1 : index
    %2 = vector.load %arg2[%c0_3, %c1] : memref<512x3xi32, #tpu.memory_space<vmem>>, vector<512x1xi32>
    %c0_4 = arith.constant 0 : index
    %c2 = arith.constant 2 : index
    %3 = vector.load %arg2[%c0_4, %c2] : memref<512x3xi32, #tpu.memory_space<vmem>>, vector<512x1xi32>
    %4 = tpu.iota {dimensions = array<i32: 1>} : vector<512x128xi32>
    %5 = vector.broadcast %1 : vector<512x1xi32> to vector<512x128xi32>
    %6 = arith.cmpi eq, %5, %4 : vector<512x128xi32>
    %7 = arith.extui %6 : vector<512x128xi1> to vector<512x128xi32>
    %8 = arith.sitofp %7 : vector<512x128xi32> to vector<512x128xf32>
    %9 = vector.broadcast %2 : vector<512x1xi32> to vector<512x128xi32>
    %10 = arith.cmpi eq, %9, %4 : vector<512x128xi32>
    %11 = arith.extui %10 : vector<512x128xi1> to vector<512x128xi32>
    %12 = arith.sitofp %11 : vector<512x128xi32> to vector<512x128xf32>
    %13 = vector.broadcast %3 : vector<512x1xi32> to vector<512x128xi32>
    %14 = arith.cmpi eq, %13, %4 : vector<512x128xi32>
    %15 = arith.extui %14 : vector<512x128xi1> to vector<512x128xi32>
    %16 = arith.sitofp %15 : vector<512x128xi32> to vector<512x128xf32>
    %cst = arith.constant dense<0.000000e+00> : vector<512x128xf32>
    %17 = tpu.matmul %8, %0, %cst {dimension_numbers = #tpu.dot_dimension_numbers<[1], [0], [0], [1], [0, 0, 1, 1], [], []>} : vector<512x128xf32>, vector<128x128xf32>, vector<512x128xf32> -> vector<512x128xf32>
    %cst_5 = arith.constant dense<0.000000e+00> : vector<512x128xf32>
    %18 = tpu.matmul %12, %0, %cst_5 {dimension_numbers = #tpu.dot_dimension_numbers<[1], [0], [0], [1], [0, 0, 1, 1], [], []>} : vector<512x128xf32>, vector<128x128xf32>, vector<512x128xf32> -> vector<512x128xf32>
    %cst_6 = arith.constant dense<0.000000e+00> : vector<512x128xf32>
    %19 = tpu.matmul %16, %0, %cst_6 {dimension_numbers = #tpu.dot_dimension_numbers<[1], [0], [0], [1], [0, 0, 1, 1], [], []>} : vector<512x128xf32>, vector<128x128xf32>, vector<512x128xf32> -> vector<512x128xf32>
    %20 = arith.subf %17, %18 : vector<512x128xf32>
    %21 = arith.subf %17, %19 : vector<512x128xf32>
    %22 = arith.mulf %20, %20 : vector<512x128xf32>
    %cst_7 = arith.constant dense<0.000000e+00> : vector<512xf32>
    %23 = vector.multi_reduction <add>, %22, %cst_7 [1] : vector<512x128xf32> to vector<512xf32>
    %24 = vector.shape_cast %23 : vector<512xf32> to vector<512x1xf32>
    %25 = arith.mulf %21, %21 : vector<512x128xf32>
    %cst_8 = arith.constant dense<0.000000e+00> : vector<512xf32>
    %26 = vector.multi_reduction <add>, %25, %cst_8 [1] : vector<512x128xf32> to vector<512xf32>
    %27 = vector.shape_cast %26 : vector<512xf32> to vector<512x1xf32>
    %28 = tpu.concatenate %24, %27 in 1 : vector<512x1xf32>, vector<512x1xf32> -> vector<512x2xf32>
    %29 = math.sqrt %28 : vector<512x2xf32>
    %30 = vector.extract_strided_slice %29 {offsets = [0, 0], sizes = [512, 1], strides = [1, 1]} : vector<512x2xf32> to vector<512x1xf32>
    %31 = vector.extract_strided_slice %29 {offsets = [0, 1], sizes = [512, 1], strides = [1, 1]} : vector<512x2xf32> to vector<512x1xf32>
    %32 = arith.subf %30, %31 : vector<512x1xf32>
    %cst_9 = arith.constant 1.000000e+00 : f32
    %33 = vector.broadcast %cst_9 : f32 to vector<512x1xf32>
    %34 = arith.addf %32, %33 : vector<512x1xf32>
    %cst_10 = arith.constant 0.000000e+00 : f32
    %35 = vector.broadcast %cst_10 : f32 to vector<512x1xf32>
    %36 = arith.maximumf %34, %35 : vector<512x1xf32>
    %c512_i32 = arith.constant 512 : i32
    %37 = arith.muli %arg0, %c512_i32 : i32
    %38 = tpu.iota {dimensions = array<i32: 0>} : vector<512x1xi32>
    %39 = vector.broadcast %37 : i32 to vector<512x1xi32>
    %40 = arith.addi %39, %38 : vector<512x1xi32>
    %c1584_i32 = arith.constant 1584 : i32
    %41 = vector.broadcast %c1584_i32 : i32 to vector<512x1xi32>
    %42 = arith.cmpi slt, %40, %41 : vector<512x1xi32>
    %43 = arith.mulf %36, %36 : vector<512x1xf32>
    %cst_11 = arith.constant 0.000000e+00 : f32
    %44 = vector.broadcast %cst_11 : f32 to vector<512x1xf32>
    %45 = arith.select %42, %43, %44 : vector<512x1xi1>, vector<512x1xf32>
    %c0_12 = arith.constant 0 : index
    %c0_13 = arith.constant 0 : index
    %46 = vector.load %arg3[%c0_12, %c0_13] : memref<512x1xf32, #tpu.memory_space<vmem>>, vector<512x1xf32>
    tpu.vector_store %arg3[%c0_12, %c0_13], %45 {strides = array<i32>} : memref<512x1xf32, #tpu.memory_space<vmem>>, vector<512x1xf32>,
    return
  }
  func.func @transform_0(%arg0: i32) -> (i32, i32) {
    %c0_i32 = arith.constant 0 : i32
    %c0_i32_0 = arith.constant 0 : i32
    %c0_i32_1 = arith.constant 0 : i32
    return %c0_i32, %c0_i32_0 : i32, i32
  }
  func.func @transform_1(%arg0: i32) -> (i32, i32) {
    %c0_i32 = arith.constant 0 : i32
    %c0_i32_0 = arith.constant 0 : i32
    return %arg0, %c0_i32 : i32, i32
  }
  func.func @transform_2(%arg0: i32) -> (i32, i32) {
    %c0_i32 = arith.constant 0 : i32
    %c0_i32_0 = arith.constant 0 : i32
    return %arg0, %c0_i32 : i32, i32
  }
}

</mosaic_0001>

<llo_original>
// kernel: tpu_custom_call.1
$region0: #{tpu_custom_call.1}
  #allocation0 [shape = 'u32[]', space=smem, size = 0x4, offset = 0x4, fixed_abs, tag = 'smem constant byte address 0x4 - core index']
  #allocation1 [shape = 'u32[144,128]{1,0:T(1,128)}', space=vmem, size = 0x12000, scoped, tag = 'internal scratch']
  %s0 = inlined_call_operand.vmem [shape: f32[128,128], index: 0, kind: input, shape index: {}]
  %s1 = inlined_call_operand.vmem [shape: s32[2048,3], index: 1, kind: input, shape index: {}]
  %s2 = inlined_call_operand.vmem [shape: f32[2048,1], index: 2, kind: output, shape index: {}]
  %s3 = sld [smem:[#allocation0]]
  $region41: #{tpu_custom_call.1} parent=0
    _
  %s5 = ssub.s32 1, %s3
  %s6 = scalar_select 0, %s5, %s3
  loop: start=0, step=1, limit=6
  $region2: #{tpu_custom_call.1} parent=0 // loop_pre_header
    _
  $region3: #{tpu_custom_call.1} parent=0 // loop_header
    %s8 = sphi 0, %s12
    %p9 = scmp.ge.s32.totalorder %s8, 6
    %s16 = sphi 0, %s16
    %s18 = sphi 0, %s16
    %s19 = sphi 0, %s18
    %s33 = sphi 0, %s19
    %s39 = sphi 0, %s41
    %s42 = sphi 0, %s39
    %s43 = sphi 0, %s42
    %s59 = sphi 0, %s43
    %s65 = sphi 0, %s67
    %s68 = sphi 0, %s65
    %s69 = sphi 0, %s68
    %s85 = sphi 0, %s69
  $region4: #{tpu_custom_call.1} parent=0 // loop_header_branch
    %11 = sbr.rel (%p9) target = $region8
  $region5: #{tpu_custom_call.1} parent=0 // loop_body
    %s13 = ssub.s32 %s8, 1
    %s14 = ssub.s32 %s8, 2
    %s15 = sadd.s32 %s8, 1
    %s17 = sadd.s32 %s16, 1
    %p20 = scmp.eq.s32.totalorder %s8, 3
    %p21 = scmp.ne.s32.totalorder %s16, %s18
    %p22 = scmp.eq.s32.totalorder %s8, 0
    %p23 = por %p21, %p22
    %p24 = scmp.ne.s32.totalorder %s16, %s18
    %p25 = scmp.eq.s32.totalorder %s13, 3
    %p26 = por %p24, %p25
    %p27 = scmp.ne.s32.totalorder %s18, %s19
    %p28 = scmp.eq.s32.totalorder %s13, 0
    %p29 = por %p27, %p28
    %p30 = scmp.ne.s32.totalorder %s18, %s19
    %p31 = scmp.eq.s32.totalorder %s14, 3
    %p32 = por %p30, %p31
    %p34 = scmp.ne.s32.totalorder %s19, %s33
    %p35 = scmp.eq.s32.totalorder %s14, 0
    %p36 = por %p34, %p35
    %s37 = ssub.s32 %s8, %s15
    %p38 = scmp.eq.s32.totalorder %s37, 0
    %s40 = sadd.s32 %s39, 1
    %s41 = scalar_select %p38, %s39, %s40
    %p44 = pneg %p38
    %p45 = scmp.eq.s32.totalorder %s8, 3
    %p46 = por %p44, %p45
    %p47 = scmp.ne.s32.totalorder %s39, %s42
    %p48 = scmp.eq.s32.totalorder %s8, 0
    %p49 = por %p47, %p48
    %p50 = scmp.ne.s32.totalorder %s39, %s42
    %p51 = scmp.eq.s32.totalorder %s13, 3
    %p52 = por %p50, %p51
    %p53 = scmp.ne.s32.totalorder %s42, %s43
    %p54 = scmp.eq.s32.totalorder %s13, 0
    %p55 = por %p53, %p54
    %p56 = scmp.ne.s32.totalorder %s42, %s43
    %p57 = scmp.eq.s32.totalorder %s14, 3
    %p58 = por %p56, %p57
    %p60 = scmp.ne.s32.totalorder %s43, %s59
    %p61 = scmp.eq.s32.totalorder %s14, 0
    %p62 = por %p60, %p61
    %s63 = ssub.s32 %s8, %s15
    %p64 = scmp.eq.s32.totalorder %s63, 0
    %s66 = sadd.s32 %s65, 1
    %s67 = scalar_select %p64, %s65, %s66
    %p70 = pneg %p64
    %p71 = scmp.eq.s32.totalorder %s8, 3
    %p72 = por %p70, %p71
    %p73 = scmp.ne.s32.totalorder %s65, %s68
    %p74 = scmp.eq.s32.totalorder %s8, 0
    %p75 = por %p73, %p74
    %p76 = scmp.ne.s32.totalorder %s65, %s68
    %p77 = scmp.eq.s32.totalorder %s13, 3
    %p78 = por %p76, %p77
    %p79 = scmp.ne.s32.totalorder %s68, %s69
    %p80 = scmp.eq.s32.totalorder %s13, 0
    %p81 = por %p79, %p80
    %p82 = scmp.ne.s32.totalorder %s68, %s69
    %p83 = scmp.eq.s32.totalorder %s14, 3
    %p84 = por %p82, %p83
    %p86 = scmp.ne.s32.totalorder %s69, %s85
    %p87 = scmp.eq.s32.totalorder %s14, 0
    %p88 = por %p86, %p87
    %p89 = scmp.le.s32.totalorder 1, %s8
    %p90 = scmp.lt.s32.totalorder %s8, 5
    %p91 = pnand %p89, %p90
    %p92 = pneg %p91
    // Predicated region
    $region9: #{tpu_custom_call.1} parent=5 // pred_check
      _
    $region10: #{tpu_custom_call.1} parent=5 // pred_check_branch
      %94 = sbr.rel (%p91) target = $region12
    $region11: #{tpu_custom_call.1} parent=5 // pred_region
      %s95 = ssub.s32 %s8, 1
      // Predicated region
      $region13: #{tpu_custom_call.1} parent=11 // pred_check
        %p96 = pneg %p29
      $region14: #{tpu_custom_call.1} parent=11 // pred_check_branch
        %98 = sbr.rel (%p96) target = $region16
      $region15: #{tpu_custom_call.1} parent=11 // pred_region
        _
      $region16: #{tpu_custom_call.1} parent=11 // pred_fallthru
        _
    $region12: #{tpu_custom_call.1} parent=5 // pred_fallthru
      _
    %p99 = scmp.lt.s32.totalorder %s8, 4
    // Predicated region
    $region17: #{tpu_custom_call.1} parent=5 // pred_check
      %p100 = pneg %p99
    $region18: #{tpu_custom_call.1} parent=5 // pred_check_branch
      %102 = sbr.rel (%p100) target = $region20
    $region19: #{tpu_custom_call.1} parent=5 // pred_region
      // Predicated region
      $region21: #{tpu_custom_call.1} parent=19 // pred_check
        %p103 = pneg %p49
      $region22: #{tpu_custom_call.1} parent=19 // pred_check_branch
        %105 = sbr.rel (%p103) target = $region24
      $region23: #{tpu_custom_call.1} parent=19 // pred_region
        %s106 = smul.u32 64, %s8
        %p107 = scmp.lt.s32.totalorder %s106, 255
        %s108 = scalar_select %p107, %s106, 255
        %s109 = smul.addr %s108, 8
        %s110 = scalar_lea.vmem %s1, %s109
        %s111 = smul.u32 64, %s8
      $region24: #{tpu_custom_call.1} parent=19 // pred_fallthru
        _
    $region20: #{tpu_custom_call.1} parent=5 // pred_fallthru
      _
    %p112 = scmp.le.s32.totalorder 1, %s8
    %p113 = scmp.lt.s32.totalorder %s8, 5
    %p114 = pnand %p112, %p113
    %p115 = pneg %p114
    // Predicated region
    $region25: #{tpu_custom_call.1} parent=5 // pred_check
      _
    $region26: #{tpu_custom_call.1} parent=5 // pred_check_branch
      %117 = sbr.rel (%p114) target = $region28
    $region27: #{tpu_custom_call.1} parent=5 // pred_region
      %s118 = ssub.s32 %s8, 1
      %p119 = pneg %p29
      %p120 = pneg %p26
      %s121 = smul.u32 64, %s13
      %p122 = scmp.lt.s32.totalorder %s121, 255
      %s123 = scalar_select %p122, %s121, 255
      %s124 = smul.addr %s123, 8
      %s125 = scalar_lea.vmem %s1, %s124
      %p126 = pneg %p55
      %p127 = pneg %p52
      %p128 = pneg %p81
      %p129 = pneg %p78
      %s130 = smul.u32 64, %s13
      %p131 = scmp.lt.s32.totalorder %s130, 255
      %s132 = scalar_select %p131, %s130, 255
      %s133 = smul.addr %s132, 8
      %s134 = scalar_lea.vmem %s2, %s133
      %s135 = smul.u32 64, %s13
      %p136 = scmp.lt.s32.totalorder %s135, 255
      %s137 = scalar_select %p136, %s135, 255
      %s138 = smul.addr %s137, 8
      %s139 = scalar_lea.vmem %s1, %s138
      %s140 = smul.u32 64, %s13
      %s141 = smul.u32 64, %s13
      %p142 = scmp.lt.s32.totalorder %s141, 255
      %s143 = scalar_select %p142, %s141, 255
      %s144 = smul.addr %s143, 8
      %s145 = scalar_lea.vmem %s2, %s144
      %s146 = smul.u32 64, %s13
      %v147 = vld [vmem:[%s0] sm:$0xff]
      %v148 = vld [vmem:[%s0 + $0x8] sm:$0xff]
      %v149 = vld [vmem:[%s0 + $0x10] sm:$0xff]
      %v150 = vld [vmem:[%s0 + $0x18] sm:$0xff]
      %v151 = vld [vmem:[%s0 + $0x20] sm:$0xff]
      %v152 = vld [vmem:[%s0 + $0x28] sm:$0xff]
      %v153 = vld [vmem:[%s0 + $0x30] sm:$0xff]
      %v154 = vld [vmem:[%s0 + $0x38] sm:$0xff]
      %v155 = vld [vmem:[%s0 + $0x40] sm:$0xff]
      %v156 = vld [vmem:[%s0 + $0x48] sm:$0xff]
      %v157 = vld [vmem:[%s0 + $0x50] sm:$0xff]
      %v158 = vld [vmem:[%s0 + $0x58] sm:$0xff]
      %v159 = vld [vmem:[%s0 + $0x60] sm:$0xff]
      %v160 = vld [vmem:[%s0 + $0x68] sm:$0xff]
      %v161 = vld [vmem:[%s0 + $0x70] sm:$0xff]
      %v162 = vld [vmem:[%s0 + $0x78] sm:$0xff]
      %v163 = vld [vmem:[%s139] sm:$0xff]
      %v164 = vld [vmem:[%s139 + $0x8] sm:$0xff]
      %v165 = vld [vmem:[%s139 + $0x10] sm:$0xff]
      %v166 = vld [vmem:[%s139 + $0x18] sm:$0xff]
      %v167 = vld [vmem:[%s139 + $0x20] sm:$0xff]
      %v168 = vld [vmem:[%s139 + $0x28] sm:$0xff]
      %v169 = vld [vmem:[%s139 + $0x30] sm:$0xff]
      %v170 = vld [vmem:[%s139 + $0x38] sm:$0xff]
      %v171 = vld [vmem:[%s139 + $0x40] sm:$0xff]
      %v172 = vld [vmem:[%s139 + $0x48] sm:$0xff]
      %v173 = vld [vmem:[%s139 + $0x50] sm:$0xff]
      %v174 = vld [vmem:[%s139 + $0x58] sm:$0xff]
      %v175 = vld [vmem:[%s139 + $0x60] sm:$0xff]
      %v176 = vld [vmem:[%s139 + $0x68] sm:$0xff]
      %v177 = vld [vmem:[%s139 + $0x70] sm:$0xff]
      %v178 = vld [vmem:[%s139 + $0x78] sm:$0xff]
      %v179 = vld [vmem:[%s139 + $0x80] sm:$0xff]
      %v180 = vld [vmem:[%s139 + $0x88] sm:$0xff]
      %v181 = vld [vmem:[%s139 + $0x90] sm:$0xff]
      %v182 = vld [vmem:[%s139 + $0x98] sm:$0xff]
      %v183 = vld [vmem:[%s139 + $0xa0] sm:$0xff]
      %v184 = vld [vmem:[%s139 + $0xa8] sm:$0xff]
      %v185 = vld [vmem:[%s139 + $0xb0] sm:$0xff]
      %v186 = vld [vmem:[%s139 + $0xb8] sm:$0xff]
      %v187 = vld [vmem:[%s139 + $0xc0] sm:$0xff]
      %v188 = vld [vmem:[%s139 + $0xc8] sm:$0xff]
      %v189 = vld [vmem:[%s139 + $0xd0] sm:$0xff]
      %v190 = vld [vmem:[%s139 + $0xd8] sm:$0xff]
      %v191 = vld [vmem:[%s139 + $0xe0] sm:$0xff]
      %v192 = vld [vmem:[%s139 + $0xe8] sm:$0xff]
      %v193 = vld [vmem:[%s139 + $0xf0] sm:$0xff]
      %v194 = vld [vmem:[%s139 + $0xf8] sm:$0xff]
      %v195 = vld [vmem:[%s139 + $0x100] sm:$0xff]
      %v196 = vld [vmem:[%s139 + $0x108] sm:$0xff]
      %v197 = vld [vmem:[%s139 + $0x110] sm:$0xff]
      %v198 = vld [vmem:[%s139 + $0x118] sm:$0xff]
      %v199 = vld [vmem:[%s139 + $0x120] sm:$0xff]
      %v200 = vld [vmem:[%s139 + $0x128] sm:$0xff]
      %v201 = vld [vmem:[%s139 + $0x130] sm:$0xff]
      %v202 = vld [vmem:[%s139 + $0x138] sm:$0xff]
      %v203 = vld [vmem:[%s139 + $0x140] sm:$0xff]
      %v204 = vld [vmem:[%s139 + $0x148] sm:$0xff]
      %v205 = vld [vmem:[%s139 + $0x150] sm:$0xff]
      %v206 = vld [vmem:[%s139 + $0x158] sm:$0xff]
      %v207 = vld [vmem:[%s139 + $0x160] sm:$0xff]
      %v208 = vld [vmem:[%s139 + $0x168] sm:$0xff]
      %v209 = vld [vmem:[%s139 + $0x170] sm:$0xff]
      %v210 = vld [vmem:[%s139 + $0x178] sm:$0xff]
      %v211 = vld [vmem:[%s139 + $0x180] sm:$0xff]
      %v212 = vld [vmem:[%s139 + $0x188] sm:$0xff]
      %v213 = vld [vmem:[%s139 + $0x190] sm:$0xff]
      %v214 = vld [vmem:[%s139 + $0x198] sm:$0xff]
      %v215 = vld [vmem:[%s139 + $0x1a0] sm:$0xff]
      %v216 = vld [vmem:[%s139 + $0x1a8] sm:$0xff]
      %v217 = vld [vmem:[%s139 + $0x1b0] sm:$0xff]
      %v218 = vld [vmem:[%s139 + $0x1b8] sm:$0xff]
      %v219 = vld [vmem:[%s139 + $0x1c0] sm:$0xff]
      %v220 = vld [vmem:[%s139 + $0x1c8] sm:$0xff]
      %v221 = vld [vmem:[%s139 + $0x1d0] sm:$0xff]
      %v222 = vld [vmem:[%s139 + $0x1d8] sm:$0xff]
      %v223 = vld [vmem:[%s139 + $0x1e0] sm:$0xff]
      %v224 = vld [vmem:[%s139 + $0x1e8] sm:$0xff]
      %v225 = vld [vmem:[%s139 + $0x1f0] sm:$0xff]
      %v226 = vld [vmem:[%s139 + $0x1f8] sm:$0xff]
      %v227 = vlaneseq
      %v228 = vand.u32 %v227, 127
      %229 = vset.pattern.permute.xlu0 0
      %230 = vperm.xlu0 %229, %v163
      %v231 = vpop.permute.xlu0 %230
      %232 = vset.pattern.permute.xlu0 0
      %233 = vperm.xlu0 %232, %v164
      %v234 = vpop.permute.xlu0 %233
      %235 = vset.pattern.permute.xlu0 0
      %236 = vperm.xlu0 %235, %v165
      %v237 = vpop.permute.xlu0 %236
      %238 = vset.pattern.permute.xlu0 0
      %239 = vperm.xlu0 %238, %v166
      %v240 = vpop.permute.xlu0 %239
      %241 = vset.pattern.permute.xlu0 0
      %242 = vperm.xlu0 %241, %v167
      %v243 = vpop.permute.xlu0 %242
      %244 = vset.pattern.permute.xlu0 0
      %245 = vperm.xlu0 %244, %v168
      %v246 = vpop.permute.xlu0 %245
      %247 = vset.pattern.permute.xlu0 0
      %248 = vperm.xlu0 %247, %v169
      %v249 = vpop.permute.xlu0 %248
      %250 = vset.pattern.permute.xlu0 0
      %251 = vperm.xlu0 %250, %v170
      %v252 = vpop.permute.xlu0 %251
      %253 = vset.pattern.permute.xlu0 0
      %254 = vperm.xlu0 %253, %v171
      %v255 = vpop.permute.xlu0 %254
      %256 = vset.pattern.permute.xlu0 0
      %257 = vperm.xlu0 %256, %v172
      %v258 = vpop.permute.xlu0 %257
      %259 = vset.pattern.permute.xlu0 0
      %260 = vperm.xlu0 %259, %v173
      %v261 = vpop.permute.xlu0 %260
      %262 = vset.pattern.permute.xlu0 0
      %263 = vperm.xlu0 %262, %v174
      %v264 = vpop.permute.xlu0 %263
      %265 = vset.pattern.permute.xlu0 0
      %266 = vperm.xlu0 %265, %v175
      %v267 = vpop.permute.xlu0 %266
      %268 = vset.pattern.permute.xlu0 0
      %269 = vperm.xlu0 %268, %v176
      %v270 = vpop.permute.xlu0 %269
      %271 = vset.pattern.permute.xlu0 0
      %272 = vperm.xlu0 %271, %v177
      %v273 = vpop.permute.xlu0 %272
      %274 = vset.pattern.permute.xlu0 0
      %275 = vperm.xlu0 %274, %v178
      %v276 = vpop.permute.xlu0 %275
      %277 = vset.pattern.permute.xlu0 0
      %278 = vperm.xlu0 %277, %v179
      %v279 = vpop.permute.xlu0 %278
      %280 = vset.pattern.permute.xlu0 0
      %281 = vperm.xlu0 %280, %v180
      %v282 = vpop.permute.xlu0 %281
      %283 = vset.pattern.permute.xlu0 0
      %284 = vperm.xlu0 %283, %v181
      %v285 = vpop.permute.xlu0 %284
      %286 = vset.pattern.permute.xlu0 0
      %287 = vperm.xlu0 %286, %v182
      %v288 = vpop.permute.xlu0 %287
      %289 = vset.pattern.permute.xlu0 0
      %290 = vperm.xlu0 %289, %v183
      %v291 = vpop.permute.xlu0 %290
      %292 = vset.pattern.permute.xlu0 0
      %293 = vperm.xlu0 %292, %v184
      %v294 = vpop.permute.xlu0 %293
      %295 = vset.pattern.permute.xlu0 0
      %296 = vperm.xlu0 %295, %v185
      %v297 = vpop.permute.xlu0 %296
      %298 = vset.pattern.permute.xlu0 0
      %299 = vperm.xlu0 %298, %v186
      %v300 = vpop.permute.xlu0 %299
      %301 = vset.pattern.permute.xlu0 0
      %302 = vperm.xlu0 %301, %v187
      %v303 = vpop.permute.xlu0 %302
      %304 = vset.pattern.permute.xlu0 0
      %305 = vperm.xlu0 %304, %v188
      %v306 = vpop.permute.xlu0 %305
      %307 = vset.pattern.permute.xlu0 0
      %308 = vperm.xlu0 %307, %v189
      %v309 = vpop.permute.xlu0 %308
      %310 = vset.pattern.permute.xlu0 0
      %311 = vperm.xlu0 %310, %v190
      %v312 = vpop.permute.xlu0 %311
      %313 = vset.pattern.permute.xlu0 0
      %314 = vperm.xlu0 %313, %v191
      %v315 = vpop.permute.xlu0 %314
      %316 = vset.pattern.permute.xlu0 0
      %317 = vperm.xlu0 %316, %v192
      %v318 = vpop.permute.xlu0 %317
      %319 = vset.pattern.permute.xlu0 0
      %320 = vperm.xlu0 %319, %v193
      %v321 = vpop.permute.xlu0 %320
      %322 = vset.pattern.permute.xlu0 0
      %323 = vperm.xlu0 %322, %v194
      %v324 = vpop.permute.xlu0 %323
      %325 = vset.pattern.permute.xlu0 0
      %326 = vperm.xlu0 %325, %v195
      %v327 = vpop.permute.xlu0 %326
      %328 = vset.pattern.permute.xlu0 0
      %329 = vperm.xlu0 %328, %v196
      %v330 = vpop.permute.xlu0 %329
      %331 = vset.pattern.permute.xlu0 0
      %332 = vperm.xlu0 %331, %v197
      %v333 = vpop.permute.xlu0 %332
      %334 = vset.pattern.permute.xlu0 0
      %335 = vperm.xlu0 %334, %v198
      %v336 = vpop.permute.xlu0 %335
      %337 = vset.pattern.permute.xlu0 0
      %338 = vperm.xlu0 %337, %v199
      %v339 = vpop.permute.xlu0 %338
      %340 = vset.pattern.permute.xlu0 0
      %341 = vperm.xlu0 %340, %v200
      %v342 = vpop.permute.xlu0 %341
      %343 = vset.pattern.permute.xlu0 0
      %344 = vperm.xlu0 %343, %v201
      %v345 = vpop.permute.xlu0 %344
      %346 = vset.pattern.permute.xlu0 0
      %347 = vperm.xlu0 %346, %v202
      %v348 = vpop.permute.xlu0 %347
      %349 = vset.pattern.permute.xlu0 0
      %350 = vperm.xlu0 %349, %v203
      %v351 = vpop.permute.xlu0 %350
      %352 = vset.pattern.permute.xlu0 0
      %353 = vperm.xlu0 %352, %v204
      %v354 = vpop.permute.xlu0 %353
      %355 = vset.pattern.permute.xlu0 0
      %356 = vperm.xlu0 %355, %v205
      %v357 = vpop.permute.xlu0 %356
      %358 = vset.pattern.permute.xlu0 0
      %359 = vperm.xlu0 %358, %v206
      %v360 = vpop.permute.xlu0 %359
      %361 = vset.pattern.permute.xlu0 0
      %362 = vperm.xlu0 %361, %v207
      %v363 = vpop.permute.xlu0 %362
      %364 = vset.pattern.permute.xlu0 0
      %365 = vperm.xlu0 %364, %v208
      %v366 = vpop.permute.xlu0 %365
      %367 = vset.pattern.permute.xlu0 0
      %368 = vperm.xlu0 %367, %v209
      %v369 = vpop.permute.xlu0 %368
      %370 = vset.pattern.permute.xlu0 0
      %371 = vperm.xlu0 %370, %v210
      %v372 = vpop.permute.xlu0 %371
      %373 = vset.pattern.permute.xlu0 0
      %374 = vperm.xlu0 %373, %v211
      %v375 = vpop.permute.xlu0 %374
      %376 = vset.pattern.permute.xlu0 0
      %377 = vperm.xlu0 %376, %v212
      %v378 = vpop.permute.xlu0 %377
      %379 = vset.pattern.permute.xlu0 0
      %380 = vperm.xlu0 %379, %v213
      %v381 = vpop.permute.xlu0 %380
      %382 = vset.pattern.permute.xlu0 0
      %383 = vperm.xlu0 %382, %v214
      %v384 = vpop.permute.xlu0 %383
      %385 = vset.pattern.permute.xlu0 0
      %386 = vperm.xlu0 %385, %v215
      %v387 = vpop.permute.xlu0 %386
      %388 = vset.pattern.permute.xlu0 0
      %389 = vperm.xlu0 %388, %v216
      %v390 = vpop.permute.xlu0 %389
      %391 = vset.pattern.permute.xlu0 0
      %392 = vperm.xlu0 %391, %v217
      %v393 = vpop.permute.xlu0 %392
      %394 = vset.pattern.permute.xlu0 0
      %395 = vperm.xlu0 %394, %v218
      %v396 = vpop.permute.xlu0 %395
      %397 = vset.pattern.permute.xlu0 0
      %398 = vperm.xlu0 %397, %v219
      %v399 = vpop.permute.xlu0 %398
      %400 = vset.pattern.permute.xlu0 0
      %401 = vperm.xlu0 %400, %v220
      %v402 = vpop.permute.xlu0 %401
      %403 = vset.pattern.permute.xlu0 0
      %404 = vperm.xlu0 %403, %v221
      %v405 = vpop.permute.xlu0 %404
      %406 = vset.pattern.permute.xlu0 0
      %407 = vperm.xlu0 %406, %v222
      %v408 = vpop.permute.xlu0 %407
      %409 = vset.pattern.permute.xlu0 0
      %410 = vperm.xlu0 %409, %v223
      %v411 = vpop.permute.xlu0 %410
      %412 = vset.pattern.permute.xlu0 0
      %413 = vperm.xlu0 %412, %v224
      %v414 = vpop.permute.xlu0 %413
      %415 = vset.pattern.permute.xlu0 0
      %416 = vperm.xlu0 %415, %v225
      %v417 = vpop.permute.xlu0 %416
      %418 = vset.pattern.permute.xlu0 0
      %419 = vperm.xlu0 %418, %v226
      %v420 = vpop.permute.xlu0 %419
      %vm421 = vcmp.eq.s32.totalorder %v231, %v228
      %vm422 = vcmp.eq.s32.totalorder %v234, %v228
      %vm423 = vcmp.eq.s32.totalorder %v237, %v228
      %vm424 = vcmp.eq.s32.totalorder %v240, %v228
      %vm425 = vcmp.eq.s32.totalorder %v243, %v228
      %vm426 = vcmp.eq.s32.totalorder %v246, %v228
      %vm427 = vcmp.eq.s32.totalorder %v249, %v228
      %vm428 = vcmp.eq.s32.totalorder %v252, %v228
      %vm429 = vcmp.eq.s32.totalorder %v255, %v228
      %vm430 = vcmp.eq.s32.totalorder %v258, %v228
      %vm431 = vcmp.eq.s32.totalorder %v261, %v228
      %vm432 = vcmp.eq.s32.totalorder %v264, %v228
      %vm433 = vcmp.eq.s32.totalorder %v267, %v228
      %vm434 = vcmp.eq.s32.totalorder %v270, %v228
      %vm435 = vcmp.eq.s32.totalorder %v273, %v228
      %vm436 = vcmp.eq.s32.totalorder %v276, %v228
      %vm437 = vcmp.eq.s32.totalorder %v279, %v228
      %vm438 = vcmp.eq.s32.totalorder %v282, %v228
      %vm439 = vcmp.eq.s32.totalorder %v285, %v228
      %vm440 = vcmp.eq.s32.totalorder %v288, %v228
      %vm441 = vcmp.eq.s32.totalorder %v291, %v228
      %vm442 = vcmp.eq.s32.totalorder %v294, %v228
      %vm443 = vcmp.eq.s32.totalorder %v297, %v228
      %vm444 = vcmp.eq.s32.totalorder %v300, %v228
      %vm445 = vcmp.eq.s32.totalorder %v303, %v228
      %vm446 = vcmp.eq.s32.totalorder %v306, %v228
      %vm447 = vcmp.eq.s32.totalorder %v309, %v228
      %vm448 = vcmp.eq.s32.totalorder %v312, %v228
      %vm449 = vcmp.eq.s32.totalorder %v315, %v228
      %vm450 = vcmp.eq.s32.totalorder %v318, %v228
      %vm451 = vcmp.eq.s32.totalorder %v321, %v228
      %vm452 = vcmp.eq.s32.totalorder %v324, %v228
      %vm453 = vcmp.eq.s32.totalorder %v327, %v228
      %vm454 = vcmp.eq.s32.totalorder %v330, %v228
      %vm455 = vcmp.eq.s32.totalorder %v333, %v228
      %vm456 = vcmp.eq.s32.totalorder %v336, %v228
      %vm457 = vcmp.eq.s32.totalorder %v339, %v228
      %vm458 = vcmp.eq.s32.totalorder %v342, %v228
      %vm459 = vcmp.eq.s32.totalorder %v345, %v228
      %vm460 = vcmp.eq.s32.totalorder %v348, %v228
      %vm461 = vcmp.eq.s32.totalorder %v351, %v228
      %vm462 = vcmp.eq.s32.totalorder %v354, %v228
      %vm463 = vcmp.eq.s32.totalorder %v357, %v228
      %vm464 = vcmp.eq.s32.totalorder %v360, %v228
      %vm465 = vcmp.eq.s32.totalorder %v363, %v228
      %vm466 = vcmp.eq.s32.totalorder %v366, %v228
      %vm467 = vcmp.eq.s32.totalorder %v369, %v228
      %vm468 = vcmp.eq.s32.totalorder %v372, %v228
      %vm469 = vcmp.eq.s32.totalorder %v375, %v228
      %vm470 = vcmp.eq.s32.totalorder %v378, %v228
      %vm471 = vcmp.eq.s32.totalorder %v381, %v228
      %vm472 = vcmp.eq.s32.totalorder %v384, %v228
      %vm473 = vcmp.eq.s32.totalorder %v387, %v228
      %vm474 = vcmp.eq.s32.totalorder %v390, %v228
      %vm475 = vcmp.eq.s32.totalorder %v393, %v228
      %vm476 = vcmp.eq.s32.totalorder %v396, %v228
      %vm477 = vcmp.eq.s32.totalorder %v399, %v228
      %vm478 = vcmp.eq.s32.totalorder %v402, %v228
      %vm479 = vcmp.eq.s32.totalorder %v405, %v228
      %vm480 = vcmp.eq.s32.totalorder %v408, %v228
      %vm481 = vcmp.eq.s32.totalorder %v411, %v228
      %vm482 = vcmp.eq.s32.totalorder %v414, %v228
      %vm483 = vcmp.eq.s32.totalorder %v417, %v228
      %vm484 = vcmp.eq.s32.totalorder %v420, %v228
      %v485 = vsel %vm421, 1, 0
      %v486 = vsel %vm422, 1, 0
      %v487 = vsel %vm423, 1, 0
      %v488 = vsel %vm424, 1, 0
      %v489 = vsel %vm425, 1, 0
      %v490 = vsel %vm426, 1, 0
      %v491 = vsel %vm427, 1, 0
      %v492 = vsel %vm428, 1, 0
      %v493 = vsel %vm429, 1, 0
      %v494 = vsel %vm430, 1, 0
      %v495 = vsel %vm431, 1, 0
      %v496 = vsel %vm432, 1, 0
      %v497 = vsel %vm433, 1, 0
      %v498 = vsel %vm434, 1, 0
      %v499 = vsel %vm435, 1, 0
      %v500 = vsel %vm436, 1, 0
      %v501 = vsel %vm437, 1, 0
      %v502 = vsel %vm438, 1, 0
      %v503 = vsel %vm439, 1, 0
      %v504 = vsel %vm440, 1, 0
      %v505 = vsel %vm441, 1, 0
      %v506 = vsel %vm442, 1, 0
      %v507 = vsel %vm443, 1, 0
      %v508 = vsel %vm444, 1, 0
      %v509 = vsel %vm445, 1, 0
      %v510 = vsel %vm446, 1, 0
      %v511 = vsel %vm447, 1, 0
      %v512 = vsel %vm448, 1, 0
      %v513 = vsel %vm449, 1, 0
      %v514 = vsel %vm450, 1, 0
      %v515 = vsel %vm451, 1, 0
      %v516 = vsel %vm452, 1, 0
      %v517 = vsel %vm453, 1, 0
      %v518 = vsel %vm454, 1, 0
      %v519 = vsel %vm455, 1, 0
      %v520 = vsel %vm456, 1, 0
      %v521 = vsel %vm457, 1, 0
      %v522 = vsel %vm458, 1, 0
      %v523 = vsel %vm459, 1, 0
      %v524 = vsel %vm460, 1, 0
      %v525 = vsel %vm461, 1, 0
      %v526 = vsel %vm462, 1, 0
      %v527 = vsel %vm463, 1, 0
      %v528 = vsel %vm464, 1, 0
      %v529 = vsel %vm465, 1, 0
      %v530 = vsel %vm466, 1, 0
      %v531 = vsel %vm467, 1, 0
      %v532 = vsel %vm468, 1, 0
      %v533 = vsel %vm469, 1, 0
      %v534 = vsel %vm470, 1, 0
      %v535 = vsel %vm471, 1, 0
      %v536 = vsel %vm472, 1, 0
      %v537 = vsel %vm473, 1, 0
      %v538 = vsel %vm474, 1, 0
      %v539 = vsel %vm475, 1, 0
      %v540 = vsel %vm476, 1, 0
      %v541 = vsel %vm477, 1, 0
      %v542 = vsel %vm478, 1, 0
      %v543 = vsel %vm479, 1, 0
      %v544 = vsel %vm480, 1, 0
      %v545 = vsel %vm481, 1, 0
      %v546 = vsel %vm482, 1, 0
      %v547 = vsel %vm483, 1, 0
      %v548 = vsel %vm484, 1, 0
      %v549 = vcvt.s32.f32 %v485
      %v550 = vcvt.s32.f32 %v486
      %v551 = vcvt.s32.f32 %v487
      %v552 = vcvt.s32.f32 %v488
      %v553 = vcvt.s32.f32 %v489
      %v554 = vcvt.s32.f32 %v490
      %v555 = vcvt.s32.f32 %v491
      %v556 = vcvt.s32.f32 %v492
      %v557 = vcvt.s32.f32 %v493
      %v558 = vcvt.s32.f32 %v494
      %v559 = vcvt.s32.f32 %v495
      %v560 = vcvt.s32.f32 %v496
      %v561 = vcvt.s32.f32 %v497
      %v562 = vcvt.s32.f32 %v498
      %v563 = vcvt.s32.f32 %v499
      %v564 = vcvt.s32.f32 %v500
      %v565 = vcvt.s32.f32 %v501
      %v566 = vcvt.s32.f32 %v502
      %v567 = vcvt.s32.f32 %v503
      %v568 = vcvt.s32.f32 %v504
      %v569 = vcvt.s32.f32 %v505
      %v570 = vcvt.s32.f32 %v506
      %v571 = vcvt.s32.f32 %v507
      %v572 = vcvt.s32.f32 %v508
      %v573 = vcvt.s32.f32 %v509
      %v574 = vcvt.s32.f32 %v510
      %v575 = vcvt.s32.f32 %v511
      %v576 = vcvt.s32.f32 %v512
      %v577 = vcvt.s32.f32 %v513
      %v578 = vcvt.s32.f32 %v514
      %v579 = vcvt.s32.f32 %v515
      %v580 = vcvt.s32.f32 %v516
      %v581 = vcvt.s32.f32 %v517
      %v582 = vcvt.s32.f32 %v518
      %v583 = vcvt.s32.f32 %v519
      %v584 = vcvt.s32.f32 %v520
      %v585 = vcvt.s32.f32 %v521
      %v586 = vcvt.s32.f32 %v522
      %v587 = vcvt.s32.f32 %v523
      %v588 = vcvt.s32.f32 %v524
      %v589 = vcvt.s32.f32 %v525
      %v590 = vcvt.s32.f32 %v526
      %v591 = vcvt.s32.f32 %v527
      %v592 = vcvt.s32.f32 %v528
      %v593 = vcvt.s32.f32 %v529
      %v594 = vcvt.s32.f32 %v530
      %v595 = vcvt.s32.f32 %v531
      %v596 = vcvt.s32.f32 %v532
      %v597 = vcvt.s32.f32 %v533
      %v598 = vcvt.s32.f32 %v534
      %v599 = vcvt.s32.f32 %v535
      %v600 = vcvt.s32.f32 %v536
      %v601 = vcvt.s32.f32 %v537
      %v602 = vcvt.s32.f32 %v538
      %v603 = vcvt.s32.f32 %v539
      %v604 = vcvt.s32.f32 %v540
      %v605 = vcvt.s32.f32 %v541
      %v606 = vcvt.s32.f32 %v542
      %v607 = vcvt.s32.f32 %v543
      %v608 = vcvt.s32.f32 %v544
      %v609 = vcvt.s32.f32 %v545
      %v610 = vcvt.s32.f32 %v546
      %v611 = vcvt.s32.f32 %v547
      %v612 = vcvt.s32.f32 %v548
      %613 = vset.pattern.permute.xlu0 1
      %614 = vperm.xlu0 %613, %v163
      %v615 = vpop.permute.xlu0 %614
      %616 = vset.pattern.permute.xlu0 1
      %617 = vperm.xlu0 %616, %v164
      %v618 = vpop.permute.xlu0 %617
      %619 = vset.pattern.permute.xlu0 1
      %620 = vperm.xlu0 %619, %v165
      %v621 = vpop.permute.xlu0 %620
      %622 = vset.pattern.permute.xlu0 1
      %623 = vperm.xlu0 %622, %v166
      %v624 = vpop.permute.xlu0 %623
      %625 = vset.pattern.permute.xlu0 1
      %626 = vperm.xlu0 %625, %v167
      %v627 = vpop.permute.xlu0 %626
      %628 = vset.pattern.permute.xlu0 1
      %629 = vperm.xlu0 %628, %v168
      %v630 = vpop.permute.xlu0 %629
      %631 = vset.pattern.permute.xlu0 1
      %632 = vperm.xlu0 %631, %v169
      %v633 = vpop.permute.xlu0 %632
      %634 = vset.pattern.permute.xlu0 1
      %635 = vperm.xlu0 %634, %v170
      %v636 = vpop.permute.xlu0 %635
      %637 = vset.pattern.permute.xlu0 1
      %638 = vperm.xlu0 %637, %v171
      %v639 = vpop.permute.xlu0 %638
      %640 = vset.pattern.permute.xlu0 1
      %641 = vperm.xlu0 %640, %v172
      %v642 = vpop.permute.xlu0 %641
      %643 = vset.pattern.permute.xlu0 1
      %644 = vperm.xlu0 %643, %v173
      %v645 = vpop.permute.xlu0 %644
      %646 = vset.pattern.permute.xlu0 1
      %647 = vperm.xlu0 %646, %v174
      %v648 = vpop.permute.xlu0 %647
      %649 = vset.pattern.permute.xlu0 1
      %650 = vperm.xlu0 %649, %v175
      %v651 = vpop.permute.xlu0 %650
      %652 = vset.pattern.permute.xlu0 1
      %653 = vperm.xlu0 %652, %v176
      %v654 = vpop.permute.xlu0 %653
      %655 = vset.pattern.permute.xlu0 1
      %656 = vperm.xlu0 %655, %v177
      %v657 = vpop.permute.xlu0 %656
      %658 = vset.pattern.permute.xlu0 1
      %659 = vperm.xlu0 %658, %v178
      %v660 = vpop.permute.xlu0 %659
      %661 = vset.pattern.permute.xlu0 1
      %662 = vperm.xlu0 %661, %v179
      %v663 = vpop.permute.xlu0 %662
      %664 = vset.pattern.permute.xlu0 1
      %665 = vperm.xlu0 %664, %v180
      %v666 = vpop.permute.xlu0 %665
      %667 = vset.pattern.permute.xlu0 1
      %668 = vperm.xlu0 %667, %v181
      %v669 = vpop.permute.xlu0 %668
      %670 = vset.pattern.permute.xlu0 1
      %671 = vperm.xlu0 %670, %v182
      %v672 = vpop.permute.xlu0 %671
      %673 = vset.pattern.permute.xlu0 1
      %674 = vperm.xlu0 %673, %v183
      %v675 = vpop.permute.xlu0 %674
      %676 = vset.pattern.permute.xlu0 1
      %677 = vperm.xlu0 %676, %v184
      %v678 = vpop.permute.xlu0 %677
      %679 = vset.pattern.permute.xlu0 1
      %680 = vperm.xlu0 %679, %v185
      %v681 = vpop.permute.xlu0 %680
      %682 = vset.pattern.permute.xlu0 1
      %683 = vperm.xlu0 %682, %v186
      %v684 = vpop.permute.xlu0 %683
      %685 = vset.pattern.permute.xlu0 1
      %686 = vperm.xlu0 %685, %v187
      %v687 = vpop.permute.xlu0 %686
      %688 = vset.pattern.permute.xlu0 1
      %689 = vperm.xlu0 %688, %v188
      %v690 = vpop.permute.xlu0 %689
      %691 = vset.pattern.permute.xlu0 1
      %692 = vperm.xlu0 %691, %v189
      %v693 = vpop.permute.xlu0 %692
      %694 = vset.pattern.permute.xlu0 1
      %695 = vperm.xlu0 %694, %v190
      %v696 = vpop.permute.xlu0 %695
      %697 = vset.pattern.permute.xlu0 1
      %698 = vperm.xlu0 %697, %v191
      %v699 = vpop.permute.xlu0 %698
      %700 = vset.pattern.permute.xlu0 1
      %701 = vperm.xlu0 %700, %v192
      %v702 = vpop.permute.xlu0 %701
      %703 = vset.pattern.permute.xlu0 1
      %704 = vperm.xlu0 %703, %v193
      %v705 = vpop.permute.xlu0 %704
      %706 = vset.pattern.permute.xlu0 1
      %707 = vperm.xlu0 %706, %v194
      %v708 = vpop.permute.xlu0 %707
      %709 = vset.pattern.permute.xlu0 1
      %710 = vperm.xlu0 %709, %v195
      %v711 = vpop.permute.xlu0 %710
      %712 = vset.pattern.permute.xlu0 1
      %713 = vperm.xlu0 %712, %v196
      %v714 = vpop.permute.xlu0 %713
      %715 = vset.pattern.permute.xlu0 1
      %716 = vperm.xlu0 %715, %v197
      %v717 = vpop.permute.xlu0 %716
      %718 = vset.pattern.permute.xlu0 1
      %719 = vperm.xlu0 %718, %v198
      %v720 = vpop.permute.xlu0 %719
      %721 = vset.pattern.permute.xlu0 1
      %722 = vperm.xlu0 %721, %v199
      %v723 = vpop.permute.xlu0 %722
      %724 = vset.pattern.permute.xlu0 1
      %725 = vperm.xlu0 %724, %v200
      %v726 = vpop.permute.xlu0 %725
      %727 = vset.pattern.permute.xlu0 1
      %728 = vperm.xlu0 %727, %v201
      %v729 = vpop.permute.xlu0 %728
      %730 = vset.pattern.permute.xlu0 1
      %731 = vperm.xlu0 %730, %v202
      %v732 = vpop.permute.xlu0 %731
      %733 = vset.pattern.permute.xlu0 1
      %734 = vperm.xlu0 %733, %v203
      %v735 = vpop.permute.xlu0 %734
      %736 = vset.pattern.permute.xlu0 1
      %737 = vperm.xlu0 %736, %v204
      %v738 = vpop.permute.xlu0 %737
      %739 = vset.pattern.permute.xlu0 1
      %740 = vperm.xlu0 %739, %v205
      %v741 = vpop.permute.xlu0 %740
      %742 = vset.pattern.permute.xlu0 1
      %743 = vperm.xlu0 %742, %v206
      %v744 = vpop.permute.xlu0 %743
      %745 = vset.pattern.permute.xlu0 1
      %746 = vperm.xlu0 %745, %v207
      %v747 = vpop.permute.xlu0 %746
      %748 = vset.pattern.permute.xlu0 1
      %749 = vperm.xlu0 %748, %v208
      %v750 = vpop.permute.xlu0 %749
      %751 = vset.pattern.permute.xlu0 1
      %752 = vperm.xlu0 %751, %v209
      %v753 = vpop.permute.xlu0 %752
      %754 = vset.pattern.permute.xlu0 1
      %755 = vperm.xlu0 %754, %v210
      %v756 = vpop.permute.xlu0 %755
      %757 = vset.pattern.permute.xlu0 1
      %758 = vperm.xlu0 %757, %v211
      %v759 = vpop.permute.xlu0 %758
      %760 = vset.pattern.permute.xlu0 1
      %761 = vperm.xlu0 %760, %v212
      %v762 = vpop.permute.xlu0 %761
      %763 = vset.pattern.permute.xlu0 1
      %764 = vperm.xlu0 %763, %v213
      %v765 = vpop.permute.xlu0 %764
      %766 = vset.pattern.permute.xlu0 1
      %767 = vperm.xlu0 %766, %v214
      %v768 = vpop.permute.xlu0 %767
      %769 = vset.pattern.permute.xlu0 1
      %770 = vperm.xlu0 %769, %v215
      %v771 = vpop.permute.xlu0 %770
      %772 = vset.pattern.permute.xlu0 1
      %773 = vperm.xlu0 %772, %v216
      %v774 = vpop.permute.xlu0 %773
      %775 = vset.pattern.permute.xlu0 1
      %776 = vperm.xlu0 %775, %v217
      %v777 = vpop.permute.xlu0 %776
      %778 = vset.pattern.permute.xlu0 1
      %779 = vperm.xlu0 %778, %v218
      %v780 = vpop.permute.xlu0 %779
      %781 = vset.pattern.permute.xlu0 1
      %782 = vperm.xlu0 %781, %v219
      %v783 = vpop.permute.xlu0 %782
      %784 = vset.pattern.permute.xlu0 1
      %785 = vperm.xlu0 %784, %v220
      %v786 = vpop.permute.xlu0 %785
      %787 = vset.pattern.permute.xlu0 1
      %788 = vperm.xlu0 %787, %v221
      %v789 = vpop.permute.xlu0 %788
      %790 = vset.pattern.permute.xlu0 1
      %791 = vperm.xlu0 %790, %v222
      %v792 = vpop.permute.xlu0 %791
      %793 = vset.pattern.permute.xlu0 1
      %794 = vperm.xlu0 %793, %v223
      %v795 = vpop.permute.xlu0 %794
      %796 = vset.pattern.permute.xlu0 1
      %797 = vperm.xlu0 %796, %v224
      %v798 = vpop.permute.xlu0 %797
      %799 = vset.pattern.permute.xlu0 1
      %800 = vperm.xlu0 %799, %v225
      %v801 = vpop.permute.xlu0 %800
      %802 = vset.pattern.permute.xlu0 1
      %803 = vperm.xlu0 %802, %v226
      %v804 = vpop.permute.xlu0 %803
      %vm805 = vcmp.eq.s32.totalorder %v615, %v228
      %vm806 = vcmp.eq.s32.totalorder %v618, %v228
      %vm807 = vcmp.eq.s32.totalorder %v621, %v228
      %vm808 = vcmp.eq.s32.totalorder %v624, %v228
      %vm809 = vcmp.eq.s32.totalorder %v627, %v228
      %vm810 = vcmp.eq.s32.totalorder %v630, %v228
      %vm811 = vcmp.eq.s32.totalorder %v633, %v228
      %vm812 = vcmp.eq.s32.totalorder %v636, %v228
      %vm813 = vcmp.eq.s32.totalorder %v639, %v228
      %vm814 = vcmp.eq.s32.totalorder %v642, %v228
      %vm815 = vcmp.eq.s32.totalorder %v645, %v228
      %vm816 = vcmp.eq.s32.totalorder %v648, %v228
      %vm817 = vcmp.eq.s32.totalorder %v651, %v228
      %vm818 = vcmp.eq.s32.totalorder %v654, %v228
      %vm819 = vcmp.eq.s32.totalorder %v657, %v228
      %vm820 = vcmp.eq.s32.totalorder %v660, %v228
      %vm821 = vcmp.eq.s32.totalorder %v663, %v228
      %vm822 = vcmp.eq.s32.totalorder %v666, %v228
      %vm823 = vcmp.eq.s32.totalorder %v669, %v228
      %vm824 = vcmp.eq.s32.totalorder %v672, %v228
      %vm825 = vcmp.eq.s32.totalorder %v675, %v228
      %vm826 = vcmp.eq.s32.totalorder %v678, %v228
      %vm827 = vcmp.eq.s32.totalorder %v681, %v228
      %vm828 = vcmp.eq.s32.totalorder %v684, %v228
      %vm829 = vcmp.eq.s32.totalorder %v687, %v228
      %vm830 = vcmp.eq.s32.totalorder %v690, %v228
      %vm831 = vcmp.eq.s32.totalorder %v693, %v228
      %vm832 = vcmp.eq.s32.totalorder %v696, %v228
      %vm833 = vcmp.eq.s32.totalorder %v699, %v228
      %vm834 = vcmp.eq.s32.totalorder %v702, %v228
      %vm835 = vcmp.eq.s32.totalorder %v705, %v228
      %vm836 = vcmp.eq.s32.totalorder %v708, %v228
      %vm837 = vcmp.eq.s32.totalorder %v711, %v228
      %vm838 = vcmp.eq.s32.totalorder %v714, %v228
      %vm839 = vcmp.eq.s32.totalorder %v717, %v228
      %vm840 = vcmp.eq.s32.totalorder %v720, %v228
      %vm841 = vcmp.eq.s32.totalorder %v723, %v228
      %vm842 = vcmp.eq.s32.totalorder %v726, %v228
      %vm843 = vcmp.eq.s32.totalorder %v729, %v228
      %vm844 = vcmp.eq.s32.totalorder %v732, %v228
      %vm845 = vcmp.eq.s32.totalorder %v735, %v228
      %vm846 = vcmp.eq.s32.totalorder %v738, %v228
      %vm847 = vcmp.eq.s32.totalorder %v741, %v228
      %vm848 = vcmp.eq.s32.totalorder %v744, %v228
      %vm849 = vcmp.eq.s32.totalorder %v747, %v228
      %vm850 = vcmp.eq.s32.totalorder %v750, %v228
      %vm851 = vcmp.eq.s32.totalorder %v753, %v228
      %vm852 = vcmp.eq.s32.totalorder %v756, %v228
      %vm853 = vcmp.eq.s32.totalorder %v759, %v228
      %vm854 = vcmp.eq.s32.totalorder %v762, %v228
      %vm855 = vcmp.eq.s32.totalorder %v765, %v228
      %vm856 = vcmp.eq.s32.totalorder %v768, %v228
      %vm857 = vcmp.eq.s32.totalorder %v771, %v228
      %vm858 = vcmp.eq.s32.totalorder %v774, %v228
      %vm859 = vcmp.eq.s32.totalorder %v777, %v228
      %vm860 = vcmp.eq.s32.totalorder %v780, %v228
      %vm861 = vcmp.eq.s32.totalorder %v783, %v228
      %vm862 = vcmp.eq.s32.totalorder %v786, %v228
      %vm863 = vcmp.eq.s32.totalorder %v789, %v228
      %vm864 = vcmp.eq.s32.totalorder %v792, %v228
      %vm865 = vcmp.eq.s32.totalorder %v795, %v228
      %vm866 = vcmp.eq.s32.totalorder %v798, %v228
      %vm867 = vcmp.eq.s32.totalorder %v801, %v228
      %vm868 = vcmp.eq.s32.totalorder %v804, %v228
      %v869 = vsel %vm805, 1, 0
      %v870 = vsel %vm806, 1, 0
      %v871 = vsel %vm807, 1, 0
      %v872 = vsel %vm808, 1, 0
      %v873 = vsel %vm809, 1, 0
      %v874 = vsel %vm810, 1, 0
      %v875 = vsel %vm811, 1, 0
      %v876 = vsel %vm812, 1, 0
      %v877 = vsel %vm813, 1, 0
      %v878 = vsel %vm814, 1, 0
      %v879 = vsel %vm815, 1, 0
      %v880 = vsel %vm816, 1, 0
      %v881 = vsel %vm817, 1, 0
      %v882 = vsel %vm818, 1, 0
      %v883 = vsel %vm819, 1, 0
      %v884 = vsel %vm820, 1, 0
      %v885 = vsel %vm821, 1, 0
      %v886 = vsel %vm822, 1, 0
      %v887 = vsel %vm823, 1, 0
      %v888 = vsel %vm824, 1, 0
      %v889 = vsel %vm825, 1, 0
      %v890 = vsel %vm826, 1, 0
      %v891 = vsel %vm827, 1, 0
      %v892 = vsel %vm828, 1, 0
      %v893 = vsel %vm829, 1, 0
      %v894 = vsel %vm830, 1, 0
      %v895 = vsel %vm831, 1, 0
      %v896 = vsel %vm832, 1, 0
      %v897 = vsel %vm833, 1, 0
      %v898 = vsel %vm834, 1, 0
      %v899 = vsel %vm835, 1, 0
      %v900 = vsel %vm836, 1, 0
      %v901 = vsel %vm837, 1, 0
      %v902 = vsel %vm838, 1, 0
      %v903 = vsel %vm839, 1, 0
      %v904 = vsel %vm840, 1, 0
      %v905 = vsel %vm841, 1, 0
      %v906 = vsel %vm842, 1, 0
      %v907 = vsel %vm843, 1, 0
      %v908 = vsel %vm844, 1, 0
      %v909 = vsel %vm845, 1, 0
      %v910 = vsel %vm846, 1, 0
      %v911 = vsel %vm847, 1, 0
      %v912 = vsel %vm848, 1, 0
      %v913 = vsel %vm849, 1, 0
      %v914 = vsel %vm850, 1, 0
      %v915 = vsel %vm851, 1, 0
      %v916 = vsel %vm852, 1, 0
      %v917 = vsel %vm853, 1, 0
      %v918 = vsel %vm854, 1, 0
      %v919 = vsel %vm855, 1, 0
      %v920 = vsel %vm856, 1, 0
      %v921 = vsel %vm857, 1, 0
      %v922 = vsel %vm858, 1, 0
      %v923 = vsel %vm859, 1, 0
      %v924 = vsel %vm860, 1, 0
      %v925 = vsel %vm861, 1, 0
      %v926 = vsel %vm862, 1, 0
      %v927 = vsel %vm863, 1, 0
      %v928 = vsel %vm864, 1, 0
      %v929 = vsel %vm865, 1, 0
      %v930 = vsel %vm866, 1, 0
      %v931 = vsel %vm867, 1, 0
      %v932 = vsel %vm868, 1, 0
      %v933 = vcvt.s32.f32 %v869
      %v934 = vcvt.s32.f32 %v870
      %v935 = vcvt.s32.f32 %v871
      %v936 = vcvt.s32.f32 %v872
      %v937 = vcvt.s32.f32 %v873
      %v938 = vcvt.s32.f32 %v874
      %v939 = vcvt.s32.f32 %v875
      %v940 = vcvt.s32.f32 %v876
      %v941 = vcvt.s32.f32 %v877
      %v942 = vcvt.s32.f32 %v878
      %v943 = vcvt.s32.f32 %v879
      %v944 = vcvt.s32.f32 %v880
      %v945 = vcvt.s32.f32 %v881
      %v946 = vcvt.s32.f32 %v882
      %v947 = vcvt.s32.f32 %v883
      %v948 = vcvt.s32.f32 %v884
      %v949 = vcvt.s32.f32 %v885
      %v950 = vcvt.s32.f32 %v886
      %v951 = vcvt.s32.f32 %v887
      %v952 = vcvt.s32.f32 %v888
      %v953 = vcvt.s32.f32 %v889
      %v954 = vcvt.s32.f32 %v890
      %v955 = vcvt.s32.f32 %v891
      %v956 = vcvt.s32.f32 %v892
      %v957 = vcvt.s32.f32 %v893
      %v958 = vcvt.s32.f32 %v894
      %v959 = vcvt.s32.f32 %v895
      %v960 = vcvt.s32.f32 %v896
      %v961 = vcvt.s32.f32 %v897
      %v962 = vcvt.s32.f32 %v898
      %v963 = vcvt.s32.f32 %v899
      %v964 = vcvt.s32.f32 %v900
      %v965 = vcvt.s32.f32 %v901
      %v966 = vcvt.s32.f32 %v902
      %v967 = vcvt.s32.f32 %v903
      %v968 = vcvt.s32.f32 %v904
      %v969 = vcvt.s32.f32 %v905
      %v970 = vcvt.s32.f32 %v906
      %v971 = vcvt.s32.f32 %v907
      %v972 = vcvt.s32.f32 %v908
      %v973 = vcvt.s32.f32 %v909
      %v974 = vcvt.s32.f32 %v910
      %v975 = vcvt.s32.f32 %v911
      %v976 = vcvt.s32.f32 %v912
      %v977 = vcvt.s32.f32 %v913
      %v978 = vcvt.s32.f32 %v914
      %v979 = vcvt.s32.f32 %v915
      %v980 = vcvt.s32.f32 %v916
      %v981 = vcvt.s32.f32 %v917
      %v982 = vcvt.s32.f32 %v918
      %v983 = vcvt.s32.f32 %v919
      %v984 = vcvt.s32.f32 %v920
      %v985 = vcvt.s32.f32 %v921
      %v986 = vcvt.s32.f32 %v922
      %v987 = vcvt.s32.f32 %v923
      %v988 = vcvt.s32.f32 %v924
      %v989 = vcvt.s32.f32 %v925
      %v990 = vcvt.s32.f32 %v926
      %v991 = vcvt.s32.f32 %v927
      %v992 = vcvt.s32.f32 %v928
      %v993 = vcvt.s32.f32 %v929
      %v994 = vcvt.s32.f32 %v930
      %v995 = vcvt.s32.f32 %v931
      %v996 = vcvt.s32.f32 %v932
      %997 = vset.pattern.permute.xlu0 2
      %998 = vperm.xlu0 %997, %v163
      %v999 = vpop.permute.xlu0 %998
      %1000 = vset.pattern.permute.xlu0 2
      %1001 = vperm.xlu0 %1000, %v164
      %v1002 = vpop.permute.xlu0 %1001
      %1003 = vset.pattern.permute.xlu0 2
      %1004 = vperm.xlu0 %1003, %v165
      %v1005 = vpop.permute.xlu0 %1004
      %1006 = vset.pattern.permute.xlu0 2
      %1007 = vperm.xlu0 %1006, %v166
      %v1008 = vpop.permute.xlu0 %1007
      %1009 = vset.pattern.permute.xlu0 2
      %1010 = vperm.xlu0 %1009, %v167
      %v1011 = vpop.permute.xlu0 %1010
      %1012 = vset.pattern.permute.xlu0 2
      %1013 = vperm.xlu0 %1012, %v168
      %v1014 = vpop.permute.xlu0 %1013
      %1015 = vset.pattern.permute.xlu0 2
      %1016 = vperm.xlu0 %1015, %v169
      %v1017 = vpop.permute.xlu0 %1016
      %1018 = vset.pattern.permute.xlu0 2
      %1019 = vperm.xlu0 %1018, %v170
      %v1020 = vpop.permute.xlu0 %1019
      %1021 = vset.pattern.permute.xlu0 2
      %1022 = vperm.xlu0 %1021, %v171
      %v1023 = vpop.permute.xlu0 %1022
      %1024 = vset.pattern.permute.xlu0 2
      %1025 = vperm.xlu0 %1024, %v172
      %v1026 = vpop.permute.xlu0 %1025
      %1027 = vset.pattern.permute.xlu0 2
      %1028 = vperm.xlu0 %1027, %v173
      %v1029 = vpop.permute.xlu0 %1028
      %1030 = vset.pattern.permute.xlu0 2
      %1031 = vperm.xlu0 %1030, %v174
      %v1032 = vpop.permute.xlu0 %1031
      %1033 = vset.pattern.permute.xlu0 2
      %1034 = vperm.xlu0 %1033, %v175
      %v1035 = vpop.permute.xlu0 %1034
      %1036 = vset.pattern.permute.xlu0 2
      %1037 = vperm.xlu0 %1036, %v176
      %v1038 = vpop.permute.xlu0 %1037
      %1039 = vset.pattern.permute.xlu0 2
      %1040 = vperm.xlu0 %1039, %v177
      %v1041 = vpop.permute.xlu0 %1040
      %1042 = vset.pattern.permute.xlu0 2
      %1043 = vperm.xlu0 %1042, %v178
      %v1044 = vpop.permute.xlu0 %1043
      %1045 = vset.pattern.permute.xlu0 2
      %1046 = vperm.xlu0 %1045, %v179
      %v1047 = vpop.permute.xlu0 %1046
      %1048 = vset.pattern.permute.xlu0 2
      %1049 = vperm.xlu0 %1048, %v180
      %v1050 = vpop.permute.xlu0 %1049
      %1051 = vset.pattern.permute.xlu0 2
      %1052 = vperm.xlu0 %1051, %v181
      %v1053 = vpop.permute.xlu0 %1052
      %1054 = vset.pattern.permute.xlu0 2
      %1055 = vperm.xlu0 %1054, %v182
      %v1056 = vpop.permute.xlu0 %1055
      %1057 = vset.pattern.permute.xlu0 2
      %1058 = vperm.xlu0 %1057, %v183
      %v1059 = vpop.permute.xlu0 %1058
      %1060 = vset.pattern.permute.xlu0 2
      %1061 = vperm.xlu0 %1060, %v184
      %v1062 = vpop.permute.xlu0 %1061
      %1063 = vset.pattern.permute.xlu0 2
      %1064 = vperm.xlu0 %1063, %v185
      %v1065 = vpop.permute.xlu0 %1064
      %1066 = vset.pattern.permute.xlu0 2
      %1067 = vperm.xlu0 %1066, %v186
      %v1068 = vpop.permute.xlu0 %1067
      %1069 = vset.pattern.permute.xlu0 2
      %1070 = vperm.xlu0 %1069, %v187
      %v1071 = vpop.permute.xlu0 %1070
      %1072 = vset.pattern.permute.xlu0 2
      %1073 = vperm.xlu0 %1072, %v188
      %v1074 = vpop.permute.xlu0 %1073
      %1075 = vset.pattern.permute.xlu0 2
      %1076 = vperm.xlu0 %1075, %v189
      %v1077 = vpop.permute.xlu0 %1076
      %1078 = vset.pattern.permute.xlu0 2
      %1079 = vperm.xlu0 %1078, %v190
      %v1080 = vpop.permute.xlu0 %1079
      %1081 = vset.pattern.permute.xlu0 2
      %1082 = vperm.xlu0 %1081, %v191
      %v1083 = vpop.permute.xlu0 %1082
      %1084 = vset.pattern.permute.xlu0 2
      %1085 = vperm.xlu0 %1084, %v192
      %v1086 = vpop.permute.xlu0 %1085
      %1087 = vset.pattern.permute.xlu0 2
      %1088 = vperm.xlu0 %1087, %v193
      %v1089 = vpop.permute.xlu0 %1088
      %1090 = vset.pattern.permute.xlu0 2
      %1091 = vperm.xlu0 %1090, %v194
      %v1092 = vpop.permute.xlu0 %1091
      %1093 = vset.pattern.permute.xlu0 2
      %1094 = vperm.xlu0 %1093, %v195
      %v1095 = vpop.permute.xlu0 %1094
      %1096 = vset.pattern.permute.xlu0 2
      %1097 = vperm.xlu0 %1096, %v196
      %v1098 = vpop.permute.xlu0 %1097
      %1099 = vset.pattern.permute.xlu0 2
      %1100 = vperm.xlu0 %1099, %v197
      %v1101 = vpop.permute.xlu0 %1100
      %1102 = vset.pattern.permute.xlu0 2
      %1103 = vperm.xlu0 %1102, %v198
      %v1104 = vpop.permute.xlu0 %1103
      %1105 = vset.pattern.permute.xlu0 2
      %1106 = vperm.xlu0 %1105, %v199
      %v1107 = vpop.permute.xlu0 %1106
      %1108 = vset.pattern.permute.xlu0 2
      %1109 = vperm.xlu0 %1108, %v200
      %v1110 = vpop.permute.xlu0 %1109
      %1111 = vset.pattern.permute.xlu0 2
      %1112 = vperm.xlu0 %1111, %v201
      %v1113 = vpop.permute.xlu0 %1112
      %1114 = vset.pattern.permute.xlu0 2
      %1115 = vperm.xlu0 %1114, %v202
      %v1116 = vpop.permute.xlu0 %1115
      %1117 = vset.pattern.permute.xlu0 2
      %1118 = vperm.xlu0 %1117, %v203
      %v1119 = vpop.permute.xlu0 %1118
      %1120 = vset.pattern.permute.xlu0 2
      %1121 = vperm.xlu0 %1120, %v204
      %v1122 = vpop.permute.xlu0 %1121
      %1123 = vset.pattern.permute.xlu0 2
      %1124 = vperm.xlu0 %1123, %v205
      %v1125 = vpop.permute.xlu0 %1124
      %1126 = vset.pattern.permute.xlu0 2
      %1127 = vperm.xlu0 %1126, %v206
      %v1128 = vpop.permute.xlu0 %1127
      %1129 = vset.pattern.permute.xlu0 2
      %1130 = vperm.xlu0 %1129, %v207
      %v1131 = vpop.permute.xlu0 %1130
      %1132 = vset.pattern.permute.xlu0 2
      %1133 = vperm.xlu0 %1132, %v208
      %v1134 = vpop.permute.xlu0 %1133
      %1135 = vset.pattern.permute.xlu0 2
      %1136 = vperm.xlu0 %1135, %v209
      %v1137 = vpop.permute.xlu0 %1136
      %1138 = vset.pattern.permute.xlu0 2
      %1139 = vperm.xlu0 %1138, %v210
      %v1140 = vpop.permute.xlu0 %1139
      %1141 = vset.pattern.permute.xlu0 2
      %1142 = vperm.xlu0 %1141, %v211
      %v1143 = vpop.permute.xlu0 %1142
      %1144 = vset.pattern.permute.xlu0 2
      %1145 = vperm.xlu0 %1144, %v212
      %v1146 = vpop.permute.xlu0 %1145
      %1147 = vset.pattern.permute.xlu0 2
      %1148 = vperm.xlu0 %1147, %v213
      %v1149 = vpop.permute.xlu0 %1148
      %1150 = vset.pattern.permute.xlu0 2
      %1151 = vperm.xlu0 %1150, %v214
      %v1152 = vpop.permute.xlu0 %1151
      %1153 = vset.pattern.permute.xlu0 2
      %1154 = vperm.xlu0 %1153, %v215
      %v1155 = vpop.permute.xlu0 %1154
      %1156 = vset.pattern.permute.xlu0 2
      %1157 = vperm.xlu0 %1156, %v216
      %v1158 = vpop.permute.xlu0 %1157
      %1159 = vset.pattern.permute.xlu0 2
      %1160 = vperm.xlu0 %1159, %v217
      %v1161 = vpop.permute.xlu0 %1160
      %1162 = vset.pattern.permute.xlu0 2
      %1163 = vperm.xlu0 %1162, %v218
      %v1164 = vpop.permute.xlu0 %1163
      %1165 = vset.pattern.permute.xlu0 2
      %1166 = vperm.xlu0 %1165, %v219
      %v1167 = vpop.permute.xlu0 %1166
      %1168 = vset.pattern.permute.xlu0 2
      %1169 = vperm.xlu0 %1168, %v220
      %v1170 = vpop.permute.xlu0 %1169
      %1171 = vset.pattern.permute.xlu0 2
      %1172 = vperm.xlu0 %1171, %v221
      %v1173 = vpop.permute.xlu0 %1172
      %1174 = vset.pattern.permute.xlu0 2
      %1175 = vperm.xlu0 %1174, %v222
      %v1176 = vpop.permute.xlu0 %1175
      %1177 = vset.pattern.permute.xlu0 2
      %1178 = vperm.xlu0 %1177, %v223
      %v1179 = vpop.permute.xlu0 %1178
      %1180 = vset.pattern.permute.xlu0 2
      %1181 = vperm.xlu0 %1180, %v224
      %v1182 = vpop.permute.xlu0 %1181
      %1183 = vset.pattern.permute.xlu0 2
      %1184 = vperm.xlu0 %1183, %v225
      %v1185 = vpop.permute.xlu0 %1184
      %1186 = vset.pattern.permute.xlu0 2
      %1187 = vperm.xlu0 %1186, %v226
      %v1188 = vpop.permute.xlu0 %1187
      %vm1189 = vcmp.eq.s32.totalorder %v999, %v228
      %vm1190 = vcmp.eq.s32.totalorder %v1002, %v228
      %vm1191 = vcmp.eq.s32.totalorder %v1005, %v228
      %vm1192 = vcmp.eq.s32.totalorder %v1008, %v228
      %vm1193 = vcmp.eq.s32.totalorder %v1011, %v228
      %vm1194 = vcmp.eq.s32.totalorder %v1014, %v228
      %vm1195 = vcmp.eq.s32.totalorder %v1017, %v228
      %vm1196 = vcmp.eq.s32.totalorder %v1020, %v228
      %vm1197 = vcmp.eq.s32.totalorder %v1023, %v228
      %vm1198 = vcmp.eq.s32.totalorder %v1026, %v228
      %vm1199 = vcmp.eq.s32.totalorder %v1029, %v228
      %vm1200 = vcmp.eq.s32.totalorder %v1032, %v228
      %vm1201 = vcmp.eq.s32.totalorder %v1035, %v228
      %vm1202 = vcmp.eq.s32.totalorder %v1038, %v228
      %vm1203 = vcmp.eq.s32.totalorder %v1041, %v228
      %vm1204 = vcmp.eq.s32.totalorder %v1044, %v228
      %vm1205 = vcmp.eq.s32.totalorder %v1047, %v228
      %vm1206 = vcmp.eq.s32.totalorder %v1050, %v228
      %vm1207 = vcmp.eq.s32.totalorder %v1053, %v228
      %vm1208 = vcmp.eq.s32.totalorder %v1056, %v228
      %vm1209 = vcmp.eq.s32.totalorder %v1059, %v228
      %vm1210 = vcmp.eq.s32.totalorder %v1062, %v228
      %vm1211 = vcmp.eq.s32.totalorder %v1065, %v228
      %vm1212 = vcmp.eq.s32.totalorder %v1068, %v228
      %vm1213 = vcmp.eq.s32.totalorder %v1071, %v228
      %vm1214 = vcmp.eq.s32.totalorder %v1074, %v228
      %vm1215 = vcmp.eq.s32.totalorder %v1077, %v228
      %vm1216 = vcmp.eq.s32.totalorder %v1080, %v228
      %vm1217 = vcmp.eq.s32.totalorder %v1083, %v228
      %vm1218 = vcmp.eq.s32.totalorder %v1086, %v228
      %vm1219 = vcmp.eq.s32.totalorder %v1089, %v228
      %vm1220 = vcmp.eq.s32.totalorder %v1092, %v228
      %vm1221 = vcmp.eq.s32.totalorder %v1095, %v228
      %vm1222 = vcmp.eq.s32.totalorder %v1098, %v228
      %vm1223 = vcmp.eq.s32.totalorder %v1101, %v228
      %vm1224 = vcmp.eq.s32.totalorder %v1104, %v228
      %vm1225 = vcmp.eq.s32.totalorder %v1107, %v228
      %vm1226 = vcmp.eq.s32.totalorder %v1110, %v228
      %vm1227 = vcmp.eq.s32.totalorder %v1113, %v228
      %vm1228 = vcmp.eq.s32.totalorder %v1116, %v228
      %vm1229 = vcmp.eq.s32.totalorder %v1119, %v228
      %vm1230 = vcmp.eq.s32.totalorder %v1122, %v228
      %vm1231 = vcmp.eq.s32.totalorder %v1125, %v228
      %vm1232 = vcmp.eq.s32.totalorder %v1128, %v228
      %vm1233 = vcmp.eq.s32.totalorder %v1131, %v228
      %vm1234 = vcmp.eq.s32.totalorder %v1134, %v228
      %vm1235 = vcmp.eq.s32.totalorder %v1137, %v228
      %vm1236 = vcmp.eq.s32.totalorder %v1140, %v228
      %vm1237 = vcmp.eq.s32.totalorder %v1143, %v228
      %vm1238 = vcmp.eq.s32.totalorder %v1146, %v228
      %vm1239 = vcmp.eq.s32.totalorder %v1149, %v228
      %vm1240 = vcmp.eq.s32.totalorder %v1152, %v228
      %vm1241 = vcmp.eq.s32.totalorder %v1155, %v228
      %vm1242 = vcmp.eq.s32.totalorder %v1158, %v228
      %vm1243 = vcmp.eq.s32.totalorder %v1161, %v228
      %vm1244 = vcmp.eq.s32.totalorder %v1164, %v228
      %vm1245 = vcmp.eq.s32.totalorder %v1167, %v228
      %vm1246 = vcmp.eq.s32.totalorder %v1170, %v228
      %vm1247 = vcmp.eq.s32.totalorder %v1173, %v228
      %vm1248 = vcmp.eq.s32.totalorder %v1176, %v228
      %vm1249 = vcmp.eq.s32.totalorder %v1179, %v228
      %vm1250 = vcmp.eq.s32.totalorder %v1182, %v228
      %vm1251 = vcmp.eq.s32.totalorder %v1185, %v228
      %vm1252 = vcmp.eq.s32.totalorder %v1188, %v228
      %v1253 = vsel %vm1189, 1, 0
      %v1254 = vsel %vm1190, 1, 0
      %v1255 = vsel %vm1191, 1, 0
      %v1256 = vsel %vm1192, 1, 0
      %v1257 = vsel %vm1193, 1, 0
      %v1258 = vsel %vm1194, 1, 0
      %v1259 = vsel %vm1195, 1, 0
      %v1260 = vsel %vm1196, 1, 0
      %v1261 = vsel %vm1197, 1, 0
      %v1262 = vsel %vm1198, 1, 0
      %v1263 = vsel %vm1199, 1, 0
      %v1264 = vsel %vm1200, 1, 0
      %v1265 = vsel %vm1201, 1, 0
      %v1266 = vsel %vm1202, 1, 0
      %v1267 = vsel %vm1203, 1, 0
      %v1268 = vsel %vm1204, 1, 0
      %v1269 = vsel %vm1205, 1, 0
      %v1270 = vsel %vm1206, 1, 0
      %v1271 = vsel %vm1207, 1, 0
      %v1272 = vsel %vm1208, 1, 0
      %v1273 = vsel %vm1209, 1, 0
      %v1274 = vsel %vm1210, 1, 0
      %v1275 = vsel %vm1211, 1, 0
      %v1276 = vsel %vm1212, 1, 0
      %v1277 = vsel %vm1213, 1, 0
      %v1278 = vsel %vm1214, 1, 0
      %v1279 = vsel %vm1215, 1, 0
      %v1280 = vsel %vm1216, 1, 0
      %v1281 = vsel %vm1217, 1, 0
      %v1282 = vsel %vm1218, 1, 0
      %v1283 = vsel %vm1219, 1, 0
      %v1284 = vsel %vm1220, 1, 0
      %v1285 = vsel %vm1221, 1, 0
      %v1286 = vsel %vm1222, 1, 0
      %v1287 = vsel %vm1223, 1, 0
      %v1288 = vsel %vm1224, 1, 0
      %v1289 = vsel %vm1225, 1, 0
      %v1290 = vsel %vm1226, 1, 0
      %v1291 = vsel %vm1227, 1, 0
      %v1292 = vsel %vm1228, 1, 0
      %v1293 = vsel %vm1229, 1, 0
      %v1294 = vsel %vm1230, 1, 0
      %v1295 = vsel %vm1231, 1, 0
      %v1296 = vsel %vm1232, 1, 0
      %v1297 = vsel %vm1233, 1, 0
      %v1298 = vsel %vm1234, 1, 0
      %v1299 = vsel %vm1235, 1, 0
      %v1300 = vsel %vm1236, 1, 0
      %v1301 = vsel %vm1237, 1, 0
      %v1302 = vsel %vm1238, 1, 0
      %v1303 = vsel %vm1239, 1, 0
      %v1304 = vsel %vm1240, 1, 0
      %v1305 = vsel %vm1241, 1, 0
      %v1306 = vsel %vm1242, 1, 0
      %v1307 = vsel %vm1243, 1, 0
      %v1308 = vsel %vm1244, 1, 0
      %v1309 = vsel %vm1245, 1, 0
      %v1310 = vsel %vm1246, 1, 0
      %v1311 = vsel %vm1247, 1, 0
      %v1312 = vsel %vm1248, 1, 0
      %v1313 = vsel %vm1249, 1, 0
      %v1314 = vsel %vm1250, 1, 0
      %v1315 = vsel %vm1251, 1, 0
      %v1316 = vsel %vm1252, 1, 0
      %v1317 = vcvt.s32.f32 %v1253
      %v1318 = vcvt.s32.f32 %v1254
      %v1319 = vcvt.s32.f32 %v1255
      %v1320 = vcvt.s32.f32 %v1256
      %v1321 = vcvt.s32.f32 %v1257
      %v1322 = vcvt.s32.f32 %v1258
      %v1323 = vcvt.s32.f32 %v1259
      %v1324 = vcvt.s32.f32 %v1260
      %v1325 = vcvt.s32.f32 %v1261
      %v1326 = vcvt.s32.f32 %v1262
      %v1327 = vcvt.s32.f32 %v1263
      %v1328 = vcvt.s32.f32 %v1264
      %v1329 = vcvt.s32.f32 %v1265
      %v1330 = vcvt.s32.f32 %v1266
      %v1331 = vcvt.s32.f32 %v1267
      %v1332 = vcvt.s32.f32 %v1268
      %v1333 = vcvt.s32.f32 %v1269
      %v1334 = vcvt.s32.f32 %v1270
      %v1335 = vcvt.s32.f32 %v1271
      %v1336 = vcvt.s32.f32 %v1272
      %v1337 = vcvt.s32.f32 %v1273
      %v1338 = vcvt.s32.f32 %v1274
      %v1339 = vcvt.s32.f32 %v1275
      %v1340 = vcvt.s32.f32 %v1276
      %v1341 = vcvt.s32.f32 %v1277
      %v1342 = vcvt.s32.f32 %v1278
      %v1343 = vcvt.s32.f32 %v1279
      %v1344 = vcvt.s32.f32 %v1280
      %v1345 = vcvt.s32.f32 %v1281
      %v1346 = vcvt.s32.f32 %v1282
      %v1347 = vcvt.s32.f32 %v1283
      %v1348 = vcvt.s32.f32 %v1284
      %v1349 = vcvt.s32.f32 %v1285
      %v1350 = vcvt.s32.f32 %v1286
      %v1351 = vcvt.s32.f32 %v1287
      %v1352 = vcvt.s32.f32 %v1288
      %v1353 = vcvt.s32.f32 %v1289
      %v1354 = vcvt.s32.f32 %v1290
      %v1355 = vcvt.s32.f32 %v1291
      %v1356 = vcvt.s32.f32 %v1292
      %v1357 = vcvt.s32.f32 %v1293
      %v1358 = vcvt.s32.f32 %v1294
      %v1359 = vcvt.s32.f32 %v1295
      %v1360 = vcvt.s32.f32 %v1296
      %v1361 = vcvt.s32.f32 %v1297
      %v1362 = vcvt.s32.f32 %v1298
      %v1363 = vcvt.s32.f32 %v1299
      %v1364 = vcvt.s32.f32 %v1300
      %v1365 = vcvt.s32.f32 %v1301
      %v1366 = vcvt.s32.f32 %v1302
      %v1367 = vcvt.s32.f32 %v1303
      %v1368 = vcvt.s32.f32 %v1304
      %v1369 = vcvt.s32.f32 %v1305
      %v1370 = vcvt.s32.f32 %v1306
      %v1371 = vcvt.s32.f32 %v1307
      %v1372 = vcvt.s32.f32 %v1308
      %v1373 = vcvt.s32.f32 %v1309
      %v1374 = vcvt.s32.f32 %v1310
      %v1375 = vcvt.s32.f32 %v1311
      %v1376 = vcvt.s32.f32 %v1312
      %v1377 = vcvt.s32.f32 %v1313
      %v1378 = vcvt.s32.f32 %v1314
      %v1379 = vcvt.s32.f32 %v1315
      %v1380 = vcvt.s32.f32 %v1316
      %1381 = vmatprep.subr.mxu0 0.0
      %1382 = vmatpush1.msra.mxu0 %v147
      %1383 = vmatprep.subr.mxu0 0.0
      %1384 = vmatpush1.msra.mxu0 %v148
      %1385 = vmatprep.subr.mxu0 0.0
      %1386 = vmatpush1.msra.mxu0 %v149
      %1387 = vmatprep.subr.mxu0 0.0
      %1388 = vmatpush1.msra.mxu0 %v150
      %1389 = vmatprep.subr.mxu0 0.0
      %1390 = vmatpush1.msra.mxu0 %v151
      %1391 = vmatprep.subr.mxu0 0.0
      %1392 = vmatpush1.msra.mxu0 %v152
      %1393 = vmatprep.subr.mxu0 0.0
      %1394 = vmatpush1.msra.mxu0 %v153
      %1395 = vmatprep.subr.mxu0 0.0
      %1396 = vmatpush1.msra.mxu0 %v154
      %1397 = vmatprep.subr.mxu0 0.0
      %1398 = vmatpush1.msra.mxu0 %v155
      %1399 = vmatprep.subr.mxu0 0.0
      %1400 = vmatpush1.msra.mxu0 %v156
      %1401 = vmatprep.subr.mxu0 0.0
      %1402 = vmatpush1.msra.mxu0 %v157
      %1403 = vmatprep.subr.mxu0 0.0
      %1404 = vmatpush1.msra.mxu0 %v158
      %1405 = vmatprep.subr.mxu0 0.0
      %1406 = vmatpush1.msra.mxu0 %v159
      %1407 = vmatprep.subr.mxu0 0.0
      %1408 = vmatpush1.msra.mxu0 %v160
      %1409 = vmatprep.subr.mxu0 0.0
      %1410 = vmatpush1.msra.mxu0 %v161
      %1411 = vmatprep.subr.mxu0 0.0
      %1412 = vmatpush1.msra.mxu0 %v162
      %1413 = vmatprep.subr.mxu0 0.0
      %1414 = vmatpush1.msra.mxu0 0.0
      %1415 = vmatprep.subr.mxu0 0.0
      %1416 = vmatpush1.msra.mxu0 0.0
      %1417 = vmatprep.subr.mxu0 0.0
      %1418 = vmatpush1.msra.mxu0 0.0
      %1419 = vmatprep.subr.mxu0 0.0
      %1420 = vmatpush1.msra.mxu0 0.0
      %1421 = vmatprep.subr.mxu0 0.0
      %1422 = vmatpush1.msra.mxu0 0.0
      %1423 = vmatprep.subr.mxu0 0.0
      %1424 = vmatpush1.msra.mxu0 0.0
      %1425 = vmatprep.subr.mxu0 0.0
      %1426 = vmatpush1.msra.mxu0 0.0
      %1427 = vmatprep.subr.mxu0 0.0
      %1428 = vmatpush1.msra.mxu0 0.0
      %1429 = vmatprep.subr.mxu0 0.0
      %1430 = vmatpush1.msra.mxu0 0.0
      %1431 = vmatprep.subr.mxu0 0.0
      %1432 = vmatpush1.msra.mxu0 0.0
      %1433 = vmatprep.subr.mxu0 0.0
      %1434 = vmatpush1.msra.mxu0 0.0
      %1435 = vmatprep.subr.mxu0 0.0
      %1436 = vmatpush1.msra.mxu0 0.0
      %1437 = vmatprep.subr.mxu0 0.0
      %1438 = vmatpush1.msra.mxu0 0.0
      %1439 = vmatprep.subr.mxu0 0.0
      %1440 = vmatpush1.msra.mxu0 0.0
      %1441 = vmatprep.subr.mxu0 0.0
      %1442 = vmatpush1.msra.mxu0 0.0
      %1443 = vmatprep.subr.mxu0 0.0
      %1444 = vmatpush1.msra.mxu0 0.0
      %1445 = vmatprep.mubr.f32.mxu0 0.0
      %1446 = vmatmul.mubr.f32.gmra.mrb[0].mxu0 %v549
      %v1447 = vpop.f32.mrb[0].mxu0
      %v1448 = vadd.f32 0.0, %v1447
      %v1449 = vpop.f32.mrb[0].mxu0
      %1450 = vmatprep.mubr.f32.mxu0 0.0
      %1451 = vmatmul.mubr.f32.gmra.mrb[0].mxu0 %v550
      %v1452 = vpop.f32.mrb[0].mxu0
      %v1453 = vadd.f32 0.0, %v1452
      %v1454 = vpop.f32.mrb[0].mxu0
      %1455 = vmatprep.mubr.f32.mxu0 0.0
      %1456 = vmatmul.mubr.f32.gmra.mrb[0].mxu0 %v551
      %v1457 = vpop.f32.mrb[0].mxu0
      %v1458 = vadd.f32 0.0, %v1457
      %v1459 = vpop.f32.mrb[0].mxu0
      %1460 = vmatprep.mubr.f32.mxu0 0.0
      %1461 = vmatmul.mubr.f32.gmra.mrb[0].mxu0 %v552
      %v1462 = vpop.f32.mrb[0].mxu0
      %v1463 = vadd.f32 0.0, %v1462
      %v1464 = vpop.f32.mrb[0].mxu0
      %1465 = vmatprep.mubr.f32.mxu0 0.0
      %1466 = vmatmul.mubr.f32.gmra.mrb[0].mxu0 %v553
      %v1467 = vpop.f32.mrb[0].mxu0
      %v1468 = vadd.f32 0.0, %v1467
      %v1469 = vpop.f32.mrb[0].mxu0
      %1470 = vmatprep.mubr.f32.mxu0 0.0
      %1471 = vmatmul.mubr.f32.gmra.mrb[0].mxu0 %v554
      %v1472 = vpop.f32.mrb[0].mxu0
      %v1473 = vadd.f32 0.0, %v1472
      %v1474 = vpop.f32.mrb[0].mxu0
      %1475 = vmatprep.mubr.f32.mxu0 0.0
      %1476 = vmatmul.mubr.f32.gmra.mrb[0].mxu0 %v555
      %v1477 = vpop.f32.mrb[0].mxu0
      %v1478 = vadd.f32 0.0, %v1477
      %v1479 = vpop.f32.mrb[0].mxu0
      %1480 = vmatprep.mubr.f32.mxu0 0.0
      %1481 = vmatmul.mubr.f32.gmra.mrb[0].mxu0 %v556
      %v1482 = vpop.f32.mrb[0].mxu0
      %v1483 = vadd.f32 0.0, %v1482
      %v1484 = vpop.f32.mrb[0].mxu0
      %1485 = vmatprep.mubr.f32.mxu0 0.0
      %1486 = vmatmul.mubr.f32.gmra.mrb[0].mxu0 %v557
      %v1487 = vpop.f32.mrb[0].mxu0
      %v1488 = vadd.f32 0.0, %v1487
      %v1489 = vpop.f32.mrb[0].mxu0
      %1490 = vmatprep.mubr.f32.mxu0 0.0
      %1491 = vmatmul.mubr.f32.gmra.mrb[0].mxu0 %v558
      %v1492 = vpop.f32.mrb[0].mxu0
      %v1493 = vadd.f32 0.0, %v1492
      %v1494 = vpop.f32.mrb[0].mxu0
      %1495 = vmatprep.mubr.f32.mxu0 0.0
      %1496 = vmatmul.mubr.f32.gmra.mrb[0].mxu0 %v559
      %v1497 = vpop.f32.mrb[0].mxu0
      %v1498 = vadd.f32 0.0, %v1497
      %v1499 = vpop.f32.mrb[0].mxu0
      %1500 = vmatprep.mubr.f32.mxu0 0.0
      %1501 = vmatmul.mubr.f32.gmra.mrb[0].mxu0 %v560
      %v1502 = vpop.f32.mrb[0].mxu0
      %v1503 = vadd.f32 0.0, %v1502
      %v1504 = vpop.f32.mrb[0].mxu0
      %1505 = vmatprep.mubr.f32.mxu0 0.0
      %1506 = vmatmul.mubr.f32.gmra.mrb[0].mxu0 %v561
      %v1507 = vpop.f32.mrb[0].mxu0
      %v1508 = vadd.f32 0.0, %v1507
      %v1509 = vpop.f32.mrb[0].mxu0
      %1510 = vmatprep.mubr.f32.mxu0 0.0
      %1511 = vmatmul.mubr.f32.gmra.mrb[0].mxu0 %v562
      %v1512 = vpop.f32.mrb[0].mxu0
      %v1513 = vadd.f32 0.0, %v1512
      %v1514 = vpop.f32.mrb[0].mxu0
      %1515 = vmatprep.mubr.f32.mxu0 0.0
      %1516 = vmatmul.mubr.f32.gmra.mrb[0].mxu0 %v563
      %v1517 = vpop.f32.mrb[0].mxu0
      %v1518 = vadd.f32 0.0, %v1517
      %v1519 = vpop.f32.mrb[0].mxu0
      %1520 = vmatprep.mubr.f32.mxu0 0.0
      %1521 = vmatmul.mubr.f32.gmra.mrb[0].mxu0 %v564
      %v1522 = vpop.f32.mrb[0].mxu0
      %v1523 = vadd.f32 0.0, %v1522
      %v1524 = vpop.f32.mrb[0].mxu0
      %1525 = vmatprep.mubr.f32.mxu0 0.0
      %1526 = vmatmul.mubr.f32.gmra.mrb[0].mxu0 %v565
      %v1527 = vpop.f32.mrb[0].mxu0
      %v1528 = vadd.f32 0.0, %v1527
      %v1529 = vpop.f32.mrb[0].mxu0
      %1530 = vmatprep.mubr.f32.mxu0 0.0
      %1531 = vmatmul.mubr.f32.gmra.mrb[0].mxu0 %v566
      %v1532 = vpop.f32.mrb[0].mxu0
      %v1533 = vadd.f32 0.0, %v1532
      %v1534 = vpop.f32.mrb[0].mxu0
      %1535 = vmatprep.mubr.f32.mxu0 0.0
      %1536 = vmatmul.mubr.f32.gmra.mrb[0].mxu0 %v567
      %v1537 = vpop.f32.mrb[0].mxu0
      %v1538 = vadd.f32 0.0, %v1537
      %v1539 = vpop.f32.mrb[0].mxu0
      %1540 = vmatprep.mubr.f32.mxu0 0.0
      %1541 = vmatmul.mubr.f32.gmra.mrb[0].mxu0 %v568
      %v1542 = vpop.f32.mrb[0].mxu0
      %v1543 = vadd.f32 0.0, %v1542
      %v1544 = vpop.f32.mrb[0].mxu0
      %1545 = vmatprep.mubr.f32.mxu0 0.0
      %1546 = vmatmul.mubr.f32.gmra.mrb[0].mxu0 %v569
      %v1547 = vpop.f32.mrb[0].mxu0
      %v1548 = vadd.f32 0.0, %v1547
      %v1549 = vpop.f32.mrb[0].mxu0
      %1550 = vmatprep.mubr.f32.mxu0 0.0
      %1551 = vmatmul.mubr.f32.gmra.mrb[0].mxu0 %v570
      %v1552 = vpop.f32.mrb[0].mxu0
      %v1553 = vadd.f32 0.0, %v1552
      %v1554 = vpop.f32.mrb[0].mxu0
      %1555 = vmatprep.mubr.f32.mxu0 0.0
      %1556 = vmatmul.mubr.f32.gmra.mrb[0].mxu0 %v571
      %v1557 = vpop.f32.mrb[0].mxu0
      %v1558 = vadd.f32 0.0, %v1557
      %v1559 = vpop.f32.mrb[0].mxu0
      %1560 = vmatprep.mubr.f32.mxu0 0.0
      %1561 = vmatmul.mubr.f32.gmra.mrb[0].mxu0 %v572
      %v1562 = vpop.f32.mrb[0].mxu0
      %v1563 = vadd.f32 0.0, %v1562
      %v1564 = vpop.f32.mrb[0].mxu0
      %1565 = vmatprep.mubr.f32.mxu0 0.0
      %1566 = vmatmul.mubr.f32.gmra.mrb[0].mxu0 %v573
      %v1567 = vpop.f32.mrb[0].mxu0
      %v1568 = vadd.f32 0.0, %v1567
      %v1569 = vpop.f32.mrb[0].mxu0
      %1570 = vmatprep.mubr.f32.mxu0 0.0
      %1571 = vmatmul.mubr.f32.gmra.mrb[0].mxu0 %v574
      %v1572 = vpop.f32.mrb[0].mxu0
      %v1573 = vadd.f32 0.0, %v1572
      %v1574 = vpop.f32.mrb[0].mxu0
      %1575 = vmatprep.mubr.f32.mxu0 0.0
      %1576 = vmatmul.mubr.f32.gmra.mrb[0].mxu0 %v575
      %v1577 = vpop.f32.mrb[0].mxu0
      %v1578 = vadd.f32 0.0, %v1577
      %v1579 = vpop.f32.mrb[0].mxu0
      %1580 = vmatprep.mubr.f32.mxu0 0.0
      %1581 = vmatmul.mubr.f32.gmra.mrb[0].mxu0 %v576
      %v1582 = vpop.f32.mrb[0].mxu0
      %v1583 = vadd.f32 0.0, %v1582
      %v1584 = vpop.f32.mrb[0].mxu0
      %1585 = vmatprep.mubr.f32.mxu0 0.0
      %1586 = vmatmul.mubr.f32.gmra.mrb[0].mxu0 %v577
      %v1587 = vpop.f32.mrb[0].mxu0
      %v1588 = vadd.f32 0.0, %v1587
      %v1589 = vpop.f32.mrb[0].mxu0
      %1590 = vmatprep.mubr.f32.mxu0 0.0
      %1591 = vmatmul.mubr.f32.gmra.mrb[0].mxu0 %v578
      %v1592 = vpop.f32.mrb[0].mxu0
      %v1593 = vadd.f32 0.0, %v1592
      %v1594 = vpop.f32.mrb[0].mxu0
      %1595 = vmatprep.mubr.f32.mxu0 0.0
      %1596 = vmatmul.mubr.f32.gmra.mrb[0].mxu0 %v579
      %v1597 = vpop.f32.mrb[0].mxu0
      %v1598 = vadd.f32 0.0, %v1597
      %v1599 = vpop.f32.mrb[0].mxu0
      %1600 = vmatprep.mubr.f32.mxu0 0.0
      %1601 = vmatmul.mubr.f32.gmra.mrb[0].mxu0 %v580
      %v1602 = vpop.f32.mrb[0].mxu0
      %v1603 = vadd.f32 0.0, %v1602
      %v1604 = vpop.f32.mrb[0].mxu0
      %1605 = vmatprep.mubr.f32.mxu0 0.0
      %1606 = vmatmul.mubr.f32.gmra.mrb[0].mxu0 %v581
      %v1607 = vpop.f32.mrb[0].mxu0
      %v1608 = vadd.f32 0.0, %v1607
      %v1609 = vpop.f32.mrb[0].mxu0
      %1610 = vmatprep.mubr.f32.mxu0 0.0
      %1611 = vmatmul.mubr.f32.gmra.mrb[0].mxu0 %v582
      %v1612 = vpop.f32.mrb[0].mxu0
      %v1613 = vadd.f32 0.0, %v1612
      %v1614 = vpop.f32.mrb[0].mxu0
      %1615 = vmatprep.mubr.f32.mxu0 0.0
      %1616 = vmatmul.mubr.f32.gmra.mrb[0].mxu0 %v583
      %v1617 = vpop.f32.mrb[0].mxu0
      %v1618 = vadd.f32 0.0, %v1617
      %v1619 = vpop.f32.mrb[0].mxu0
      %1620 = vmatprep.mubr.f32.mxu0 0.0
      %1621 = vmatmul.mubr.f32.gmra.mrb[0].mxu0 %v584
      %v1622 = vpop.f32.mrb[0].mxu0
      %v1623 = vadd.f32 0.0, %v1622
      %v1624 = vpop.f32.mrb[0].mxu0
      %1625 = vmatprep.mubr.f32.mxu0 0.0
      %1626 = vmatmul.mubr.f32.gmra.mrb[0].mxu0 %v585
      %v1627 = vpop.f32.mrb[0].mxu0
      %v1628 = vadd.f32 0.0, %v1627
      %v1629 = vpop.f32.mrb[0].mxu0
      %1630 = vmatprep.mubr.f32.mxu0 0.0
      %1631 = vmatmul.mubr.f32.gmra.mrb[0].mxu0 %v586
      %v1632 = vpop.f32.mrb[0].mxu0
      %v1633 = vadd.f32 0.0, %v1632
      %v1634 = vpop.f32.mrb[0].mxu0
      %1635 = vmatprep.mubr.f32.mxu0 0.0
      %1636 = vmatmul.mubr.f32.gmra.mrb[0].mxu0 %v587
      %v1637 = vpop.f32.mrb[0].mxu0
      %v1638 = vadd.f32 0.0, %v1637
      %v1639 = vpop.f32.mrb[0].mxu0
      %1640 = vmatprep.mubr.f32.mxu0 0.0
      %1641 = vmatmul.mubr.f32.gmra.mrb[0].mxu0 %v588
      %v1642 = vpop.f32.mrb[0].mxu0
      %v1643 = vadd.f32 0.0, %v1642
      %v1644 = vpop.f32.mrb[0].mxu0
      %1645 = vmatprep.mubr.f32.mxu0 0.0
      %1646 = vmatmul.mubr.f32.gmra.mrb[0].mxu0 %v589
      %v1647 = vpop.f32.mrb[0].mxu0
      %v1648 = vadd.f32 0.0, %v1647
      %v1649 = vpop.f32.mrb[0].mxu0
      %1650 = vmatprep.mubr.f32.mxu0 0.0
      %1651 = vmatmul.mubr.f32.gmra.mrb[0].mxu0 %v590
      %v1652 = vpop.f32.mrb[0].mxu0
      %v1653 = vadd.f32 0.0, %v1652
      %v1654 = vpop.f32.mrb[0].mxu0
      %1655 = vmatprep.mubr.f32.mxu0 0.0
      %1656 = vmatmul.mubr.f32.gmra.mrb[0].mxu0 %v591
      %v1657 = vpop.f32.mrb[0].mxu0
      %v1658 = vadd.f32 0.0, %v1657
      %v1659 = vpop.f32.mrb[0].mxu0
      %1660 = vmatprep.mubr.f32.mxu0 0.0
      %1661 = vmatmul.mubr.f32.gmra.mrb[0].mxu0 %v592
      %v1662 = vpop.f32.mrb[0].mxu0
      %v1663 = vadd.f32 0.0, %v1662
      %v1664 = vpop.f32.mrb[0].mxu0
      %1665 = vmatprep.mubr.f32.mxu0 0.0
      %1666 = vmatmul.mubr.f32.gmra.mrb[0].mxu0 %v593
      %v1667 = vpop.f32.mrb[0].mxu0
      %v1668 = vadd.f32 0.0, %v1667
      %v1669 = vpop.f32.mrb[0].mxu0
      %1670 = vmatprep.mubr.f32.mxu0 0.0
      %1671 = vmatmul.mubr.f32.gmra.mrb[0].mxu0 %v594
      %v1672 = vpop.f32.mrb[0].mxu0
      %v1673 = vadd.f32 0.0, %v1672
      %v1674 = vpop.f32.mrb[0].mxu0
      %1675 = vmatprep.mubr.f32.mxu0 0.0
      %1676 = vmatmul.mubr.f32.gmra.mrb[0].mxu0 %v595
      %v1677 = vpop.f32.mrb[0].mxu0
      %v1678 = vadd.f32 0.0, %v1677
      %v1679 = vpop.f32.mrb[0].mxu0
      %1680 = vmatprep.mubr.f32.mxu0 0.0
      %1681 = vmatmul.mubr.f32.gmra.mrb[0].mxu0 %v596
      %v1682 = vpop.f32.mrb[0].mxu0
      %v1683 = vadd.f32 0.0, %v1682
      %v1684 = vpop.f32.mrb[0].mxu0
      %1685 = vmatprep.mubr.f32.mxu0 0.0
      %1686 = vmatmul.mubr.f32.gmra.mrb[0].mxu0 %v597
      %v1687 = vpop.f32.mrb[0].mxu0
      %v1688 = vadd.f32 0.0, %v1687
      %v1689 = vpop.f32.mrb[0].mxu0
      %1690 = vmatprep.mubr.f32.mxu0 0.0
      %1691 = vmatmul.mubr.f32.gmra.mrb[0].mxu0 %v598
      %v1692 = vpop.f32.mrb[0].mxu0
      %v1693 = vadd.f32 0.0, %v1692
      %v1694 = vpop.f32.mrb[0].mxu0
      %1695 = vmatprep.mubr.f32.mxu0 0.0
      %1696 = vmatmul.mubr.f32.gmra.mrb[0].mxu0 %v599
      %v1697 = vpop.f32.mrb[0].mxu0
      %v1698 = vadd.f32 0.0, %v1697
      %v1699 = vpop.f32.mrb[0].mxu0
      %1700 = vmatprep.mubr.f32.mxu0 0.0
      %1701 = vmatmul.mubr.f32.gmra.mrb[0].mxu0 %v600
      %v1702 = vpop.f32.mrb[0].mxu0
      %v1703 = vadd.f32 0.0, %v1702
      %v1704 = vpop.f32.mrb[0].mxu0
      %1705 = vmatprep.mubr.f32.mxu0 0.0
      %1706 = vmatmul.mubr.f32.gmra.mrb[0].mxu0 %v601
      %v1707 = vpop.f32.mrb[0].mxu0
      %v1708 = vadd.f32 0.0, %v1707
      %v1709 = vpop.f32.mrb[0].mxu0
      %1710 = vmatprep.mubr.f32.mxu0 0.0
      %1711 = vmatmul.mubr.f32.gmra.mrb[0].mxu0 %v602
      %v1712 = vpop.f32.mrb[0].mxu0
      %v1713 = vadd.f32 0.0, %v1712
      %v1714 = vpop.f32.mrb[0].mxu0
      %1715 = vmatprep.mubr.f32.mxu0 0.0
      %1716 = vmatmul.mubr.f32.gmra.mrb[0].mxu0 %v603
      %v1717 = vpop.f32.mrb[0].mxu0
      %v1718 = vadd.f32 0.0, %v1717
      %v1719 = vpop.f32.mrb[0].mxu0
      %1720 = vmatprep.mubr.f32.mxu0 0.0
      %1721 = vmatmul.mubr.f32.gmra.mrb[0].mxu0 %v604
      %v1722 = vpop.f32.mrb[0].mxu0
      %v1723 = vadd.f32 0.0, %v1722
      %v1724 = vpop.f32.mrb[0].mxu0
      %1725 = vmatprep.mubr.f32.mxu0 0.0
      %1726 = vmatmul.mubr.f32.gmra.mrb[0].mxu0 %v605
      %v1727 = vpop.f32.mrb[0].mxu0
      %v1728 = vadd.f32 0.0, %v1727
      %v1729 = vpop.f32.mrb[0].mxu0
      %1730 = vmatprep.mubr.f32.mxu0 0.0
      %1731 = vmatmul.mubr.f32.gmra.mrb[0].mxu0 %v606
      %v1732 = vpop.f32.mrb[0].mxu0
      %v1733 = vadd.f32 0.0, %v1732
      %v1734 = vpop.f32.mrb[0].mxu0
      %1735 = vmatprep.mubr.f32.mxu0 0.0
      %1736 = vmatmul.mubr.f32.gmra.mrb[0].mxu0 %v607
      %v1737 = vpop.f32.mrb[0].mxu0
      %v1738 = vadd.f32 0.0, %v1737
      %v1739 = vpop.f32.mrb[0].mxu0
      %1740 = vmatprep.mubr.f32.mxu0 0.0
      %1741 = vmatmul.mubr.f32.gmra.mrb[0].mxu0 %v608
      %v1742 = vpop.f32.mrb[0].mxu0
      %v1743 = vadd.f32 0.0, %v1742
      %v1744 = vpop.f32.mrb[0].mxu0
      %1745 = vmatprep.mubr.f32.mxu0 0.0
      %1746 = vmatmul.mubr.f32.gmra.mrb[0].mxu0 %v609
      %v1747 = vpop.f32.mrb[0].mxu0
      %v1748 = vadd.f32 0.0, %v1747
      %v1749 = vpop.f32.mrb[0].mxu0
      %1750 = vmatprep.mubr.f32.mxu0 0.0
      %1751 = vmatmul.mubr.f32.gmra.mrb[0].mxu0 %v610
      %v1752 = vpop.f32.mrb[0].mxu0
      %v1753 = vadd.f32 0.0, %v1752
      %v1754 = vpop.f32.mrb[0].mxu0
      %1755 = vmatprep.mubr.f32.mxu0 0.0
      %1756 = vmatmul.mubr.f32.gmra.mrb[0].mxu0 %v611
      %v1757 = vpop.f32.mrb[0].mxu0
      %v1758 = vadd.f32 0.0, %v1757
      %v1759 = vpop.f32.mrb[0].mxu0
      %1760 = vmatprep.mubr.f32.mxu0 0.0
      %1761 = vmatmul.mubr.f32.gmra.mrb[0].mxu0 %v612
      %v1762 = vpop.f32.mrb[0].mxu0
      %v1763 = vadd.f32 0.0, %v1762
      %v1764 = vpop.f32.mrb[0].mxu0
      %1765 = vdwg.mxu0
      %1766 = vmatprep.subr.mxu0 0.0
      %1767 = vmatpush1.msra.mxu0 %v147
      %1768 = vmatprep.subr.mxu0 0.0
      %1769 = vmatpush1.msra.mxu0 %v148
      %1770 = vmatprep.subr.mxu0 0.0
      %1771 = vmatpush1.msra.mxu0 %v149
      %1772 = vmatprep.subr.mxu0 0.0
      %1773 = vmatpush1.msra.mxu0 %v150
      %1774 = vmatprep.subr.mxu0 0.0
      %1775 = vmatpush1.msra.mxu0 %v151
      %1776 = vmatprep.subr.mxu0 0.0
      %1777 = vmatpush1.msra.mxu0 %v152
      %1778 = vmatprep.subr.mxu0 0.0
      %1779 = vmatpush1.msra.mxu0 %v153
      %1780 = vmatprep.subr.mxu0 0.0
      %1781 = vmatpush1.msra.mxu0 %v154
      %1782 = vmatprep.subr.mxu0 0.0
      %1783 = vmatpush1.msra.mxu0 %v155
      %1784 = vmatprep.subr.mxu0 0.0
      %1785 = vmatpush1.msra.mxu0 %v156
      %1786 = vmatprep.subr.mxu0 0.0
      %1787 = vmatpush1.msra.mxu0 %v157
      %1788 = vmatprep.subr.mxu0 0.0
      %1789 = vmatpush1.msra.mxu0 %v158
      %1790 = vmatprep.subr.mxu0 0.0
      %1791 = vmatpush1.msra.mxu0 %v159
      %1792 = vmatprep.subr.mxu0 0.0
      %1793 = vmatpush1.msra.mxu0 %v160
      %1794 = vmatprep.subr.mxu0 0.0
      %1795 = vmatpush1.msra.mxu0 %v161
      %1796 = vmatprep.subr.mxu0 0.0
      %1797 = vmatpush1.msra.mxu0 %v162
      %1798 = vmatprep.subr.mxu0 0.0
      %1799 = vmatpush1.msra.mxu0 0.0
      %1800 = vmatprep.subr.mxu0 0.0
      %1801 = vmatpush1.msra.mxu0 0.0
      %1802 = vmatprep.subr.mxu0 0.0
      %1803 = vmatpush1.msra.mxu0 0.0
      %1804 = vmatprep.subr.mxu0 0.0
      %1805 = vmatpush1.msra.mxu0 0.0
      %1806 = vmatprep.subr.mxu0 0.0
      %1807 = vmatpush1.msra.mxu0 0.0
      %1808 = vmatprep.subr.mxu0 0.0
      %1809 = vmatpush1.msra.mxu0 0.0
      %1810 = vmatprep.subr.mxu0 0.0
      %1811 = vmatpush1.msra.mxu0 0.0
      %1812 = vmatprep.subr.mxu0 0.0
      %1813 = vmatpush1.msra.mxu0 0.0
      %1814 = vmatprep.subr.mxu0 0.0
      %1815 = vmatpush1.msra.mxu0 0.0
      %1816 = vmatprep.subr.mxu0 0.0
      %1817 = vmatpush1.msra.mxu0 0.0
      %1818 = vmatprep.subr.mxu0 0.0
      %1819 = vmatpush1.msra.mxu0 0.0
      %1820 = vmatprep.subr.mxu0 0.0
      %1821 = vmatpush1.msra.mxu0 0.0
      %1822 = vmatprep.subr.mxu0 0.0
      %1823 = vmatpush1.msra.mxu0 0.0
      %1824 = vmatprep.subr.mxu0 0.0
      %1825 = vmatpush1.msra.mxu0 0.0
      %1826 = vmatprep.subr.mxu0 0.0
      %1827 = vmatpush1.msra.mxu0 0.0
      %1828 = vmatprep.subr.mxu0 0.0
      %1829 = vmatpush1.msra.mxu0 0.0
      %1830 = vmatprep.mubr.f32.mxu0 0.0
      %1831 = vmatmul.mubr.f32.gmra.mrb[0].mxu0 %v933
      %v1832 = vpop.f32.mrb[0].mxu0
      %v1833 = vadd.f32 0.0, %v1832
      %v1834 = vpop.f32.mrb[0].mxu0
      %1835 = vmatprep.mubr.f32.mxu0 0.0
      %1836 = vmatmul.mubr.f32.gmra.mrb[0].mxu0 %v934
      %v1837 = vpop.f32.mrb[0].mxu0
      %v1838 = vadd.f32 0.0, %v1837
      %v1839 = vpop.f32.mrb[0].mxu0
      %1840 = vmatprep.mubr.f32.mxu0 0.0
      %1841 = vmatmul.mubr.f32.gmra.mrb[0].mxu0 %v935
      %v1842 = vpop.f32.mrb[0].mxu0
      %v1843 = vadd.f32 0.0, %v1842
      %v1844 = vpop.f32.mrb[0].mxu0
      %1845 = vmatprep.mubr.f32.mxu0 0.0
      %1846 = vmatmul.mubr.f32.gmra.mrb[0].mxu0 %v936
      %v1847 = vpop.f32.mrb[0].mxu0
      %v1848 = vadd.f32 0.0, %v1847
      %v1849 = vpop.f32.mrb[0].mxu0
      %1850 = vmatprep.mubr.f32.mxu0 0.0
      %1851 = vmatmul.mubr.f32.gmra.mrb[0].mxu0 %v937
      %v1852 = vpop.f32.mrb[0].mxu0
      %v1853 = vadd.f32 0.0, %v1852
      %v1854 = vpop.f32.mrb[0].mxu0
      %1855 = vmatprep.mubr.f32.mxu0 0.0
      %1856 = vmatmul.mubr.f32.gmra.mrb[0].mxu0 %v938
      %v1857 = vpop.f32.mrb[0].mxu0
      %v1858 = vadd.f32 0.0, %v1857
      %v1859 = vpop.f32.mrb[0].mxu0
      %1860 = vmatprep.mubr.f32.mxu0 0.0
      %1861 = vmatmul.mubr.f32.gmra.mrb[0].mxu0 %v939
      %v1862 = vpop.f32.mrb[0].mxu0
      %v1863 = vadd.f32 0.0, %v1862
      %v1864 = vpop.f32.mrb[0].mxu0
      %1865 = vmatprep.mubr.f32.mxu0 0.0
      %1866 = vmatmul.mubr.f32.gmra.mrb[0].mxu0 %v940
      %v1867 = vpop.f32.mrb[0].mxu0
      %v1868 = vadd.f32 0.0, %v1867
      %v1869 = vpop.f32.mrb[0].mxu0
      %1870 = vmatprep.mubr.f32.mxu0 0.0
      %1871 = vmatmul.mubr.f32.gmra.mrb[0].mxu0 %v941
      %v1872 = vpop.f32.mrb[0].mxu0
      %v1873 = vadd.f32 0.0, %v1872
      %v1874 = vpop.f32.mrb[0].mxu0
      %1875 = vmatprep.mubr.f32.mxu0 0.0
      %1876 = vmatmul.mubr.f32.gmra.mrb[0].mxu0 %v942
      %v1877 = vpop.f32.mrb[0].mxu0
      %v1878 = vadd.f32 0.0, %v1877
      %v1879 = vpop.f32.mrb[0].mxu0
      %1880 = vmatprep.mubr.f32.mxu0 0.0
      %1881 = vmatmul.mubr.f32.gmra.mrb[0].mxu0 %v943
      %v1882 = vpop.f32.mrb[0].mxu0
      %v1883 = vadd.f32 0.0, %v1882
      %v1884 = vpop.f32.mrb[0].mxu0
      %1885 = vmatprep.mubr.f32.mxu0 0.0
      %1886 = vmatmul.mubr.f32.gmra.mrb[0].mxu0 %v944
      %v1887 = vpop.f32.mrb[0].mxu0
      %v1888 = vadd.f32 0.0, %v1887
      %v1889 = vpop.f32.mrb[0].mxu0
      %1890 = vmatprep.mubr.f32.mxu0 0.0
      %1891 = vmatmul.mubr.f32.gmra.mrb[0].mxu0 %v945
      %v1892 = vpop.f32.mrb[0].mxu0
      %v1893 = vadd.f32 0.0, %v1892
      %v1894 = vpop.f32.mrb[0].mxu0
      %1895 = vmatprep.mubr.f32.mxu0 0.0
      %1896 = vmatmul.mubr.f32.gmra.mrb[0].mxu0 %v946
      %v1897 = vpop.f32.mrb[0].mxu0
      %v1898 = vadd.f32 0.0, %v1897
      %v1899 = vpop.f32.mrb[0].mxu0
      %1900 = vmatprep.mubr.f32.mxu0 0.0
      %1901 = vmatmul.mubr.f32.gmra.mrb[0].mxu0 %v947
      %v1902 = vpop.f32.mrb[0].mxu0
      %v1903 = vadd.f32 0.0, %v1902
      %v1904 = vpop.f32.mrb[0].mxu0
      %1905 = vmatprep.mubr.f32.mxu0 0.0
      %1906 = vmatmul.mubr.f32.gmra.mrb[0].mxu0 %v948
      %v1907 = vpop.f32.mrb[0].mxu0
      %v1908 = vadd.f32 0.0, %v1907
      %v1909 = vpop.f32.mrb[0].mxu0
      %1910 = vmatprep.mubr.f32.mxu0 0.0
      %1911 = vmatmul.mubr.f32.gmra.mrb[0].mxu0 %v949
      %v1912 = vpop.f32.mrb[0].mxu0
      %v1913 = vadd.f32 0.0, %v1912
      %v1914 = vpop.f32.mrb[0].mxu0
      %1915 = vmatprep.mubr.f32.mxu0 0.0
      %1916 = vmatmul.mubr.f32.gmra.mrb[0].mxu0 %v950
      %v1917 = vpop.f32.mrb[0].mxu0
      %v1918 = vadd.f32 0.0, %v1917
      %v1919 = vpop.f32.mrb[0].mxu0
      %1920 = vmatprep.mubr.f32.mxu0 0.0
      %1921 = vmatmul.mubr.f32.gmra.mrb[0].mxu0 %v951
      %v1922 = vpop.f32.mrb[0].mxu0
      %v1923 = vadd.f32 0.0, %v1922
      %v1924 = vpop.f32.mrb[0].mxu0
      %1925 = vmatprep.mubr.f32.mxu0 0.0
      %1926 = vmatmul.mubr.f32.gmra.mrb[0].mxu0 %v952
      %v1927 = vpop.f32.mrb[0].mxu0
      %v1928 = vadd.f32 0.0, %v1927
      %v1929 = vpop.f32.mrb[0].mxu0
      %1930 = vmatprep.mubr.f32.mxu0 0.0
      %1931 = vmatmul.mubr.f32.gmra.mrb[0].mxu0 %v953
      %v1932 = vpop.f32.mrb[0].mxu0
      %v1933 = vadd.f32 0.0, %v1932
      %v1934 = vpop.f32.mrb[0].mxu0
      %1935 = vmatprep.mubr.f32.mxu0 0.0
      %1936 = vmatmul.mubr.f32.gmra.mrb[0].mxu0 %v954
      %v1937 = vpop.f32.mrb[0].mxu0
      %v1938 = vadd.f32 0.0, %v1937
      %v1939 = vpop.f32.mrb[0].mxu0
      %1940 = vmatprep.mubr.f32.mxu0 0.0
      %1941 = vmatmul.mubr.f32.gmra.mrb[0].mxu0 %v955
      %v1942 = vpop.f32.mrb[0].mxu0
      %v1943 = vadd.f32 0.0, %v1942
      %v1944 = vpop.f32.mrb[0].mxu0
      %1945 = vmatprep.mubr.f32.mxu0 0.0
      %1946 = vmatmul.mubr.f32.gmra.mrb[0].mxu0 %v956
      %v1947 = vpop.f32.mrb[0].mxu0
      %v1948 = vadd.f32 0.0, %v1947
      %v1949 = vpop.f32.mrb[0].mxu0
      %1950 = vmatprep.mubr.f32.mxu0 0.0
      %1951 = vmatmul.mubr.f32.gmra.mrb[0].mxu0 %v957
      %v1952 = vpop.f32.mrb[0].mxu0
      %v1953 = vadd.f32 0.0, %v1952
      %v1954 = vpop.f32.mrb[0].mxu0
      %1955 = vmatprep.mubr.f32.mxu0 0.0
      %1956 = vmatmul.mubr.f32.gmra.mrb[0].mxu0 %v958
      %v1957 = vpop.f32.mrb[0].mxu0
      %v1958 = vadd.f32 0.0, %v1957
      %v1959 = vpop.f32.mrb[0].mxu0
      %1960 = vmatprep.mubr.f32.mxu0 0.0
      %1961 = vmatmul.mubr.f32.gmra.mrb[0].mxu0 %v959
      %v1962 = vpop.f32.mrb[0].mxu0
      %v1963 = vadd.f32 0.0, %v1962
      %v1964 = vpop.f32.mrb[0].mxu0
      %1965 = vmatprep.mubr.f32.mxu0 0.0
      %1966 = vmatmul.mubr.f32.gmra.mrb[0].mxu0 %v960
      %v1967 = vpop.f32.mrb[0].mxu0
      %v1968 = vadd.f32 0.0, %v1967
      %v1969 = vpop.f32.mrb[0].mxu0
      %1970 = vmatprep.mubr.f32.mxu0 0.0
      %1971 = vmatmul.mubr.f32.gmra.mrb[0].mxu0 %v961
      %v1972 = vpop.f32.mrb[0].mxu0
      %v1973 = vadd.f32 0.0, %v1972
      %v1974 = vpop.f32.mrb[0].mxu0
      %1975 = vmatprep.mubr.f32.mxu0 0.0
      %1976 = vmatmul.mubr.f32.gmra.mrb[0].mxu0 %v962
      %v1977 = vpop.f32.mrb[0].mxu0
      %v1978 = vadd.f32 0.0, %v1977
      %v1979 = vpop.f32.mrb[0].mxu0
      %1980 = vmatprep.mubr.f32.mxu0 0.0
      %1981 = vmatmul.mubr.f32.gmra.mrb[0].mxu0 %v963
      %v1982 = vpop.f32.mrb[0].mxu0
      %v1983 = vadd.f32 0.0, %v1982
      %v1984 = vpop.f32.mrb[0].mxu0
      %1985 = vmatprep.mubr.f32.mxu0 0.0
      %1986 = vmatmul.mubr.f32.gmra.mrb[0].mxu0 %v964
      %v1987 = vpop.f32.mrb[0].mxu0
      %v1988 = vadd.f32 0.0, %v1987
      %v1989 = vpop.f32.mrb[0].mxu0
      %1990 = vmatprep.mubr.f32.mxu0 0.0
      %1991 = vmatmul.mubr.f32.gmra.mrb[0].mxu0 %v965
      %v1992 = vpop.f32.mrb[0].mxu0
      %v1993 = vadd.f32 0.0, %v1992
      %v1994 = vpop.f32.mrb[0].mxu0
      %1995 = vmatprep.mubr.f32.mxu0 0.0
      %1996 = vmatmul.mubr.f32.gmra.mrb[0].mxu0 %v966
      %v1997 = vpop.f32.mrb[0].mxu0
      %v1998 = vadd.f32 0.0, %v1997
      %v1999 = vpop.f32.mrb[0].mxu0
      %2000 = vmatprep.mubr.f32.mxu0 0.0
      %2001 = vmatmul.mubr.f32.gmra.mrb[0].mxu0 %v967
      %v2002 = vpop.f32.mrb[0].mxu0
      %v2003 = vadd.f32 0.0, %v2002
      %v2004 = vpop.f32.mrb[0].mxu0
      %2005 = vmatprep.mubr.f32.mxu0 0.0
      %2006 = vmatmul.mubr.f32.gmra.mrb[0].mxu0 %v968
      %v2007 = vpop.f32.mrb[0].mxu0
      %v2008 = vadd.f32 0.0, %v2007
      %v2009 = vpop.f32.mrb[0].mxu0
      %2010 = vmatprep.mubr.f32.mxu0 0.0
      %2011 = vmatmul.mubr.f32.gmra.mrb[0].mxu0 %v969
      %v2012 = vpop.f32.mrb[0].mxu0
      %v2013 = vadd.f32 0.0, %v2012
      %v2014 = vpop.f32.mrb[0].mxu0
      %2015 = vmatprep.mubr.f32.mxu0 0.0
      %2016 = vmatmul.mubr.f32.gmra.mrb[0].mxu0 %v970
      %v2017 = vpop.f32.mrb[0].mxu0
      %v2018 = vadd.f32 0.0, %v2017
      %v2019 = vpop.f32.mrb[0].mxu0
      %2020 = vmatprep.mubr.f32.mxu0 0.0
      %2021 = vmatmul.mubr.f32.gmra.mrb[0].mxu0 %v971
      %v2022 = vpop.f32.mrb[0].mxu0
      %v2023 = vadd.f32 0.0, %v2022
      %v2024 = vpop.f32.mrb[0].mxu0
      %2025 = vmatprep.mubr.f32.mxu0 0.0
      %2026 = vmatmul.mubr.f32.gmra.mrb[0].mxu0 %v972
      %v2027 = vpop.f32.mrb[0].mxu0
      %v2028 = vadd.f32 0.0, %v2027
      %v2029 = vpop.f32.mrb[0].mxu0
      %2030 = vmatprep.mubr.f32.mxu0 0.0
      %2031 = vmatmul.mubr.f32.gmra.mrb[0].mxu0 %v973
      %v2032 = vpop.f32.mrb[0].mxu0
      %v2033 = vadd.f32 0.0, %v2032
      %v2034 = vpop.f32.mrb[0].mxu0
      %2035 = vmatprep.mubr.f32.mxu0 0.0
      %2036 = vmatmul.mubr.f32.gmra.mrb[0].mxu0 %v974
      %v2037 = vpop.f32.mrb[0].mxu0
      %v2038 = vadd.f32 0.0, %v2037
      %v2039 = vpop.f32.mrb[0].mxu0
      %2040 = vmatprep.mubr.f32.mxu0 0.0
      %2041 = vmatmul.mubr.f32.gmra.mrb[0].mxu0 %v975
      %v2042 = vpop.f32.mrb[0].mxu0
      %v2043 = vadd.f32 0.0, %v2042
      %v2044 = vpop.f32.mrb[0].mxu0
      %2045 = vmatprep.mubr.f32.mxu0 0.0
      %2046 = vmatmul.mubr.f32.gmra.mrb[0].mxu0 %v976
      %v2047 = vpop.f32.mrb[0].mxu0
      %v2048 = vadd.f32 0.0, %v2047
      %v2049 = vpop.f32.mrb[0].mxu0
      %2050 = vmatprep.mubr.f32.mxu0 0.0
      %2051 = vmatmul.mubr.f32.gmra.mrb[0].mxu0 %v977
      %v2052 = vpop.f32.mrb[0].mxu0
      %v2053 = vadd.f32 0.0, %v2052
      %v2054 = vpop.f32.mrb[0].mxu0
      %2055 = vmatprep.mubr.f32.mxu0 0.0
      %2056 = vmatmul.mubr.f32.gmra.mrb[0].mxu0 %v978
      %v2057 = vpop.f32.mrb[0].mxu0
      %v2058 = vadd.f32 0.0, %v2057
      %v2059 = vpop.f32.mrb[0].mxu0
      %2060 = vmatprep.mubr.f32.mxu0 0.0
      %2061 = vmatmul.mubr.f32.gmra.mrb[0].mxu0 %v979
      %v2062 = vpop.f32.mrb[0].mxu0
      %v2063 = vadd.f32 0.0, %v2062
      %v2064 = vpop.f32.mrb[0].mxu0
      %2065 = vmatprep.mubr.f32.mxu0 0.0
      %2066 = vmatmul.mubr.f32.gmra.mrb[0].mxu0 %v980
      %v2067 = vpop.f32.mrb[0].mxu0
      %v2068 = vadd.f32 0.0, %v2067
      %v2069 = vpop.f32.mrb[0].mxu0
      %2070 = vmatprep.mubr.f32.mxu0 0.0
      %2071 = vmatmul.mubr.f32.gmra.mrb[0].mxu0 %v981
      %v2072 = vpop.f32.mrb[0].mxu0
      %v2073 = vadd.f32 0.0, %v2072
      %v2074 = vpop.f32.mrb[0].mxu0
      %2075 = vmatprep.mubr.f32.mxu0 0.0
      %2076 = vmatmul.mubr.f32.gmra.mrb[0].mxu0 %v982
      %v2077 = vpop.f32.mrb[0].mxu0
      %v2078 = vadd.f32 0.0, %v2077
      %v2079 = vpop.f32.mrb[0].mxu0
      %2080 = vmatprep.mubr.f32.mxu0 0.0
      %2081 = vmatmul.mubr.f32.gmra.mrb[0].mxu0 %v983
      %v2082 = vpop.f32.mrb[0].mxu0
      %v2083 = vadd.f32 0.0, %v2082
      %v2084 = vpop.f32.mrb[0].mxu0
      %2085 = vmatprep.mubr.f32.mxu0 0.0
      %2086 = vmatmul.mubr.f32.gmra.mrb[0].mxu0 %v984
      %v2087 = vpop.f32.mrb[0].mxu0
      %v2088 = vadd.f32 0.0, %v2087
      %v2089 = vpop.f32.mrb[0].mxu0
      %2090 = vmatprep.mubr.f32.mxu0 0.0
      %2091 = vmatmul.mubr.f32.gmra.mrb[0].mxu0 %v985
      %v2092 = vpop.f32.mrb[0].mxu0
      %v2093 = vadd.f32 0.0, %v2092
      %v2094 = vpop.f32.mrb[0].mxu0
      %2095 = vmatprep.mubr.f32.mxu0 0.0
      %2096 = vmatmul.mubr.f32.gmra.mrb[0].mxu0 %v986
      %v2097 = vpop.f32.mrb[0].mxu0
      %v2098 = vadd.f32 0.0, %v2097
      %v2099 = vpop.f32.mrb[0].mxu0
      %2100 = vmatprep.mubr.f32.mxu0 0.0
      %2101 = vmatmul.mubr.f32.gmra.mrb[0].mxu0 %v987
      %v2102 = vpop.f32.mrb[0].mxu0
      %v2103 = vadd.f32 0.0, %v2102
      %v2104 = vpop.f32.mrb[0].mxu0
      %2105 = vmatprep.mubr.f32.mxu0 0.0
      %2106 = vmatmul.mubr.f32.gmra.mrb[0].mxu0 %v988
      %v2107 = vpop.f32.mrb[0].mxu0
      %v2108 = vadd.f32 0.0, %v2107
      %v2109 = vpop.f32.mrb[0].mxu0
      %2110 = vmatprep.mubr.f32.mxu0 0.0
      %2111 = vmatmul.mubr.f32.gmra.mrb[0].mxu0 %v989
      %v2112 = vpop.f32.mrb[0].mxu0
      %v2113 = vadd.f32 0.0, %v2112
      %v2114 = vpop.f32.mrb[0].mxu0
      %2115 = vmatprep.mubr.f32.mxu0 0.0
      %2116 = vmatmul.mubr.f32.gmra.mrb[0].mxu0 %v990
      %v2117 = vpop.f32.mrb[0].mxu0
      %v2118 = vadd.f32 0.0, %v2117
      %v2119 = vpop.f32.mrb[0].mxu0
      %2120 = vmatprep.mubr.f32.mxu0 0.0
      %2121 = vmatmul.mubr.f32.gmra.mrb[0].mxu0 %v991
      %v2122 = vpop.f32.mrb[0].mxu0
      %v2123 = vadd.f32 0.0, %v2122
      %v2124 = vpop.f32.mrb[0].mxu0
      %2125 = vmatprep.mubr.f32.mxu0 0.0
      %2126 = vmatmul.mubr.f32.gmra.mrb[0].mxu0 %v992
      %v2127 = vpop.f32.mrb[0].mxu0
      %v2128 = vadd.f32 0.0, %v2127
      %v2129 = vpop.f32.mrb[0].mxu0
      %2130 = vmatprep.mubr.f32.mxu0 0.0
      %2131 = vmatmul.mubr.f32.gmra.mrb[0].mxu0 %v993
      %v2132 = vpop.f32.mrb[0].mxu0
      %v2133 = vadd.f32 0.0, %v2132
      %v2134 = vpop.f32.mrb[0].mxu0
      %2135 = vmatprep.mubr.f32.mxu0 0.0
      %2136 = vmatmul.mubr.f32.gmra.mrb[0].mxu0 %v994
      %v2137 = vpop.f32.mrb[0].mxu0
      %v2138 = vadd.f32 0.0, %v2137
      %v2139 = vpop.f32.mrb[0].mxu0
      %2140 = vmatprep.mubr.f32.mxu0 0.0
      %2141 = vmatmul.mubr.f32.gmra.mrb[0].mxu0 %v995
      %v2142 = vpop.f32.mrb[0].mxu0
      %v2143 = vadd.f32 0.0, %v2142
      %v2144 = vpop.f32.mrb[0].mxu0
      %2145 = vmatprep.mubr.f32.mxu0 0.0
      %2146 = vmatmul.mubr.f32.gmra.mrb[0].mxu0 %v996
      %v2147 = vpop.f32.mrb[0].mxu0
      %v2148 = vadd.f32 0.0, %v2147
      %v2149 = vpop.f32.mrb[0].mxu0
      %2150 = vdwg.mxu0
      %2151 = vmatprep.subr.mxu0 0.0
      %2152 = vmatpush1.msra.mxu0 %v147
      %2153 = vmatprep.subr.mxu0 0.0
      %2154 = vmatpush1.msra.mxu0 %v148
      %2155 = vmatprep.subr.mxu0 0.0
      %2156 = vmatpush1.msra.mxu0 %v149
      %2157 = vmatprep.subr.mxu0 0.0
      %2158 = vmatpush1.msra.mxu0 %v150
      %2159 = vmatprep.subr.mxu0 0.0
      %2160 = vmatpush1.msra.mxu0 %v151
      %2161 = vmatprep.subr.mxu0 0.0
      %2162 = vmatpush1.msra.mxu0 %v152
      %2163 = vmatprep.subr.mxu0 0.0
      %2164 = vmatpush1.msra.mxu0 %v153
      %2165 = vmatprep.subr.mxu0 0.0
      %2166 = vmatpush1.msra.mxu0 %v154
      %2167 = vmatprep.subr.mxu0 0.0
      %2168 = vmatpush1.msra.mxu0 %v155
      %2169 = vmatprep.subr.mxu0 0.0
      %2170 = vmatpush1.msra.mxu0 %v156
      %2171 = vmatprep.subr.mxu0 0.0
      %2172 = vmatpush1.msra.mxu0 %v157
      %2173 = vmatprep.subr.mxu0 0.0
      %2174 = vmatpush1.msra.mxu0 %v158
      %2175 = vmatprep.subr.mxu0 0.0
      %2176 = vmatpush1.msra.mxu0 %v159
      %2177 = vmatprep.subr.mxu0 0.0
      %2178 = vmatpush1.msra.mxu0 %v160
      %2179 = vmatprep.subr.mxu0 0.0
      %2180 = vmatpush1.msra.mxu0 %v161
      %2181 = vmatprep.subr.mxu0 0.0
      %2182 = vmatpush1.msra.mxu0 %v162
      %2183 = vmatprep.subr.mxu0 0.0
      %2184 = vmatpush1.msra.mxu0 0.0
      %2185 = vmatprep.subr.mxu0 0.0
      %2186 = vmatpush1.msra.mxu0 0.0
      %2187 = vmatprep.subr.mxu0 0.0
      %2188 = vmatpush1.msra.mxu0 0.0
      %2189 = vmatprep.subr.mxu0 0.0
      %2190 = vmatpush1.msra.mxu0 0.0
      %2191 = vmatprep.subr.mxu0 0.0
      %2192 = vmatpush1.msra.mxu0 0.0
      %2193 = vmatprep.subr.mxu0 0.0
      %2194 = vmatpush1.msra.mxu0 0.0
      %2195 = vmatprep.subr.mxu0 0.0
      %2196 = vmatpush1.msra.mxu0 0.0
      %2197 = vmatprep.subr.mxu0 0.0
      %2198 = vmatpush1.msra.mxu0 0.0
      %2199 = vmatprep.subr.mxu0 0.0
      %2200 = vmatpush1.msra.mxu0 0.0
      %2201 = vmatprep.subr.mxu0 0.0
      %2202 = vmatpush1.msra.mxu0 0.0
      %2203 = vmatprep.subr.mxu0 0.0
      %2204 = vmatpush1.msra.mxu0 0.0
      %2205 = vmatprep.subr.mxu0 0.0
      %2206 = vmatpush1.msra.mxu0 0.0
      %2207 = vmatprep.subr.mxu0 0.0
      %2208 = vmatpush1.msra.mxu0 0.0
      %2209 = vmatprep.subr.mxu0 0.0
      %2210 = vmatpush1.msra.mxu0 0.0
      %2211 = vmatprep.subr.mxu0 0.0
      %2212 = vmatpush1.msra.mxu0 0.0
      %2213 = vmatprep.subr.mxu0 0.0
      %2214 = vmatpush1.msra.mxu0 0.0
      %2215 = vmatprep.mubr.f32.mxu0 0.0
      %2216 = vmatmul.mubr.f32.gmra.mrb[0].mxu0 %v1317
      %v2217 = vpop.f32.mrb[0].mxu0
      %v2218 = vadd.f32 0.0, %v2217
      %v2219 = vpop.f32.mrb[0].mxu0
      %2220 = vmatprep.mubr.f32.mxu0 0.0
      %2221 = vmatmul.mubr.f32.gmra.mrb[0].mxu0 %v1318
      %v2222 = vpop.f32.mrb[0].mxu0
      %v2223 = vadd.f32 0.0, %v2222
      %v2224 = vpop.f32.mrb[0].mxu0
      %2225 = vmatprep.mubr.f32.mxu0 0.0
      %2226 = vmatmul.mubr.f32.gmra.mrb[0].mxu0 %v1319
      %v2227 = vpop.f32.mrb[0].mxu0
      %v2228 = vadd.f32 0.0, %v2227
      %v2229 = vpop.f32.mrb[0].mxu0
      %2230 = vmatprep.mubr.f32.mxu0 0.0
      %2231 = vmatmul.mubr.f32.gmra.mrb[0].mxu0 %v1320
      %v2232 = vpop.f32.mrb[0].mxu0
      %v2233 = vadd.f32 0.0, %v2232
      %v2234 = vpop.f32.mrb[0].mxu0
      %2235 = vmatprep.mubr.f32.mxu0 0.0
      %2236 = vmatmul.mubr.f32.gmra.mrb[0].mxu0 %v1321
      %v2237 = vpop.f32.mrb[0].mxu0
      %v2238 = vadd.f32 0.0, %v2237
      %v2239 = vpop.f32.mrb[0].mxu0
      %2240 = vmatprep.mubr.f32.mxu0 0.0
      %2241 = vmatmul.mubr.f32.gmra.mrb[0].mxu0 %v1322
      %v2242 = vpop.f32.mrb[0].mxu0
      %v2243 = vadd.f32 0.0, %v2242
      %v2244 = vpop.f32.mrb[0].mxu0
      %2245 = vmatprep.mubr.f32.mxu0 0.0
      %2246 = vmatmul.mubr.f32.gmra.mrb[0].mxu0 %v1323
      %v2247 = vpop.f32.mrb[0].mxu0
      %v2248 = vadd.f32 0.0, %v2247
      %v2249 = vpop.f32.mrb[0].mxu0
      %2250 = vmatprep.mubr.f32.mxu0 0.0
      %2251 = vmatmul.mubr.f32.gmra.mrb[0].mxu0 %v1324
      %v2252 = vpop.f32.mrb[0].mxu0
      %v2253 = vadd.f32 0.0, %v2252
      %v2254 = vpop.f32.mrb[0].mxu0
      %2255 = vmatprep.mubr.f32.mxu0 0.0
      %2256 = vmatmul.mubr.f32.gmra.mrb[0].mxu0 %v1325
      %v2257 = vpop.f32.mrb[0].mxu0
      %v2258 = vadd.f32 0.0, %v2257
      %v2259 = vpop.f32.mrb[0].mxu0
      %2260 = vmatprep.mubr.f32.mxu0 0.0
      %2261 = vmatmul.mubr.f32.gmra.mrb[0].mxu0 %v1326
      %v2262 = vpop.f32.mrb[0].mxu0
      %v2263 = vadd.f32 0.0, %v2262
      %v2264 = vpop.f32.mrb[0].mxu0
      %2265 = vmatprep.mubr.f32.mxu0 0.0
      %2266 = vmatmul.mubr.f32.gmra.mrb[0].mxu0 %v1327
      %v2267 = vpop.f32.mrb[0].mxu0
      %v2268 = vadd.f32 0.0, %v2267
      %v2269 = vpop.f32.mrb[0].mxu0
      %2270 = vmatprep.mubr.f32.mxu0 0.0
      %2271 = vmatmul.mubr.f32.gmra.mrb[0].mxu0 %v1328
      %v2272 = vpop.f32.mrb[0].mxu0
      %v2273 = vadd.f32 0.0, %v2272
      %v2274 = vpop.f32.mrb[0].mxu0
      %2275 = vmatprep.mubr.f32.mxu0 0.0
      %2276 = vmatmul.mubr.f32.gmra.mrb[0].mxu0 %v1329
      %v2277 = vpop.f32.mrb[0].mxu0
      %v2278 = vadd.f32 0.0, %v2277
      %v2279 = vpop.f32.mrb[0].mxu0
      %2280 = vmatprep.mubr.f32.mxu0 0.0
      %2281 = vmatmul.mubr.f32.gmra.mrb[0].mxu0 %v1330
      %v2282 = vpop.f32.mrb[0].mxu0
      %v2283 = vadd.f32 0.0, %v2282
      %v2284 = vpop.f32.mrb[0].mxu0
      %2285 = vmatprep.mubr.f32.mxu0 0.0
      %2286 = vmatmul.mubr.f32.gmra.mrb[0].mxu0 %v1331
      %v2287 = vpop.f32.mrb[0].mxu0
      %v2288 = vadd.f32 0.0, %v2287
      %v2289 = vpop.f32.mrb[0].mxu0
      %2290 = vmatprep.mubr.f32.mxu0 0.0
      %2291 = vmatmul.mubr.f32.gmra.mrb[0].mxu0 %v1332
      %v2292 = vpop.f32.mrb[0].mxu0
      %v2293 = vadd.f32 0.0, %v2292
      %v2294 = vpop.f32.mrb[0].mxu0
      %2295 = vmatprep.mubr.f32.mxu0 0.0
      %2296 = vmatmul.mubr.f32.gmra.mrb[0].mxu0 %v1333
      %v2297 = vpop.f32.mrb[0].mxu0
      %v2298 = vadd.f32 0.0, %v2297
      %v2299 = vpop.f32.mrb[0].mxu0
      %2300 = vmatprep.mubr.f32.mxu0 0.0
      %2301 = vmatmul.mubr.f32.gmra.mrb[0].mxu0 %v1334
      %v2302 = vpop.f32.mrb[0].mxu0
      %v2303 = vadd.f32 0.0, %v2302
      %v2304 = vpop.f32.mrb[0].mxu0
      %2305 = vmatprep.mubr.f32.mxu0 0.0
      %2306 = vmatmul.mubr.f32.gmra.mrb[0].mxu0 %v1335
      %v2307 = vpop.f32.mrb[0].mxu0
      %v2308 = vadd.f32 0.0, %v2307
      %v2309 = vpop.f32.mrb[0].mxu0
      %2310 = vmatprep.mubr.f32.mxu0 0.0
      %2311 = vmatmul.mubr.f32.gmra.mrb[0].mxu0 %v1336
      %v2312 = vpop.f32.mrb[0].mxu0
      %v2313 = vadd.f32 0.0, %v2312
      %v2314 = vpop.f32.mrb[0].mxu0
      %2315 = vmatprep.mubr.f32.mxu0 0.0
      %2316 = vmatmul.mubr.f32.gmra.mrb[0].mxu0 %v1337
      %v2317 = vpop.f32.mrb[0].mxu0
      %v2318 = vadd.f32 0.0, %v2317
      %v2319 = vpop.f32.mrb[0].mxu0
      %2320 = vmatprep.mubr.f32.mxu0 0.0
      %2321 = vmatmul.mubr.f32.gmra.mrb[0].mxu0 %v1338
      %v2322 = vpop.f32.mrb[0].mxu0
      %v2323 = vadd.f32 0.0, %v2322
      %v2324 = vpop.f32.mrb[0].mxu0
      %2325 = vmatprep.mubr.f32.mxu0 0.0
      %2326 = vmatmul.mubr.f32.gmra.mrb[0].mxu0 %v1339
      %v2327 = vpop.f32.mrb[0].mxu0
      %v2328 = vadd.f32 0.0, %v2327
      %v2329 = vpop.f32.mrb[0].mxu0
      %2330 = vmatprep.mubr.f32.mxu0 0.0
      %2331 = vmatmul.mubr.f32.gmra.mrb[0].mxu0 %v1340
      %v2332 = vpop.f32.mrb[0].mxu0
      %v2333 = vadd.f32 0.0, %v2332
      %v2334 = vpop.f32.mrb[0].mxu0
      %2335 = vmatprep.mubr.f32.mxu0 0.0
      %2336 = vmatmul.mubr.f32.gmra.mrb[0].mxu0 %v1341
      %v2337 = vpop.f32.mrb[0].mxu0
      %v2338 = vadd.f32 0.0, %v2337
      %v2339 = vpop.f32.mrb[0].mxu0
      %2340 = vmatprep.mubr.f32.mxu0 0.0
      %2341 = vmatmul.mubr.f32.gmra.mrb[0].mxu0 %v1342
      %v2342 = vpop.f32.mrb[0].mxu0
      %v2343 = vadd.f32 0.0, %v2342
      %v2344 = vpop.f32.mrb[0].mxu0
      %2345 = vmatprep.mubr.f32.mxu0 0.0
      %2346 = vmatmul.mubr.f32.gmra.mrb[0].mxu0 %v1343
      %v2347 = vpop.f32.mrb[0].mxu0
      %v2348 = vadd.f32 0.0, %v2347
      %v2349 = vpop.f32.mrb[0].mxu0
      %2350 = vmatprep.mubr.f32.mxu0 0.0
      %2351 = vmatmul.mubr.f32.gmra.mrb[0].mxu0 %v1344
      %v2352 = vpop.f32.mrb[0].mxu0
      %v2353 = vadd.f32 0.0, %v2352
      %v2354 = vpop.f32.mrb[0].mxu0
      %2355 = vmatprep.mubr.f32.mxu0 0.0
      %2356 = vmatmul.mubr.f32.gmra.mrb[0].mxu0 %v1345
      %v2357 = vpop.f32.mrb[0].mxu0
      %v2358 = vadd.f32 0.0, %v2357
      %v2359 = vpop.f32.mrb[0].mxu0
      %2360 = vmatprep.mubr.f32.mxu0 0.0
      %2361 = vmatmul.mubr.f32.gmra.mrb[0].mxu0 %v1346
      %v2362 = vpop.f32.mrb[0].mxu0
      %v2363 = vadd.f32 0.0, %v2362
      %v2364 = vpop.f32.mrb[0].mxu0
      %2365 = vmatprep.mubr.f32.mxu0 0.0
      %2366 = vmatmul.mubr.f32.gmra.mrb[0].mxu0 %v1347
      %v2367 = vpop.f32.mrb[0].mxu0
      %v2368 = vadd.f32 0.0, %v2367
      %v2369 = vpop.f32.mrb[0].mxu0
      %2370 = vmatprep.mubr.f32.mxu0 0.0
      %2371 = vmatmul.mubr.f32.gmra.mrb[0].mxu0 %v1348
      %v2372 = vpop.f32.mrb[0].mxu0
      %v2373 = vadd.f32 0.0, %v2372
      %v2374 = vpop.f32.mrb[0].mxu0
      %2375 = vmatprep.mubr.f32.mxu0 0.0
      %2376 = vmatmul.mubr.f32.gmra.mrb[0].mxu0 %v1349
      %v2377 = vpop.f32.mrb[0].mxu0
      %v2378 = vadd.f32 0.0, %v2377
      %v2379 = vpop.f32.mrb[0].mxu0
      %2380 = vmatprep.mubr.f32.mxu0 0.0
      %2381 = vmatmul.mubr.f32.gmra.mrb[0].mxu0 %v1350
      %v2382 = vpop.f32.mrb[0].mxu0
      %v2383 = vadd.f32 0.0, %v2382
      %v2384 = vpop.f32.mrb[0].mxu0
      %2385 = vmatprep.mubr.f32.mxu0 0.0
      %2386 = vmatmul.mubr.f32.gmra.mrb[0].mxu0 %v1351
      %v2387 = vpop.f32.mrb[0].mxu0
      %v2388 = vadd.f32 0.0, %v2387
      %v2389 = vpop.f32.mrb[0].mxu0
      %2390 = vmatprep.mubr.f32.mxu0 0.0
      %2391 = vmatmul.mubr.f32.gmra.mrb[0].mxu0 %v1352
      %v2392 = vpop.f32.mrb[0].mxu0
      %v2393 = vadd.f32 0.0, %v2392
      %v2394 = vpop.f32.mrb[0].mxu0
      %2395 = vmatprep.mubr.f32.mxu0 0.0
      %2396 = vmatmul.mubr.f32.gmra.mrb[0].mxu0 %v1353
      %v2397 = vpop.f32.mrb[0].mxu0
      %v2398 = vadd.f32 0.0, %v2397
      %v2399 = vpop.f32.mrb[0].mxu0
      %2400 = vmatprep.mubr.f32.mxu0 0.0
      %2401 = vmatmul.mubr.f32.gmra.mrb[0].mxu0 %v1354
      %v2402 = vpop.f32.mrb[0].mxu0
      %v2403 = vadd.f32 0.0, %v2402
      %v2404 = vpop.f32.mrb[0].mxu0
      %2405 = vmatprep.mubr.f32.mxu0 0.0
      %2406 = vmatmul.mubr.f32.gmra.mrb[0].mxu0 %v1355
      %v2407 = vpop.f32.mrb[0].mxu0
      %v2408 = vadd.f32 0.0, %v2407
      %v2409 = vpop.f32.mrb[0].mxu0
      %2410 = vmatprep.mubr.f32.mxu0 0.0
      %2411 = vmatmul.mubr.f32.gmra.mrb[0].mxu0 %v1356
      %v2412 = vpop.f32.mrb[0].mxu0
      %v2413 = vadd.f32 0.0, %v2412
      %v2414 = vpop.f32.mrb[0].mxu0
      %2415 = vmatprep.mubr.f32.mxu0 0.0
      %2416 = vmatmul.mubr.f32.gmra.mrb[0].mxu0 %v1357
      %v2417 = vpop.f32.mrb[0].mxu0
      %v2418 = vadd.f32 0.0, %v2417
      %v2419 = vpop.f32.mrb[0].mxu0
      %2420 = vmatprep.mubr.f32.mxu0 0.0
      %2421 = vmatmul.mubr.f32.gmra.mrb[0].mxu0 %v1358
      %v2422 = vpop.f32.mrb[0].mxu0
      %v2423 = vadd.f32 0.0, %v2422
      %v2424 = vpop.f32.mrb[0].mxu0
      %2425 = vmatprep.mubr.f32.mxu0 0.0
      %2426 = vmatmul.mubr.f32.gmra.mrb[0].mxu0 %v1359
      %v2427 = vpop.f32.mrb[0].mxu0
      %v2428 = vadd.f32 0.0, %v2427
      %v2429 = vpop.f32.mrb[0].mxu0
      %2430 = vmatprep.mubr.f32.mxu0 0.0
      %2431 = vmatmul.mubr.f32.gmra.mrb[0].mxu0 %v1360
      %v2432 = vpop.f32.mrb[0].mxu0
      %v2433 = vadd.f32 0.0, %v2432
      %v2434 = vpop.f32.mrb[0].mxu0
      %2435 = vmatprep.mubr.f32.mxu0 0.0
      %2436 = vmatmul.mubr.f32.gmra.mrb[0].mxu0 %v1361
      %v2437 = vpop.f32.mrb[0].mxu0
      %v2438 = vadd.f32 0.0, %v2437
      %v2439 = vpop.f32.mrb[0].mxu0
      %2440 = vmatprep.mubr.f32.mxu0 0.0
      %2441 = vmatmul.mubr.f32.gmra.mrb[0].mxu0 %v1362
      %v2442 = vpop.f32.mrb[0].mxu0
      %v2443 = vadd.f32 0.0, %v2442
      %v2444 = vpop.f32.mrb[0].mxu0
      %2445 = vmatprep.mubr.f32.mxu0 0.0
      %2446 = vmatmul.mubr.f32.gmra.mrb[0].mxu0 %v1363
      %v2447 = vpop.f32.mrb[0].mxu0
      %v2448 = vadd.f32 0.0, %v2447
      %v2449 = vpop.f32.mrb[0].mxu0
      %2450 = vmatprep.mubr.f32.mxu0 0.0
      %2451 = vmatmul.mubr.f32.gmra.mrb[0].mxu0 %v1364
      %v2452 = vpop.f32.mrb[0].mxu0
      %v2453 = vadd.f32 0.0, %v2452
      %v2454 = vpop.f32.mrb[0].mxu0
      %2455 = vmatprep.mubr.f32.mxu0 0.0
      %2456 = vmatmul.mubr.f32.gmra.mrb[0].mxu0 %v1365
      %v2457 = vpop.f32.mrb[0].mxu0
      %v2458 = vadd.f32 0.0, %v2457
      %v2459 = vpop.f32.mrb[0].mxu0
      %2460 = vmatprep.mubr.f32.mxu0 0.0
      %2461 = vmatmul.mubr.f32.gmra.mrb[0].mxu0 %v1366
      %v2462 = vpop.f32.mrb[0].mxu0
      %v2463 = vadd.f32 0.0, %v2462
      %v2464 = vpop.f32.mrb[0].mxu0
      %2465 = vmatprep.mubr.f32.mxu0 0.0
      %2466 = vmatmul.mubr.f32.gmra.mrb[0].mxu0 %v1367
      %v2467 = vpop.f32.mrb[0].mxu0
      %v2468 = vadd.f32 0.0, %v2467
      %v2469 = vpop.f32.mrb[0].mxu0
      %2470 = vmatprep.mubr.f32.mxu0 0.0
      %2471 = vmatmul.mubr.f32.gmra.mrb[0].mxu0 %v1368
      %v2472 = vpop.f32.mrb[0].mxu0
      %v2473 = vadd.f32 0.0, %v2472
      %v2474 = vpop.f32.mrb[0].mxu0
      %2475 = vmatprep.mubr.f32.mxu0 0.0
      %2476 = vmatmul.mubr.f32.gmra.mrb[0].mxu0 %v1369
      %v2477 = vpop.f32.mrb[0].mxu0
      %v2478 = vadd.f32 0.0, %v2477
      %v2479 = vpop.f32.mrb[0].mxu0
      %2480 = vmatprep.mubr.f32.mxu0 0.0
      %2481 = vmatmul.mubr.f32.gmra.mrb[0].mxu0 %v1370
      %v2482 = vpop.f32.mrb[0].mxu0
      %v2483 = vadd.f32 0.0, %v2482
      %v2484 = vpop.f32.mrb[0].mxu0
      %2485 = vmatprep.mubr.f32.mxu0 0.0
      %2486 = vmatmul.mubr.f32.gmra.mrb[0].mxu0 %v1371
      %v2487 = vpop.f32.mrb[0].mxu0
      %v2488 = vadd.f32 0.0, %v2487
      %v2489 = vpop.f32.mrb[0].mxu0
      %2490 = vmatprep.mubr.f32.mxu0 0.0
      %2491 = vmatmul.mubr.f32.gmra.mrb[0].mxu0 %v1372
      %v2492 = vpop.f32.mrb[0].mxu0
      %v2493 = vadd.f32 0.0, %v2492
      %v2494 = vpop.f32.mrb[0].mxu0
      %2495 = vmatprep.mubr.f32.mxu0 0.0
      %2496 = vmatmul.mubr.f32.gmra.mrb[0].mxu0 %v1373
      %v2497 = vpop.f32.mrb[0].mxu0
      %v2498 = vadd.f32 0.0, %v2497
      %v2499 = vpop.f32.mrb[0].mxu0
      %2500 = vmatprep.mubr.f32.mxu0 0.0
      %2501 = vmatmul.mubr.f32.gmra.mrb[0].mxu0 %v1374
      %v2502 = vpop.f32.mrb[0].mxu0
      %v2503 = vadd.f32 0.0, %v2502
      %v2504 = vpop.f32.mrb[0].mxu0
      %2505 = vmatprep.mubr.f32.mxu0 0.0
      %2506 = vmatmul.mubr.f32.gmra.mrb[0].mxu0 %v1375
      %v2507 = vpop.f32.mrb[0].mxu0
      %v2508 = vadd.f32 0.0, %v2507
      %v2509 = vpop.f32.mrb[0].mxu0
      %2510 = vmatprep.mubr.f32.mxu0 0.0
      %2511 = vmatmul.mubr.f32.gmra.mrb[0].mxu0 %v1376
      %v2512 = vpop.f32.mrb[0].mxu0
      %v2513 = vadd.f32 0.0, %v2512
      %v2514 = vpop.f32.mrb[0].mxu0
      %2515 = vmatprep.mubr.f32.mxu0 0.0
      %2516 = vmatmul.mubr.f32.gmra.mrb[0].mxu0 %v1377
      %v2517 = vpop.f32.mrb[0].mxu0
      %v2518 = vadd.f32 0.0, %v2517
      %v2519 = vpop.f32.mrb[0].mxu0
      %2520 = vmatprep.mubr.f32.mxu0 0.0
      %2521 = vmatmul.mubr.f32.gmra.mrb[0].mxu0 %v1378
      %v2522 = vpop.f32.mrb[0].mxu0
      %v2523 = vadd.f32 0.0, %v2522
      %v2524 = vpop.f32.mrb[0].mxu0
      %2525 = vmatprep.mubr.f32.mxu0 0.0
      %2526 = vmatmul.mubr.f32.gmra.mrb[0].mxu0 %v1379
      %v2527 = vpop.f32.mrb[0].mxu0
      %v2528 = vadd.f32 0.0, %v2527
      %v2529 = vpop.f32.mrb[0].mxu0
      %2530 = vmatprep.mubr.f32.mxu0 0.0
      %2531 = vmatmul.mubr.f32.gmra.mrb[0].mxu0 %v1380
      %v2532 = vpop.f32.mrb[0].mxu0
      %v2533 = vadd.f32 0.0, %v2532
      %v2534 = vpop.f32.mrb[0].mxu0
      %2535 = vdwg.mxu0
      %v2536 = vsub.f32 %v1448, %v1833
      %v2537 = vsub.f32 %v1453, %v1838
      %v2538 = vsub.f32 %v1458, %v1843
      %v2539 = vsub.f32 %v1463, %v1848
      %v2540 = vsub.f32 %v1468, %v1853
      %v2541 = vsub.f32 %v1473, %v1858
      %v2542 = vsub.f32 %v1478, %v1863
      %v2543 = vsub.f32 %v1483, %v1868
      %v2544 = vsub.f32 %v1488, %v1873
      %v2545 = vsub.f32 %v1493, %v1878
      %v2546 = vsub.f32 %v1498, %v1883
      %v2547 = vsub.f32 %v1503, %v1888
      %v2548 = vsub.f32 %v1508, %v1893
      %v2549 = vsub.f32 %v1513, %v1898
      %v2550 = vsub.f32 %v1518, %v1903
      %v2551 = vsub.f32 %v1523, %v1908
      %v2552 = vsub.f32 %v1528, %v1913
      %v2553 = vsub.f32 %v1533, %v1918
      %v2554 = vsub.f32 %v1538, %v1923
      %v2555 = vsub.f32 %v1543, %v1928
      %v2556 = vsub.f32 %v1548, %v1933
      %v2557 = vsub.f32 %v1553, %v1938
      %v2558 = vsub.f32 %v1558, %v1943
      %v2559 = vsub.f32 %v1563, %v1948
      %v2560 = vsub.f32 %v1568, %v1953
      %v2561 = vsub.f32 %v1573, %v1958
      %v2562 = vsub.f32 %v1578, %v1963
      %v2563 = vsub.f32 %v1583, %v1968
      %v2564 = vsub.f32 %v1588, %v1973
      %v2565 = vsub.f32 %v1593, %v1978
      %v2566 = vsub.f32 %v1598, %v1983
      %v2567 = vsub.f32 %v1603, %v1988
      %v2568 = vsub.f32 %v1608, %v1993
      %v2569 = vsub.f32 %v1613, %v1998
      %v2570 = vsub.f32 %v1618, %v2003
      %v2571 = vsub.f32 %v1623, %v2008
      %v2572 = vsub.f32 %v1628, %v2013
      %v2573 = vsub.f32 %v1633, %v2018
      %v2574 = vsub.f32 %v1638, %v2023
      %v2575 = vsub.f32 %v1643, %v2028
      %v2576 = vsub.f32 %v1648, %v2033
      %v2577 = vsub.f32 %v1653, %v2038
      %v2578 = vsub.f32 %v1658, %v2043
      %v2579 = vsub.f32 %v1663, %v2048
      %v2580 = vsub.f32 %v1668, %v2053
      %v2581 = vsub.f32 %v1673, %v2058
      %v2582 = vsub.f32 %v1678, %v2063
      %v2583 = vsub.f32 %v1683, %v2068
      %v2584 = vsub.f32 %v1688, %v2073
      %v2585 = vsub.f32 %v1693, %v2078
      %v2586 = vsub.f32 %v1698, %v2083
      %v2587 = vsub.f32 %v1703, %v2088
      %v2588 = vsub.f32 %v1708, %v2093
      %v2589 = vsub.f32 %v1713, %v2098
      %v2590 = vsub.f32 %v1718, %v2103
      %v2591 = vsub.f32 %v1723, %v2108
      %v2592 = vsub.f32 %v1728, %v2113
      %v2593 = vsub.f32 %v1733, %v2118
      %v2594 = vsub.f32 %v1738, %v2123
      %v2595 = vsub.f32 %v1743, %v2128
      %v2596 = vsub.f32 %v1748, %v2133
      %v2597 = vsub.f32 %v1753, %v2138
      %v2598 = vsub.f32 %v1758, %v2143
      %v2599 = vsub.f32 %v1763, %v2148
      %v2600 = vsub.f32 %v1448, %v2218
      %v2601 = vsub.f32 %v1453, %v2223
      %v2602 = vsub.f32 %v1458, %v2228
      %v2603 = vsub.f32 %v1463, %v2233
      %v2604 = vsub.f32 %v1468, %v2238
      %v2605 = vsub.f32 %v1473, %v2243
      %v2606 = vsub.f32 %v1478, %v2248
      %v2607 = vsub.f32 %v1483, %v2253
      %v2608 = vsub.f32 %v1488, %v2258
      %v2609 = vsub.f32 %v1493, %v2263
      %v2610 = vsub.f32 %v1498, %v2268
      %v2611 = vsub.f32 %v1503, %v2273
      %v2612 = vsub.f32 %v1508, %v2278
      %v2613 = vsub.f32 %v1513, %v2283
      %v2614 = vsub.f32 %v1518, %v2288
      %v2615 = vsub.f32 %v1523, %v2293
      %v2616 = vsub.f32 %v1528, %v2298
      %v2617 = vsub.f32 %v1533, %v2303
      %v2618 = vsub.f32 %v1538, %v2308
      %v2619 = vsub.f32 %v1543, %v2313
      %v2620 = vsub.f32 %v1548, %v2318
      %v2621 = vsub.f32 %v1553, %v2323
      %v2622 = vsub.f32 %v1558, %v2328
      %v2623 = vsub.f32 %v1563, %v2333
      %v2624 = vsub.f32 %v1568, %v2338
      %v2625 = vsub.f32 %v1573, %v2343
      %v2626 = vsub.f32 %v1578, %v2348
      %v2627 = vsub.f32 %v1583, %v2353
      %v2628 = vsub.f32 %v1588, %v2358
      %v2629 = vsub.f32 %v1593, %v2363
      %v2630 = vsub.f32 %v1598, %v2368
      %v2631 = vsub.f32 %v1603, %v2373
      %v2632 = vsub.f32 %v1608, %v2378
      %v2633 = vsub.f32 %v1613, %v2383
      %v2634 = vsub.f32 %v1618, %v2388
      %v2635 = vsub.f32 %v1623, %v2393
      %v2636 = vsub.f32 %v1628, %v2398
      %v2637 = vsub.f32 %v1633, %v2403
      %v2638 = vsub.f32 %v1638, %v2408
      %v2639 = vsub.f32 %v1643, %v2413
      %v2640 = vsub.f32 %v1648, %v2418
      %v2641 = vsub.f32 %v1653, %v2423
      %v2642 = vsub.f32 %v1658, %v2428
      %v2643 = vsub.f32 %v1663, %v2433
      %v2644 = vsub.f32 %v1668, %v2438
      %v2645 = vsub.f32 %v1673, %v2443
      %v2646 = vsub.f32 %v1678, %v2448
      %v2647 = vsub.f32 %v1683, %v2453
      %v2648 = vsub.f32 %v1688, %v2458
      %v2649 = vsub.f32 %v1693, %v2463
      %v2650 = vsub.f32 %v1698, %v2468
      %v2651 = vsub.f32 %v1703, %v2473
      %v2652 = vsub.f32 %v1708, %v2478
      %v2653 = vsub.f32 %v1713, %v2483
      %v2654 = vsub.f32 %v1718, %v2488
      %v2655 = vsub.f32 %v1723, %v2493
      %v2656 = vsub.f32 %v1728, %v2498
      %v2657 = vsub.f32 %v1733, %v2503
      %v2658 = vsub.f32 %v1738, %v2508
      %v2659 = vsub.f32 %v1743, %v2513
      %v2660 = vsub.f32 %v1748, %v2518
      %v2661 = vsub.f32 %v1753, %v2523
      %v2662 = vsub.f32 %v1758, %v2528
      %v2663 = vsub.f32 %v1763, %v2533
      %v2664 = vmul.f32 %v2536, %v2536
      %v2665 = vmul.f32 %v2537, %v2537
      %v2666 = vmul.f32 %v2538, %v2538
      %v2667 = vmul.f32 %v2539, %v2539
      %v2668 = vmul.f32 %v2540, %v2540
      %v2669 = vmul.f32 %v2541, %v2541
      %v2670 = vmul.f32 %v2542, %v2542
      %v2671 = vmul.f32 %v2543, %v2543
      %v2672 = vmul.f32 %v2544, %v2544
      %v2673 = vmul.f32 %v2545, %v2545
      %v2674 = vmul.f32 %v2546, %v2546
      %v2675 = vmul.f32 %v2547, %v2547
      %v2676 = vmul.f32 %v2548, %v2548
      %v2677 = vmul.f32 %v2549, %v2549
      %v2678 = vmul.f32 %v2550, %v2550
      %v2679 = vmul.f32 %v2551, %v2551
      %v2680 = vmul.f32 %v2552, %v2552
      %v2681 = vmul.f32 %v2553, %v2553
      %v2682 = vmul.f32 %v2554, %v2554
      %v2683 = vmul.f32 %v2555, %v2555
      %v2684 = vmul.f32 %v2556, %v2556
      %v2685 = vmul.f32 %v2557, %v2557
      %v2686 = vmul.f32 %v2558, %v2558
      %v2687 = vmul.f32 %v2559, %v2559
      %v2688 = vmul.f32 %v2560, %v2560
      %v2689 = vmul.f32 %v2561, %v2561
      %v2690 = vmul.f32 %v2562, %v2562
      %v2691 = vmul.f32 %v2563, %v2563
      %v2692 = vmul.f32 %v2564, %v2564
      %v2693 = vmul.f32 %v2565, %v2565
      %v2694 = vmul.f32 %v2566, %v2566
      %v2695 = vmul.f32 %v2567, %v2567
      %v2696 = vmul.f32 %v2568, %v2568
      %v2697 = vmul.f32 %v2569, %v2569
      %v2698 = vmul.f32 %v2570, %v2570
      %v2699 = vmul.f32 %v2571, %v2571
      %v2700 = vmul.f32 %v2572, %v2572
      %v2701 = vmul.f32 %v2573, %v2573
      %v2702 = vmul.f32 %v2574, %v2574
      %v2703 = vmul.f32 %v2575, %v2575
      %v2704 = vmul.f32 %v2576, %v2576
      %v2705 = vmul.f32 %v2577, %v2577
      %v2706 = vmul.f32 %v2578, %v2578
      %v2707 = vmul.f32 %v2579, %v2579
      %v2708 = vmul.f32 %v2580, %v2580
      %v2709 = vmul.f32 %v2581, %v2581
      %v2710 = vmul.f32 %v2582, %v2582
      %v2711 = vmul.f32 %v2583, %v2583
      %v2712 = vmul.f32 %v2584, %v2584
      %v2713 = vmul.f32 %v2585, %v2585
      %v2714 = vmul.f32 %v2586, %v2586
      %v2715 = vmul.f32 %v2587, %v2587
      %v2716 = vmul.f32 %v2588, %v2588
      %v2717 = vmul.f32 %v2589, %v2589
      %v2718 = vmul.f32 %v2590, %v2590
      %v2719 = vmul.f32 %v2591, %v2591
      %v2720 = vmul.f32 %v2592, %v2592
      %v2721 = vmul.f32 %v2593, %v2593
      %v2722 = vmul.f32 %v2594, %v2594
      %v2723 = vmul.f32 %v2595, %v2595
      %v2724 = vmul.f32 %v2596, %v2596
      %v2725 = vmul.f32 %v2597, %v2597
      %v2726 = vmul.f32 %v2598, %v2598
      %v2727 = vmul.f32 %v2599, %v2599
      %2728 = vadd.xlane.f32.xlu0 %v2664
      %v2729 = vpop.xlane.xlu0 %2728
      %2730 = vadd.xlane.f32.xlu0 %v2665
      %v2731 = vpop.xlane.xlu0 %2730
      %2732 = vadd.xlane.f32.xlu0 %v2666
      %v2733 = vpop.xlane.xlu0 %2732
      %2734 = vadd.xlane.f32.xlu0 %v2667
      %v2735 = vpop.xlane.xlu0 %2734
      %2736 = vadd.xlane.f32.xlu0 %v2668
      %v2737 = vpop.xlane.xlu0 %2736
      %2738 = vadd.xlane.f32.xlu0 %v2669
      %v2739 = vpop.xlane.xlu0 %2738
      %2740 = vadd.xlane.f32.xlu0 %v2670
      %v2741 = vpop.xlane.xlu0 %2740
      %2742 = vadd.xlane.f32.xlu0 %v2671
      %v2743 = vpop.xlane.xlu0 %2742
      %2744 = vadd.xlane.f32.xlu0 %v2672
      %v2745 = vpop.xlane.xlu0 %2744
      %2746 = vadd.xlane.f32.xlu0 %v2673
      %v2747 = vpop.xlane.xlu0 %2746
      %2748 = vadd.xlane.f32.xlu0 %v2674
      %v2749 = vpop.xlane.xlu0 %2748
      %2750 = vadd.xlane.f32.xlu0 %v2675
      %v2751 = vpop.xlane.xlu0 %2750
      %2752 = vadd.xlane.f32.xlu0 %v2676
      %v2753 = vpop.xlane.xlu0 %2752
      %2754 = vadd.xlane.f32.xlu0 %v2677
      %v2755 = vpop.xlane.xlu0 %2754
      %2756 = vadd.xlane.f32.xlu0 %v2678
      %v2757 = vpop.xlane.xlu0 %2756
      %2758 = vadd.xlane.f32.xlu0 %v2679
      %v2759 = vpop.xlane.xlu0 %2758
      %2760 = vadd.xlane.f32.xlu0 %v2680
      %v2761 = vpop.xlane.xlu0 %2760
      %2762 = vadd.xlane.f32.xlu0 %v2681
      %v2763 = vpop.xlane.xlu0 %2762
      %2764 = vadd.xlane.f32.xlu0 %v2682
      %v2765 = vpop.xlane.xlu0 %2764
      %2766 = vadd.xlane.f32.xlu0 %v2683
      %v2767 = vpop.xlane.xlu0 %2766
      %2768 = vadd.xlane.f32.xlu0 %v2684
      %v2769 = vpop.xlane.xlu0 %2768
      %2770 = vadd.xlane.f32.xlu0 %v2685
      %v2771 = vpop.xlane.xlu0 %2770
      %2772 = vadd.xlane.f32.xlu0 %v2686
      %v2773 = vpop.xlane.xlu0 %2772
      %2774 = vadd.xlane.f32.xlu0 %v2687
      %v2775 = vpop.xlane.xlu0 %2774
      %2776 = vadd.xlane.f32.xlu0 %v2688
      %v2777 = vpop.xlane.xlu0 %2776
      %2778 = vadd.xlane.f32.xlu0 %v2689
      %v2779 = vpop.xlane.xlu0 %2778
      %2780 = vadd.xlane.f32.xlu0 %v2690
      %v2781 = vpop.xlane.xlu0 %2780
      %2782 = vadd.xlane.f32.xlu0 %v2691
      %v2783 = vpop.xlane.xlu0 %2782
      %2784 = vadd.xlane.f32.xlu0 %v2692
      %v2785 = vpop.xlane.xlu0 %2784
      %2786 = vadd.xlane.f32.xlu0 %v2693
      %v2787 = vpop.xlane.xlu0 %2786
      %2788 = vadd.xlane.f32.xlu0 %v2694
      %v2789 = vpop.xlane.xlu0 %2788
      %2790 = vadd.xlane.f32.xlu0 %v2695
      %v2791 = vpop.xlane.xlu0 %2790
      %2792 = vadd.xlane.f32.xlu0 %v2696
      %v2793 = vpop.xlane.xlu0 %2792
      %2794 = vadd.xlane.f32.xlu0 %v2697
      %v2795 = vpop.xlane.xlu0 %2794
      %2796 = vadd.xlane.f32.xlu0 %v2698
      %v2797 = vpop.xlane.xlu0 %2796
      %2798 = vadd.xlane.f32.xlu0 %v2699
      %v2799 = vpop.xlane.xlu0 %2798
      %2800 = vadd.xlane.f32.xlu0 %v2700
      %v2801 = vpop.xlane.xlu0 %2800
      %2802 = vadd.xlane.f32.xlu0 %v2701
      %v2803 = vpop.xlane.xlu0 %2802
      %2804 = vadd.xlane.f32.xlu0 %v2702
      %v2805 = vpop.xlane.xlu0 %2804
      %2806 = vadd.xlane.f32.xlu0 %v2703
      %v2807 = vpop.xlane.xlu0 %2806
      %2808 = vadd.xlane.f32.xlu0 %v2704
      %v2809 = vpop.xlane.xlu0 %2808
      %2810 = vadd.xlane.f32.xlu0 %v2705
      %v2811 = vpop.xlane.xlu0 %2810
      %2812 = vadd.xlane.f32.xlu0 %v2706
      %v2813 = vpop.xlane.xlu0 %2812
      %2814 = vadd.xlane.f32.xlu0 %v2707
      %v2815 = vpop.xlane.xlu0 %2814
      %2816 = vadd.xlane.f32.xlu0 %v2708
      %v2817 = vpop.xlane.xlu0 %2816
      %2818 = vadd.xlane.f32.xlu0 %v2709
      %v2819 = vpop.xlane.xlu0 %2818
      %2820 = vadd.xlane.f32.xlu0 %v2710
      %v2821 = vpop.xlane.xlu0 %2820
      %2822 = vadd.xlane.f32.xlu0 %v2711
      %v2823 = vpop.xlane.xlu0 %2822
      %2824 = vadd.xlane.f32.xlu0 %v2712
      %v2825 = vpop.xlane.xlu0 %2824
      %2826 = vadd.xlane.f32.xlu0 %v2713
      %v2827 = vpop.xlane.xlu0 %2826
      %2828 = vadd.xlane.f32.xlu0 %v2714
      %v2829 = vpop.xlane.xlu0 %2828
      %2830 = vadd.xlane.f32.xlu0 %v2715
      %v2831 = vpop.xlane.xlu0 %2830
      %2832 = vadd.xlane.f32.xlu0 %v2716
      %v2833 = vpop.xlane.xlu0 %2832
      %2834 = vadd.xlane.f32.xlu0 %v2717
      %v2835 = vpop.xlane.xlu0 %2834
      %2836 = vadd.xlane.f32.xlu0 %v2718
      %v2837 = vpop.xlane.xlu0 %2836
      %2838 = vadd.xlane.f32.xlu0 %v2719
      %v2839 = vpop.xlane.xlu0 %2838
      %2840 = vadd.xlane.f32.xlu0 %v2720
      %v2841 = vpop.xlane.xlu0 %2840
      %2842 = vadd.xlane.f32.xlu0 %v2721
      %v2843 = vpop.xlane.xlu0 %2842
      %2844 = vadd.xlane.f32.xlu0 %v2722
      %v2845 = vpop.xlane.xlu0 %2844
      %2846 = vadd.xlane.f32.xlu0 %v2723
      %v2847 = vpop.xlane.xlu0 %2846
      %2848 = vadd.xlane.f32.xlu0 %v2724
      %v2849 = vpop.xlane.xlu0 %2848
      %2850 = vadd.xlane.f32.xlu0 %v2725
      %v2851 = vpop.xlane.xlu0 %2850
      %2852 = vadd.xlane.f32.xlu0 %v2726
      %v2853 = vpop.xlane.xlu0 %2852
      %2854 = vadd.xlane.f32.xlu0 %v2727
      %v2855 = vpop.xlane.xlu0 %2854
      %v2856 = vmul.f32 %v2600, %v2600
      %v2857 = vmul.f32 %v2601, %v2601
      %v2858 = vmul.f32 %v2602, %v2602
      %v2859 = vmul.f32 %v2603, %v2603
      %v2860 = vmul.f32 %v2604, %v2604
      %v2861 = vmul.f32 %v2605, %v2605
      %v2862 = vmul.f32 %v2606, %v2606
      %v2863 = vmul.f32 %v2607, %v2607
      %v2864 = vmul.f32 %v2608, %v2608
      %v2865 = vmul.f32 %v2609, %v2609
      %v2866 = vmul.f32 %v2610, %v2610
      %v2867 = vmul.f32 %v2611, %v2611
      %v2868 = vmul.f32 %v2612, %v2612
      %v2869 = vmul.f32 %v2613, %v2613
      %v2870 = vmul.f32 %v2614, %v2614
      %v2871 = vmul.f32 %v2615, %v2615
      %v2872 = vmul.f32 %v2616, %v2616
      %v2873 = vmul.f32 %v2617, %v2617
      %v2874 = vmul.f32 %v2618, %v2618
      %v2875 = vmul.f32 %v2619, %v2619
      %v2876 = vmul.f32 %v2620, %v2620
      %v2877 = vmul.f32 %v2621, %v2621
      %v2878 = vmul.f32 %v2622, %v2622
      %v2879 = vmul.f32 %v2623, %v2623
      %v2880 = vmul.f32 %v2624, %v2624
      %v2881 = vmul.f32 %v2625, %v2625
      %v2882 = vmul.f32 %v2626, %v2626
      %v2883 = vmul.f32 %v2627, %v2627
      %v2884 = vmul.f32 %v2628, %v2628
      %v2885 = vmul.f32 %v2629, %v2629
      %v2886 = vmul.f32 %v2630, %v2630
      %v2887 = vmul.f32 %v2631, %v2631
      %v2888 = vmul.f32 %v2632, %v2632
      %v2889 = vmul.f32 %v2633, %v2633
      %v2890 = vmul.f32 %v2634, %v2634
      %v2891 = vmul.f32 %v2635, %v2635
      %v2892 = vmul.f32 %v2636, %v2636
      %v2893 = vmul.f32 %v2637, %v2637
      %v2894 = vmul.f32 %v2638, %v2638
      %v2895 = vmul.f32 %v2639, %v2639
      %v2896 = vmul.f32 %v2640, %v2640
      %v2897 = vmul.f32 %v2641, %v2641
      %v2898 = vmul.f32 %v2642, %v2642
      %v2899 = vmul.f32 %v2643, %v2643
      %v2900 = vmul.f32 %v2644, %v2644
      %v2901 = vmul.f32 %v2645, %v2645
      %v2902 = vmul.f32 %v2646, %v2646
      %v2903 = vmul.f32 %v2647, %v2647
      %v2904 = vmul.f32 %v2648, %v2648
      %v2905 = vmul.f32 %v2649, %v2649
      %v2906 = vmul.f32 %v2650, %v2650
      %v2907 = vmul.f32 %v2651, %v2651
      %v2908 = vmul.f32 %v2652, %v2652
      %v2909 = vmul.f32 %v2653, %v2653
      %v2910 = vmul.f32 %v2654, %v2654
      %v2911 = vmul.f32 %v2655, %v2655
      %v2912 = vmul.f32 %v2656, %v2656
      %v2913 = vmul.f32 %v2657, %v2657
      %v2914 = vmul.f32 %v2658, %v2658
      %v2915 = vmul.f32 %v2659, %v2659
      %v2916 = vmul.f32 %v2660, %v2660
      %v2917 = vmul.f32 %v2661, %v2661
      %v2918 = vmul.f32 %v2662, %v2662
      %v2919 = vmul.f32 %v2663, %v2663
      %2920 = vadd.xlane.f32.xlu0 %v2856
      %v2921 = vpop.xlane.xlu0 %2920
      %2922 = vadd.xlane.f32.xlu0 %v2857
      %v2923 = vpop.xlane.xlu0 %2922
      %2924 = vadd.xlane.f32.xlu0 %v2858
      %v2925 = vpop.xlane.xlu0 %2924
      %2926 = vadd.xlane.f32.xlu0 %v2859
      %v2927 = vpop.xlane.xlu0 %2926
      %2928 = vadd.xlane.f32.xlu0 %v2860
      %v2929 = vpop.xlane.xlu0 %2928
      %2930 = vadd.xlane.f32.xlu0 %v2861
      %v2931 = vpop.xlane.xlu0 %2930
      %2932 = vadd.xlane.f32.xlu0 %v2862
      %v2933 = vpop.xlane.xlu0 %2932
      %2934 = vadd.xlane.f32.xlu0 %v2863
      %v2935 = vpop.xlane.xlu0 %2934
      %2936 = vadd.xlane.f32.xlu0 %v2864
      %v2937 = vpop.xlane.xlu0 %2936
      %2938 = vadd.xlane.f32.xlu0 %v2865
      %v2939 = vpop.xlane.xlu0 %2938
      %2940 = vadd.xlane.f32.xlu0 %v2866
      %v2941 = vpop.xlane.xlu0 %2940
      %2942 = vadd.xlane.f32.xlu0 %v2867
      %v2943 = vpop.xlane.xlu0 %2942
      %2944 = vadd.xlane.f32.xlu0 %v2868
      %v2945 = vpop.xlane.xlu0 %2944
      %2946 = vadd.xlane.f32.xlu0 %v2869
      %v2947 = vpop.xlane.xlu0 %2946
      %2948 = vadd.xlane.f32.xlu0 %v2870
      %v2949 = vpop.xlane.xlu0 %2948
      %2950 = vadd.xlane.f32.xlu0 %v2871
      %v2951 = vpop.xlane.xlu0 %2950
      %2952 = vadd.xlane.f32.xlu0 %v2872
      %v2953 = vpop.xlane.xlu0 %2952
      %2954 = vadd.xlane.f32.xlu0 %v2873
      %v2955 = vpop.xlane.xlu0 %2954
      %2956 = vadd.xlane.f32.xlu0 %v2874
      %v2957 = vpop.xlane.xlu0 %2956
      %2958 = vadd.xlane.f32.xlu0 %v2875
      %v2959 = vpop.xlane.xlu0 %2958
      %2960 = vadd.xlane.f32.xlu0 %v2876
      %v2961 = vpop.xlane.xlu0 %2960
      %2962 = vadd.xlane.f32.xlu0 %v2877
      %v2963 = vpop.xlane.xlu0 %2962
      %2964 = vadd.xlane.f32.xlu0 %v2878
      %v2965 = vpop.xlane.xlu0 %2964
      %2966 = vadd.xlane.f32.xlu0 %v2879
      %v2967 = vpop.xlane.xlu0 %2966
      %2968 = vadd.xlane.f32.xlu0 %v2880
      %v2969 = vpop.xlane.xlu0 %2968
      %2970 = vadd.xlane.f32.xlu0 %v2881
      %v2971 = vpop.xlane.xlu0 %2970
      %2972 = vadd.xlane.f32.xlu0 %v2882
      %v2973 = vpop.xlane.xlu0 %2972
      %2974 = vadd.xlane.f32.xlu0 %v2883
      %v2975 = vpop.xlane.xlu0 %2974
      %2976 = vadd.xlane.f32.xlu0 %v2884
      %v2977 = vpop.xlane.xlu0 %2976
      %2978 = vadd.xlane.f32.xlu0 %v2885
      %v2979 = vpop.xlane.xlu0 %2978
      %2980 = vadd.xlane.f32.xlu0 %v2886
      %v2981 = vpop.xlane.xlu0 %2980
      %2982 = vadd.xlane.f32.xlu0 %v2887
      %v2983 = vpop.xlane.xlu0 %2982
      %2984 = vadd.xlane.f32.xlu0 %v2888
      %v2985 = vpop.xlane.xlu0 %2984
      %2986 = vadd.xlane.f32.xlu0 %v2889
      %v2987 = vpop.xlane.xlu0 %2986
      %2988 = vadd.xlane.f32.xlu0 %v2890
      %v2989 = vpop.xlane.xlu0 %2988
      %2990 = vadd.xlane.f32.xlu0 %v2891
      %v2991 = vpop.xlane.xlu0 %2990
      %2992 = vadd.xlane.f32.xlu0 %v2892
      %v2993 = vpop.xlane.xlu0 %2992
      %2994 = vadd.xlane.f32.xlu0 %v2893
      %v2995 = vpop.xlane.xlu0 %2994
      %2996 = vadd.xlane.f32.xlu0 %v2894
      %v2997 = vpop.xlane.xlu0 %2996
      %2998 = vadd.xlane.f32.xlu0 %v2895
      %v2999 = vpop.xlane.xlu0 %2998
      %3000 = vadd.xlane.f32.xlu0 %v2896
      %v3001 = vpop.xlane.xlu0 %3000
      %3002 = vadd.xlane.f32.xlu0 %v2897
      %v3003 = vpop.xlane.xlu0 %3002
      %3004 = vadd.xlane.f32.xlu0 %v2898
      %v3005 = vpop.xlane.xlu0 %3004
      %3006 = vadd.xlane.f32.xlu0 %v2899
      %v3007 = vpop.xlane.xlu0 %3006
      %3008 = vadd.xlane.f32.xlu0 %v2900
      %v3009 = vpop.xlane.xlu0 %3008
      %3010 = vadd.xlane.f32.xlu0 %v2901
      %v3011 = vpop.xlane.xlu0 %3010
      %3012 = vadd.xlane.f32.xlu0 %v2902
      %v3013 = vpop.xlane.xlu0 %3012
      %3014 = vadd.xlane.f32.xlu0 %v2903
      %v3015 = vpop.xlane.xlu0 %3014
      %3016 = vadd.xlane.f32.xlu0 %v2904
      %v3017 = vpop.xlane.xlu0 %3016
      %3018 = vadd.xlane.f32.xlu0 %v2905
      %v3019 = vpop.xlane.xlu0 %3018
      %3020 = vadd.xlane.f32.xlu0 %v2906
      %v3021 = vpop.xlane.xlu0 %3020
      %3022 = vadd.xlane.f32.xlu0 %v2907
      %v3023 = vpop.xlane.xlu0 %3022
      %3024 = vadd.xlane.f32.xlu0 %v2908
      %v3025 = vpop.xlane.xlu0 %3024
      %3026 = vadd.xlane.f32.xlu0 %v2909
      %v3027 = vpop.xlane.xlu0 %3026
      %3028 = vadd.xlane.f32.xlu0 %v2910
      %v3029 = vpop.xlane.xlu0 %3028
      %3030 = vadd.xlane.f32.xlu0 %v2911
      %v3031 = vpop.xlane.xlu0 %3030
      %3032 = vadd.xlane.f32.xlu0 %v2912
      %v3033 = vpop.xlane.xlu0 %3032
      %3034 = vadd.xlane.f32.xlu0 %v2913
      %v3035 = vpop.xlane.xlu0 %3034
      %3036 = vadd.xlane.f32.xlu0 %v2914
      %v3037 = vpop.xlane.xlu0 %3036
      %3038 = vadd.xlane.f32.xlu0 %v2915
      %v3039 = vpop.xlane.xlu0 %3038
      %3040 = vadd.xlane.f32.xlu0 %v2916
      %v3041 = vpop.xlane.xlu0 %3040
      %3042 = vadd.xlane.f32.xlu0 %v2917
      %v3043 = vpop.xlane.xlu0 %3042
      %3044 = vadd.xlane.f32.xlu0 %v2918
      %v3045 = vpop.xlane.xlu0 %3044
      %3046 = vadd.xlane.f32.xlu0 %v2919
      %v3047 = vpop.xlane.xlu0 %3046
      %vm3048 = vcmask 7168
      %v3049 = vsel %vm3048, %v2729, %v2921
      %v3050 = vsel %vm3048, %v2731, %v2923
      %v3051 = vsel %vm3048, %v2733, %v2925
      %v3052 = vsel %vm3048, %v2735, %v2927
      %v3053 = vsel %vm3048, %v2737, %v2929
      %v3054 = vsel %vm3048, %v2739, %v2931
      %v3055 = vsel %vm3048, %v2741, %v2933
      %v3056 = vsel %vm3048, %v2743, %v2935
      %v3057 = vsel %vm3048, %v2745, %v2937
      %v3058 = vsel %vm3048, %v2747, %v2939
      %v3059 = vsel %vm3048, %v2749, %v2941
      %v3060 = vsel %vm3048, %v2751, %v2943
      %v3061 = vsel %vm3048, %v2753, %v2945
      %v3062 = vsel %vm3048, %v2755, %v2947
      %v3063 = vsel %vm3048, %v2757, %v2949
      %v3064 = vsel %vm3048, %v2759, %v2951
      %v3065 = vsel %vm3048, %v2761, %v2953
      %v3066 = vsel %vm3048, %v2763, %v2955
      %v3067 = vsel %vm3048, %v2765, %v2957
      %v3068 = vsel %vm3048, %v2767, %v2959
      %v3069 = vsel %vm3048, %v2769, %v2961
      %v3070 = vsel %vm3048, %v2771, %v2963
      %v3071 = vsel %vm3048, %v2773, %v2965
      %v3072 = vsel %vm3048, %v2775, %v2967
      %v3073 = vsel %vm3048, %v2777, %v2969
      %v3074 = vsel %vm3048, %v2779, %v2971
      %v3075 = vsel %vm3048, %v2781, %v2973
      %v3076 = vsel %vm3048, %v2783, %v2975
      %v3077 = vsel %vm3048, %v2785, %v2977
      %v3078 = vsel %vm3048, %v2787, %v2979
      %v3079 = vsel %vm3048, %v2789, %v2981
      %v3080 = vsel %vm3048, %v2791, %v2983
      %v3081 = vsel %vm3048, %v2793, %v2985
      %v3082 = vsel %vm3048, %v2795, %v2987
      %v3083 = vsel %vm3048, %v2797, %v2989
      %v3084 = vsel %vm3048, %v2799, %v2991
      %v3085 = vsel %vm3048, %v2801, %v2993
      %v3086 = vsel %vm3048, %v2803, %v2995
      %v3087 = vsel %vm3048, %v2805, %v2997
      %v3088 = vsel %vm3048, %v2807, %v2999
      %v3089 = vsel %vm3048, %v2809, %v3001
      %v3090 = vsel %vm3048, %v2811, %v3003
      %v3091 = vsel %vm3048, %v2813, %v3005
      %v3092 = vsel %vm3048, %v2815, %v3007
      %v3093 = vsel %vm3048, %v2817, %v3009
      %v3094 = vsel %vm3048, %v2819, %v3011
      %v3095 = vsel %vm3048, %v2821, %v3013
      %v3096 = vsel %vm3048, %v2823, %v3015
      %v3097 = vsel %vm3048, %v2825, %v3017
      %v3098 = vsel %vm3048, %v2827, %v3019
      %v3099 = vsel %vm3048, %v2829, %v3021
      %v3100 = vsel %vm3048, %v2831, %v3023
      %v3101 = vsel %vm3048, %v2833, %v3025
      %v3102 = vsel %vm3048, %v2835, %v3027
      %v3103 = vsel %vm3048, %v2837, %v3029
      %v3104 = vsel %vm3048, %v2839, %v3031
      %v3105 = vsel %vm3048, %v2841, %v3033
      %v3106 = vsel %vm3048, %v2843, %v3035
      %v3107 = vsel %vm3048, %v2845, %v3037
      %v3108 = vsel %vm3048, %v2847, %v3039
      %v3109 = vsel %vm3048, %v2849, %v3041
      %v3110 = vsel %vm3048, %v2851, %v3043
      %v3111 = vsel %vm3048, %v2853, %v3045
      %v3112 = vsel %vm3048, %v2855, %v3047
      %v3113 = vrsqrt.pop %v3049
      %v3114 = vmul.f32 %v3049, %v3113
      %vm3115 = vcmp.eq.f32.partialorder %v3049, inf
      %v3116 = vsel %vm3115, %v3049, %v3114
      %vm3117 = vcmp.eq.f32.partialorder %v3049, 0.0
      %v3118 = vand.u32 %v3049, 2147483648
      %v3119 = vsel %vm3117, %v3118, %v3116
      %v3120 = vrsqrt.pop %v3050
      %v3121 = vmul.f32 %v3050, %v3120
      %vm3122 = vcmp.eq.f32.partialorder %v3050, inf
      %v3123 = vsel %vm3122, %v3050, %v3121
      %vm3124 = vcmp.eq.f32.partialorder %v3050, 0.0
      %v3125 = vand.u32 %v3050, 2147483648
      %v3126 = vsel %vm3124, %v3125, %v3123
      %v3127 = vrsqrt.pop %v3051
      %v3128 = vmul.f32 %v3051, %v3127
      %vm3129 = vcmp.eq.f32.partialorder %v3051, inf
      %v3130 = vsel %vm3129, %v3051, %v3128
      %vm3131 = vcmp.eq.f32.partialorder %v3051, 0.0
      %v3132 = vand.u32 %v3051, 2147483648
      %v3133 = vsel %vm3131, %v3132, %v3130
      %v3134 = vrsqrt.pop %v3052
      %v3135 = vmul.f32 %v3052, %v3134
      %vm3136 = vcmp.eq.f32.partialorder %v3052, inf
      %v3137 = vsel %vm3136, %v3052, %v3135
      %vm3138 = vcmp.eq.f32.partialorder %v3052, 0.0
      %v3139 = vand.u32 %v3052, 2147483648
      %v3140 = vsel %vm3138, %v3139, %v3137
      %v3141 = vrsqrt.pop %v3053
      %v3142 = vmul.f32 %v3053, %v3141
      %vm3143 = vcmp.eq.f32.partialorder %v3053, inf
      %v3144 = vsel %vm3143, %v3053, %v3142
      %vm3145 = vcmp.eq.f32.partialorder %v3053, 0.0
      %v3146 = vand.u32 %v3053, 2147483648
      %v3147 = vsel %vm3145, %v3146, %v3144
      %v3148 = vrsqrt.pop %v3054
      %v3149 = vmul.f32 %v3054, %v3148
      %vm3150 = vcmp.eq.f32.partialorder %v3054, inf
      %v3151 = vsel %vm3150, %v3054, %v3149
      %vm3152 = vcmp.eq.f32.partialorder %v3054, 0.0
      %v3153 = vand.u32 %v3054, 2147483648
      %v3154 = vsel %vm3152, %v3153, %v3151
      %v3155 = vrsqrt.pop %v3055
      %v3156 = vmul.f32 %v3055, %v3155
      %vm3157 = vcmp.eq.f32.partialorder %v3055, inf
      %v3158 = vsel %vm3157, %v3055, %v3156
      %vm3159 = vcmp.eq.f32.partialorder %v3055, 0.0
      %v3160 = vand.u32 %v3055, 2147483648
      %v3161 = vsel %vm3159, %v3160, %v3158
      %v3162 = vrsqrt.pop %v3056
      %v3163 = vmul.f32 %v3056, %v3162
      %vm3164 = vcmp.eq.f32.partialorder %v3056, inf
      %v3165 = vsel %vm3164, %v3056, %v3163
      %vm3166 = vcmp.eq.f32.partialorder %v3056, 0.0
      %v3167 = vand.u32 %v3056, 2147483648
      %v3168 = vsel %vm3166, %v3167, %v3165
      %v3169 = vrsqrt.pop %v3057
      %v3170 = vmul.f32 %v3057, %v3169
      %vm3171 = vcmp.eq.f32.partialorder %v3057, inf
      %v3172 = vsel %vm3171, %v3057, %v3170
      %vm3173 = vcmp.eq.f32.partialorder %v3057, 0.0
      %v3174 = vand.u32 %v3057, 2147483648
      %v3175 = vsel %vm3173, %v3174, %v3172
      %v3176 = vrsqrt.pop %v3058
      %v3177 = vmul.f32 %v3058, %v3176
      %vm3178 = vcmp.eq.f32.partialorder %v3058, inf
      %v3179 = vsel %vm3178, %v3058, %v3177
      %vm3180 = vcmp.eq.f32.partialorder %v3058, 0.0
      %v3181 = vand.u32 %v3058, 2147483648
      %v3182 = vsel %vm3180, %v3181, %v3179
      %v3183 = vrsqrt.pop %v3059
      %v3184 = vmul.f32 %v3059, %v3183
      %vm3185 = vcmp.eq.f32.partialorder %v3059, inf
      %v3186 = vsel %vm3185, %v3059, %v3184
      %vm3187 = vcmp.eq.f32.partialorder %v3059, 0.0
      %v3188 = vand.u32 %v3059, 2147483648
      %v3189 = vsel %vm3187, %v3188, %v3186
      %v3190 = vrsqrt.pop %v3060
      %v3191 = vmul.f32 %v3060, %v3190
      %vm3192 = vcmp.eq.f32.partialorder %v3060, inf
      %v3193 = vsel %vm3192, %v3060, %v3191
      %vm3194 = vcmp.eq.f32.partialorder %v3060, 0.0
      %v3195 = vand.u32 %v3060, 2147483648
      %v3196 = vsel %vm3194, %v3195, %v3193
      %v3197 = vrsqrt.pop %v3061
      %v3198 = vmul.f32 %v3061, %v3197
      %vm3199 = vcmp.eq.f32.partialorder %v3061, inf
      %v3200 = vsel %vm3199, %v3061, %v3198
      %vm3201 = vcmp.eq.f32.partialorder %v3061, 0.0
      %v3202 = vand.u32 %v3061, 2147483648
      %v3203 = vsel %vm3201, %v3202, %v3200
      %v3204 = vrsqrt.pop %v3062
      %v3205 = vmul.f32 %v3062, %v3204
      %vm3206 = vcmp.eq.f32.partialorder %v3062, inf
      %v3207 = vsel %vm3206, %v3062, %v3205
      %vm3208 = vcmp.eq.f32.partialorder %v3062, 0.0
      %v3209 = vand.u32 %v3062, 2147483648
      %v3210 = vsel %vm3208, %v3209, %v3207
      %v3211 = vrsqrt.pop %v3063
      %v3212 = vmul.f32 %v3063, %v3211
      %vm3213 = vcmp.eq.f32.partialorder %v3063, inf
      %v3214 = vsel %vm3213, %v3063, %v3212
      %vm3215 = vcmp.eq.f32.partialorder %v3063, 0.0
      %v3216 = vand.u32 %v3063, 2147483648
      %v3217 = vsel %vm3215, %v3216, %v3214
      %v3218 = vrsqrt.pop %v3064
      %v3219 = vmul.f32 %v3064, %v3218
      %vm3220 = vcmp.eq.f32.partialorder %v3064, inf
      %v3221 = vsel %vm3220, %v3064, %v3219
      %vm3222 = vcmp.eq.f32.partialorder %v3064, 0.0
      %v3223 = vand.u32 %v3064, 2147483648
      %v3224 = vsel %vm3222, %v3223, %v3221
      %v3225 = vrsqrt.pop %v3065
      %v3226 = vmul.f32 %v3065, %v3225
      %vm3227 = vcmp.eq.f32.partialorder %v3065, inf
      %v3228 = vsel %vm3227, %v3065, %v3226
      %vm3229 = vcmp.eq.f32.partialorder %v3065, 0.0
      %v3230 = vand.u32 %v3065, 2147483648
      %v3231 = vsel %vm3229, %v3230, %v3228
      %v3232 = vrsqrt.pop %v3066
      %v3233 = vmul.f32 %v3066, %v3232
      %vm3234 = vcmp.eq.f32.partialorder %v3066, inf
      %v3235 = vsel %vm3234, %v3066, %v3233
      %vm3236 = vcmp.eq.f32.partialorder %v3066, 0.0
      %v3237 = vand.u32 %v3066, 2147483648
      %v3238 = vsel %vm3236, %v3237, %v3235
      %v3239 = vrsqrt.pop %v3067
      %v3240 = vmul.f32 %v3067, %v3239
      %vm3241 = vcmp.eq.f32.partialorder %v3067, inf
      %v3242 = vsel %vm3241, %v3067, %v3240
      %vm3243 = vcmp.eq.f32.partialorder %v3067, 0.0
      %v3244 = vand.u32 %v3067, 2147483648
      %v3245 = vsel %vm3243, %v3244, %v3242
      %v3246 = vrsqrt.pop %v3068
      %v3247 = vmul.f32 %v3068, %v3246
      %vm3248 = vcmp.eq.f32.partialorder %v3068, inf
      %v3249 = vsel %vm3248, %v3068, %v3247
      %vm3250 = vcmp.eq.f32.partialorder %v3068, 0.0
      %v3251 = vand.u32 %v3068, 2147483648
      %v3252 = vsel %vm3250, %v3251, %v3249
      %v3253 = vrsqrt.pop %v3069
      %v3254 = vmul.f32 %v3069, %v3253
      %vm3255 = vcmp.eq.f32.partialorder %v3069, inf
      %v3256 = vsel %vm3255, %v3069, %v3254
      %vm3257 = vcmp.eq.f32.partialorder %v3069, 0.0
      %v3258 = vand.u32 %v3069, 2147483648
      %v3259 = vsel %vm3257, %v3258, %v3256
      %v3260 = vrsqrt.pop %v3070
      %v3261 = vmul.f32 %v3070, %v3260
      %vm3262 = vcmp.eq.f32.partialorder %v3070, inf
      %v3263 = vsel %vm3262, %v3070, %v3261
      %vm3264 = vcmp.eq.f32.partialorder %v3070, 0.0
      %v3265 = vand.u32 %v3070, 2147483648
      %v3266 = vsel %vm3264, %v3265, %v3263
      %v3267 = vrsqrt.pop %v3071
      %v3268 = vmul.f32 %v3071, %v3267
      %vm3269 = vcmp.eq.f32.partialorder %v3071, inf
      %v3270 = vsel %vm3269, %v3071, %v3268
      %vm3271 = vcmp.eq.f32.partialorder %v3071, 0.0
      %v3272 = vand.u32 %v3071, 2147483648
      %v3273 = vsel %vm3271, %v3272, %v3270
      %v3274 = vrsqrt.pop %v3072
      %v3275 = vmul.f32 %v3072, %v3274
      %vm3276 = vcmp.eq.f32.partialorder %v3072, inf
      %v3277 = vsel %vm3276, %v3072, %v3275
      %vm3278 = vcmp.eq.f32.partialorder %v3072, 0.0
      %v3279 = vand.u32 %v3072, 2147483648
      %v3280 = vsel %vm3278, %v3279, %v3277
      %v3281 = vrsqrt.pop %v3073
      %v3282 = vmul.f32 %v3073, %v3281
      %vm3283 = vcmp.eq.f32.partialorder %v3073, inf
      %v3284 = vsel %vm3283, %v3073, %v3282
      %vm3285 = vcmp.eq.f32.partialorder %v3073, 0.0
      %v3286 = vand.u32 %v3073, 2147483648
      %v3287 = vsel %vm3285, %v3286, %v3284
      %v3288 = vrsqrt.pop %v3074
      %v3289 = vmul.f32 %v3074, %v3288
      %vm3290 = vcmp.eq.f32.partialorder %v3074, inf
      %v3291 = vsel %vm3290, %v3074, %v3289
      %vm3292 = vcmp.eq.f32.partialorder %v3074, 0.0
      %v3293 = vand.u32 %v3074, 2147483648
      %v3294 = vsel %vm3292, %v3293, %v3291
      %v3295 = vrsqrt.pop %v3075
      %v3296 = vmul.f32 %v3075, %v3295
      %vm3297 = vcmp.eq.f32.partialorder %v3075, inf
      %v3298 = vsel %vm3297, %v3075, %v3296
      %vm3299 = vcmp.eq.f32.partialorder %v3075, 0.0
      %v3300 = vand.u32 %v3075, 2147483648
      %v3301 = vsel %vm3299, %v3300, %v3298
      %v3302 = vrsqrt.pop %v3076
      %v3303 = vmul.f32 %v3076, %v3302
      %vm3304 = vcmp.eq.f32.partialorder %v3076, inf
      %v3305 = vsel %vm3304, %v3076, %v3303
      %vm3306 = vcmp.eq.f32.partialorder %v3076, 0.0
      %v3307 = vand.u32 %v3076, 2147483648
      %v3308 = vsel %vm3306, %v3307, %v3305
      %v3309 = vrsqrt.pop %v3077
      %v3310 = vmul.f32 %v3077, %v3309
      %vm3311 = vcmp.eq.f32.partialorder %v3077, inf
      %v3312 = vsel %vm3311, %v3077, %v3310
      %vm3313 = vcmp.eq.f32.partialorder %v3077, 0.0
      %v3314 = vand.u32 %v3077, 2147483648
      %v3315 = vsel %vm3313, %v3314, %v3312
      %v3316 = vrsqrt.pop %v3078
      %v3317 = vmul.f32 %v3078, %v3316
      %vm3318 = vcmp.eq.f32.partialorder %v3078, inf
      %v3319 = vsel %vm3318, %v3078, %v3317
      %vm3320 = vcmp.eq.f32.partialorder %v3078, 0.0
      %v3321 = vand.u32 %v3078, 2147483648
      %v3322 = vsel %vm3320, %v3321, %v3319
      %v3323 = vrsqrt.pop %v3079
      %v3324 = vmul.f32 %v3079, %v3323
      %vm3325 = vcmp.eq.f32.partialorder %v3079, inf
      %v3326 = vsel %vm3325, %v3079, %v3324
      %vm3327 = vcmp.eq.f32.partialorder %v3079, 0.0
      %v3328 = vand.u32 %v3079, 2147483648
      %v3329 = vsel %vm3327, %v3328, %v3326
      %v3330 = vrsqrt.pop %v3080
      %v3331 = vmul.f32 %v3080, %v3330
      %vm3332 = vcmp.eq.f32.partialorder %v3080, inf
      %v3333 = vsel %vm3332, %v3080, %v3331
      %vm3334 = vcmp.eq.f32.partialorder %v3080, 0.0
      %v3335 = vand.u32 %v3080, 2147483648
      %v3336 = vsel %vm3334, %v3335, %v3333
      %v3337 = vrsqrt.pop %v3081
      %v3338 = vmul.f32 %v3081, %v3337
      %vm3339 = vcmp.eq.f32.partialorder %v3081, inf
      %v3340 = vsel %vm3339, %v3081, %v3338
      %vm3341 = vcmp.eq.f32.partialorder %v3081, 0.0
      %v3342 = vand.u32 %v3081, 2147483648
      %v3343 = vsel %vm3341, %v3342, %v3340
      %v3344 = vrsqrt.pop %v3082
      %v3345 = vmul.f32 %v3082, %v3344
      %vm3346 = vcmp.eq.f32.partialorder %v3082, inf
      %v3347 = vsel %vm3346, %v3082, %v3345
      %vm3348 = vcmp.eq.f32.partialorder %v3082, 0.0
      %v3349 = vand.u32 %v3082, 2147483648
      %v3350 = vsel %vm3348, %v3349, %v3347
      %v3351 = vrsqrt.pop %v3083
      %v3352 = vmul.f32 %v3083, %v3351
      %vm3353 = vcmp.eq.f32.partialorder %v3083, inf
      %v3354 = vsel %vm3353, %v3083, %v3352
      %vm3355 = vcmp.eq.f32.partialorder %v3083, 0.0
      %v3356 = vand.u32 %v3083, 2147483648
      %v3357 = vsel %vm3355, %v3356, %v3354
      %v3358 = vrsqrt.pop %v3084
      %v3359 = vmul.f32 %v3084, %v3358
      %vm3360 = vcmp.eq.f32.partialorder %v3084, inf
      %v3361 = vsel %vm3360, %v3084, %v3359
      %vm3362 = vcmp.eq.f32.partialorder %v3084, 0.0
      %v3363 = vand.u32 %v3084, 2147483648
      %v3364 = vsel %vm3362, %v3363, %v3361
      %v3365 = vrsqrt.pop %v3085
      %v3366 = vmul.f32 %v3085, %v3365
      %vm3367 = vcmp.eq.f32.partialorder %v3085, inf
      %v3368 = vsel %vm3367, %v3085, %v3366
      %vm3369 = vcmp.eq.f32.partialorder %v3085, 0.0
      %v3370 = vand.u32 %v3085, 2147483648
      %v3371 = vsel %vm3369, %v3370, %v3368
      %v3372 = vrsqrt.pop %v3086
      %v3373 = vmul.f32 %v3086, %v3372
      %vm3374 = vcmp.eq.f32.partialorder %v3086, inf
      %v3375 = vsel %vm3374, %v3086, %v3373
      %vm3376 = vcmp.eq.f32.partialorder %v3086, 0.0
      %v3377 = vand.u32 %v3086, 2147483648
      %v3378 = vsel %vm3376, %v3377, %v3375
      %v3379 = vrsqrt.pop %v3087
      %v3380 = vmul.f32 %v3087, %v3379
      %vm3381 = vcmp.eq.f32.partialorder %v3087, inf
      %v3382 = vsel %vm3381, %v3087, %v3380
      %vm3383 = vcmp.eq.f32.partialorder %v3087, 0.0
      %v3384 = vand.u32 %v3087, 2147483648
      %v3385 = vsel %vm3383, %v3384, %v3382
      %v3386 = vrsqrt.pop %v3088
      %v3387 = vmul.f32 %v3088, %v3386
      %vm3388 = vcmp.eq.f32.partialorder %v3088, inf
      %v3389 = vsel %vm3388, %v3088, %v3387
      %vm3390 = vcmp.eq.f32.partialorder %v3088, 0.0
      %v3391 = vand.u32 %v3088, 2147483648
      %v3392 = vsel %vm3390, %v3391, %v3389
      %v3393 = vrsqrt.pop %v3089
      %v3394 = vmul.f32 %v3089, %v3393
      %vm3395 = vcmp.eq.f32.partialorder %v3089, inf
      %v3396 = vsel %vm3395, %v3089, %v3394
      %vm3397 = vcmp.eq.f32.partialorder %v3089, 0.0
      %v3398 = vand.u32 %v3089, 2147483648
      %v3399 = vsel %vm3397, %v3398, %v3396
      %v3400 = vrsqrt.pop %v3090
      %v3401 = vmul.f32 %v3090, %v3400
      %vm3402 = vcmp.eq.f32.partialorder %v3090, inf
      %v3403 = vsel %vm3402, %v3090, %v3401
      %vm3404 = vcmp.eq.f32.partialorder %v3090, 0.0
      %v3405 = vand.u32 %v3090, 2147483648
      %v3406 = vsel %vm3404, %v3405, %v3403
      %v3407 = vrsqrt.pop %v3091
      %v3408 = vmul.f32 %v3091, %v3407
      %vm3409 = vcmp.eq.f32.partialorder %v3091, inf
      %v3410 = vsel %vm3409, %v3091, %v3408
      %vm3411 = vcmp.eq.f32.partialorder %v3091, 0.0
      %v3412 = vand.u32 %v3091, 2147483648
      %v3413 = vsel %vm3411, %v3412, %v3410
      %v3414 = vrsqrt.pop %v3092
      %v3415 = vmul.f32 %v3092, %v3414
      %vm3416 = vcmp.eq.f32.partialorder %v3092, inf
      %v3417 = vsel %vm3416, %v3092, %v3415
      %vm3418 = vcmp.eq.f32.partialorder %v3092, 0.0
      %v3419 = vand.u32 %v3092, 2147483648
      %v3420 = vsel %vm3418, %v3419, %v3417
      %v3421 = vrsqrt.pop %v3093
      %v3422 = vmul.f32 %v3093, %v3421
      %vm3423 = vcmp.eq.f32.partialorder %v3093, inf
      %v3424 = vsel %vm3423, %v3093, %v3422
      %vm3425 = vcmp.eq.f32.partialorder %v3093, 0.0
      %v3426 = vand.u32 %v3093, 2147483648
      %v3427 = vsel %vm3425, %v3426, %v3424
      %v3428 = vrsqrt.pop %v3094
      %v3429 = vmul.f32 %v3094, %v3428
      %vm3430 = vcmp.eq.f32.partialorder %v3094, inf
      %v3431 = vsel %vm3430, %v3094, %v3429
      %vm3432 = vcmp.eq.f32.partialorder %v3094, 0.0
      %v3433 = vand.u32 %v3094, 2147483648
      %v3434 = vsel %vm3432, %v3433, %v3431
      %v3435 = vrsqrt.pop %v3095
      %v3436 = vmul.f32 %v3095, %v3435
      %vm3437 = vcmp.eq.f32.partialorder %v3095, inf
      %v3438 = vsel %vm3437, %v3095, %v3436
      %vm3439 = vcmp.eq.f32.partialorder %v3095, 0.0
      %v3440 = vand.u32 %v3095, 2147483648
      %v3441 = vsel %vm3439, %v3440, %v3438
      %v3442 = vrsqrt.pop %v3096
      %v3443 = vmul.f32 %v3096, %v3442
      %vm3444 = vcmp.eq.f32.partialorder %v3096, inf
      %v3445 = vsel %vm3444, %v3096, %v3443
      %vm3446 = vcmp.eq.f32.partialorder %v3096, 0.0
      %v3447 = vand.u32 %v3096, 2147483648
      %v3448 = vsel %vm3446, %v3447, %v3445
      %v3449 = vrsqrt.pop %v3097
      %v3450 = vmul.f32 %v3097, %v3449
      %vm3451 = vcmp.eq.f32.partialorder %v3097, inf
      %v3452 = vsel %vm3451, %v3097, %v3450
      %vm3453 = vcmp.eq.f32.partialorder %v3097, 0.0
      %v3454 = vand.u32 %v3097, 2147483648
      %v3455 = vsel %vm3453, %v3454, %v3452
      %v3456 = vrsqrt.pop %v3098
      %v3457 = vmul.f32 %v3098, %v3456
      %vm3458 = vcmp.eq.f32.partialorder %v3098, inf
      %v3459 = vsel %vm3458, %v3098, %v3457
      %vm3460 = vcmp.eq.f32.partialorder %v3098, 0.0
      %v3461 = vand.u32 %v3098, 2147483648
      %v3462 = vsel %vm3460, %v3461, %v3459
      %v3463 = vrsqrt.pop %v3099
      %v3464 = vmul.f32 %v3099, %v3463
      %vm3465 = vcmp.eq.f32.partialorder %v3099, inf
      %v3466 = vsel %vm3465, %v3099, %v3464
      %vm3467 = vcmp.eq.f32.partialorder %v3099, 0.0
      %v3468 = vand.u32 %v3099, 2147483648
      %v3469 = vsel %vm3467, %v3468, %v3466
      %v3470 = vrsqrt.pop %v3100
      %v3471 = vmul.f32 %v3100, %v3470
      %vm3472 = vcmp.eq.f32.partialorder %v3100, inf
      %v3473 = vsel %vm3472, %v3100, %v3471
      %vm3474 = vcmp.eq.f32.partialorder %v3100, 0.0
      %v3475 = vand.u32 %v3100, 2147483648
      %v3476 = vsel %vm3474, %v3475, %v3473
      %v3477 = vrsqrt.pop %v3101
      %v3478 = vmul.f32 %v3101, %v3477
      %vm3479 = vcmp.eq.f32.partialorder %v3101, inf
      %v3480 = vsel %vm3479, %v3101, %v3478
      %vm3481 = vcmp.eq.f32.partialorder %v3101, 0.0
      %v3482 = vand.u32 %v3101, 2147483648
      %v3483 = vsel %vm3481, %v3482, %v3480
      %v3484 = vrsqrt.pop %v3102
      %v3485 = vmul.f32 %v3102, %v3484
      %vm3486 = vcmp.eq.f32.partialorder %v3102, inf
      %v3487 = vsel %vm3486, %v3102, %v3485
      %vm3488 = vcmp.eq.f32.partialorder %v3102, 0.0
      %v3489 = vand.u32 %v3102, 2147483648
      %v3490 = vsel %vm3488, %v3489, %v3487
      %v3491 = vrsqrt.pop %v3103
      %v3492 = vmul.f32 %v3103, %v3491
      %vm3493 = vcmp.eq.f32.partialorder %v3103, inf
      %v3494 = vsel %vm3493, %v3103, %v3492
      %vm3495 = vcmp.eq.f32.partialorder %v3103, 0.0
      %v3496 = vand.u32 %v3103, 2147483648
      %v3497 = vsel %vm3495, %v3496, %v3494
      %v3498 = vrsqrt.pop %v3104
      %v3499 = vmul.f32 %v3104, %v3498
      %vm3500 = vcmp.eq.f32.partialorder %v3104, inf
      %v3501 = vsel %vm3500, %v3104, %v3499
      %vm3502 = vcmp.eq.f32.partialorder %v3104, 0.0
      %v3503 = vand.u32 %v3104, 2147483648
      %v3504 = vsel %vm3502, %v3503, %v3501
      %v3505 = vrsqrt.pop %v3105
      %v3506 = vmul.f32 %v3105, %v3505
      %vm3507 = vcmp.eq.f32.partialorder %v3105, inf
      %v3508 = vsel %vm3507, %v3105, %v3506
      %vm3509 = vcmp.eq.f32.partialorder %v3105, 0.0
      %v3510 = vand.u32 %v3105, 2147483648
      %v3511 = vsel %vm3509, %v3510, %v3508
      %v3512 = vrsqrt.pop %v3106
      %v3513 = vmul.f32 %v3106, %v3512
      %vm3514 = vcmp.eq.f32.partialorder %v3106, inf
      %v3515 = vsel %vm3514, %v3106, %v3513
      %vm3516 = vcmp.eq.f32.partialorder %v3106, 0.0
      %v3517 = vand.u32 %v3106, 2147483648
      %v3518 = vsel %vm3516, %v3517, %v3515
      %v3519 = vrsqrt.pop %v3107
      %v3520 = vmul.f32 %v3107, %v3519
      %vm3521 = vcmp.eq.f32.partialorder %v3107, inf
      %v3522 = vsel %vm3521, %v3107, %v3520
      %vm3523 = vcmp.eq.f32.partialorder %v3107, 0.0
      %v3524 = vand.u32 %v3107, 2147483648
      %v3525 = vsel %vm3523, %v3524, %v3522
      %v3526 = vrsqrt.pop %v3108
      %v3527 = vmul.f32 %v3108, %v3526
      %vm3528 = vcmp.eq.f32.partialorder %v3108, inf
      %v3529 = vsel %vm3528, %v3108, %v3527
      %vm3530 = vcmp.eq.f32.partialorder %v3108, 0.0
      %v3531 = vand.u32 %v3108, 2147483648
      %v3532 = vsel %vm3530, %v3531, %v3529
      %v3533 = vrsqrt.pop %v3109
      %v3534 = vmul.f32 %v3109, %v3533
      %vm3535 = vcmp.eq.f32.partialorder %v3109, inf
      %v3536 = vsel %vm3535, %v3109, %v3534
      %vm3537 = vcmp.eq.f32.partialorder %v3109, 0.0
      %v3538 = vand.u32 %v3109, 2147483648
      %v3539 = vsel %vm3537, %v3538, %v3536
      %v3540 = vrsqrt.pop %v3110
      %v3541 = vmul.f32 %v3110, %v3540
      %vm3542 = vcmp.eq.f32.partialorder %v3110, inf
      %v3543 = vsel %vm3542, %v3110, %v3541
      %vm3544 = vcmp.eq.f32.partialorder %v3110, 0.0
      %v3545 = vand.u32 %v3110, 2147483648
      %v3546 = vsel %vm3544, %v3545, %v3543
      %v3547 = vrsqrt.pop %v3111
      %v3548 = vmul.f32 %v3111, %v3547
      %vm3549 = vcmp.eq.f32.partialorder %v3111, inf
      %v3550 = vsel %vm3549, %v3111, %v3548
      %vm3551 = vcmp.eq.f32.partialorder %v3111, 0.0
      %v3552 = vand.u32 %v3111, 2147483648
      %v3553 = vsel %vm3551, %v3552, %v3550
      %v3554 = vrsqrt.pop %v3112
      %v3555 = vmul.f32 %v3112, %v3554
      %vm3556 = vcmp.eq.f32.partialorder %v3112, inf
      %v3557 = vsel %vm3556, %v3112, %v3555
      %vm3558 = vcmp.eq.f32.partialorder %v3112, 0.0
      %v3559 = vand.u32 %v3112, 2147483648
      %v3560 = vsel %vm3558, %v3559, %v3557
      %3625 = vrot.lane.b32.xlu0 %v3119, 127
      %v3626 = vpop.permute.xlu0 %3625
      %3627 = vrot.lane.b32.xlu0 %v3126, 127
      %v3628 = vpop.permute.xlu0 %3627
      %3629 = vrot.lane.b32.xlu0 %v3133, 127
      %v3630 = vpop.permute.xlu0 %3629
      %3631 = vrot.lane.b32.xlu0 %v3140, 127
      %v3632 = vpop.permute.xlu0 %3631
      %3633 = vrot.lane.b32.xlu0 %v3147, 127
      %v3634 = vpop.permute.xlu0 %3633
      %3635 = vrot.lane.b32.xlu0 %v3154, 127
      %v3636 = vpop.permute.xlu0 %3635
      %3637 = vrot.lane.b32.xlu0 %v3161, 127
      %v3638 = vpop.permute.xlu0 %3637
      %3639 = vrot.lane.b32.xlu0 %v3168, 127
      %v3640 = vpop.permute.xlu0 %3639
      %3641 = vrot.lane.b32.xlu0 %v3175, 127
      %v3642 = vpop.permute.xlu0 %3641
      %3643 = vrot.lane.b32.xlu0 %v3182, 127
      %v3644 = vpop.permute.xlu0 %3643
      %3645 = vrot.lane.b32.xlu0 %v3189, 127
      %v3646 = vpop.permute.xlu0 %3645
      %3647 = vrot.lane.b32.xlu0 %v3196, 127
      %v3648 = vpop.permute.xlu0 %3647
      %3649 = vrot.lane.b32.xlu0 %v3203, 127
      %v3650 = vpop.permute.xlu0 %3649
      %3651 = vrot.lane.b32.xlu0 %v3210, 127
      %v3652 = vpop.permute.xlu0 %3651
      %3653 = vrot.lane.b32.xlu0 %v3217, 127
      %v3654 = vpop.permute.xlu0 %3653
      %3655 = vrot.lane.b32.xlu0 %v3224, 127
      %v3656 = vpop.permute.xlu0 %3655
      %3657 = vrot.lane.b32.xlu0 %v3231, 127
      %v3658 = vpop.permute.xlu0 %3657
      %3659 = vrot.lane.b32.xlu0 %v3238, 127
      %v3660 = vpop.permute.xlu0 %3659
      %3661 = vrot.lane.b32.xlu0 %v3245, 127
      %v3662 = vpop.permute.xlu0 %3661
      %3663 = vrot.lane.b32.xlu0 %v3252, 127
      %v3664 = vpop.permute.xlu0 %3663
      %3665 = vrot.lane.b32.xlu0 %v3259, 127
      %v3666 = vpop.permute.xlu0 %3665
      %3667 = vrot.lane.b32.xlu0 %v3266, 127
      %v3668 = vpop.permute.xlu0 %3667
      %3669 = vrot.lane.b32.xlu0 %v3273, 127
      %v3670 = vpop.permute.xlu0 %3669
      %3671 = vrot.lane.b32.xlu0 %v3280, 127
      %v3672 = vpop.permute.xlu0 %3671
      %3673 = vrot.lane.b32.xlu0 %v3287, 127
      %v3674 = vpop.permute.xlu0 %3673
      %3675 = vrot.lane.b32.xlu0 %v3294, 127
      %v3676 = vpop.permute.xlu0 %3675
      %3677 = vrot.lane.b32.xlu0 %v3301, 127
      %v3678 = vpop.permute.xlu0 %3677
      %3679 = vrot.lane.b32.xlu0 %v3308, 127
      %v3680 = vpop.permute.xlu0 %3679
      %3681 = vrot.lane.b32.xlu0 %v3315, 127
      %v3682 = vpop.permute.xlu0 %3681
      %3683 = vrot.lane.b32.xlu0 %v3322, 127
      %v3684 = vpop.permute.xlu0 %3683
      %3685 = vrot.lane.b32.xlu0 %v3329, 127
      %v3686 = vpop.permute.xlu0 %3685
      %3687 = vrot.lane.b32.xlu0 %v3336, 127
      %v3688 = vpop.permute.xlu0 %3687
      %3689 = vrot.lane.b32.xlu0 %v3343, 127
      %v3690 = vpop.permute.xlu0 %3689
      %3691 = vrot.lane.b32.xlu0 %v3350, 127
      %v3692 = vpop.permute.xlu0 %3691
      %3693 = vrot.lane.b32.xlu0 %v3357, 127
      %v3694 = vpop.permute.xlu0 %3693
      %3695 = vrot.lane.b32.xlu0 %v3364, 127
      %v3696 = vpop.permute.xlu0 %3695
      %3697 = vrot.lane.b32.xlu0 %v3371, 127
      %v3698 = vpop.permute.xlu0 %3697
      %3699 = vrot.lane.b32.xlu0 %v3378, 127
      %v3700 = vpop.permute.xlu0 %3699
      %3701 = vrot.lane.b32.xlu0 %v3385, 127
      %v3702 = vpop.permute.xlu0 %3701
      %3703 = vrot.lane.b32.xlu0 %v3392, 127
      %v3704 = vpop.permute.xlu0 %3703
      %3705 = vrot.lane.b32.xlu0 %v3399, 127
      %v3706 = vpop.permute.xlu0 %3705
      %3707 = vrot.lane.b32.xlu0 %v3406, 127
      %v3708 = vpop.permute.xlu0 %3707
      %3709 = vrot.lane.b32.xlu0 %v3413, 127
      %v3710 = vpop.permute.xlu0 %3709
      %3711 = vrot.lane.b32.xlu0 %v3420, 127
      %v3712 = vpop.permute.xlu0 %3711
      %3713 = vrot.lane.b32.xlu0 %v3427, 127
      %v3714 = vpop.permute.xlu0 %3713
      %3715 = vrot.lane.b32.xlu0 %v3434, 127
      %v3716 = vpop.permute.xlu0 %3715
      %3717 = vrot.lane.b32.xlu0 %v3441, 127
      %v3718 = vpop.permute.xlu0 %3717
      %3719 = vrot.lane.b32.xlu0 %v3448, 127
      %v3720 = vpop.permute.xlu0 %3719
      %3721 = vrot.lane.b32.xlu0 %v3455, 127
      %v3722 = vpop.permute.xlu0 %3721
      %3723 = vrot.lane.b32.xlu0 %v3462, 127
      %v3724 = vpop.permute.xlu0 %3723
      %3725 = vrot.lane.b32.xlu0 %v3469, 127
      %v3726 = vpop.permute.xlu0 %3725
      %3727 = vrot.lane.b32.xlu0 %v3476, 127
      %v3728 = vpop.permute.xlu0 %3727
      %3729 = vrot.lane.b32.xlu0 %v3483, 127
      %v3730 = vpop.permute.xlu0 %3729
      %3731 = vrot.lane.b32.xlu0 %v3490, 127
      %v3732 = vpop.permute.xlu0 %3731
      %3733 = vrot.lane.b32.xlu0 %v3497, 127
      %v3734 = vpop.permute.xlu0 %3733
      %3735 = vrot.lane.b32.xlu0 %v3504, 127
      %v3736 = vpop.permute.xlu0 %3735
      %3737 = vrot.lane.b32.xlu0 %v3511, 127
      %v3738 = vpop.permute.xlu0 %3737
      %3739 = vrot.lane.b32.xlu0 %v3518, 127
      %v3740 = vpop.permute.xlu0 %3739
      %3741 = vrot.lane.b32.xlu0 %v3525, 127
      %v3742 = vpop.permute.xlu0 %3741
      %3743 = vrot.lane.b32.xlu0 %v3532, 127
      %v3744 = vpop.permute.xlu0 %3743
      %3745 = vrot.lane.b32.xlu0 %v3539, 127
      %v3746 = vpop.permute.xlu0 %3745
      %3747 = vrot.lane.b32.xlu0 %v3546, 127
      %v3748 = vpop.permute.xlu0 %3747
      %3749 = vrot.lane.b32.xlu0 %v3553, 127
      %v3750 = vpop.permute.xlu0 %3749
      %3751 = vrot.lane.b32.xlu0 %v3560, 127
      %v3752 = vpop.permute.xlu0 %3751
      %v3817 = vsub.f32 %v3119, %v3626
      %v3818 = vsub.f32 %v3126, %v3628
      %v3819 = vsub.f32 %v3133, %v3630
      %v3820 = vsub.f32 %v3140, %v3632
      %v3821 = vsub.f32 %v3147, %v3634
      %v3822 = vsub.f32 %v3154, %v3636
      %v3823 = vsub.f32 %v3161, %v3638
      %v3824 = vsub.f32 %v3168, %v3640
      %v3825 = vsub.f32 %v3175, %v3642
      %v3826 = vsub.f32 %v3182, %v3644
      %v3827 = vsub.f32 %v3189, %v3646
      %v3828 = vsub.f32 %v3196, %v3648
      %v3829 = vsub.f32 %v3203, %v3650
      %v3830 = vsub.f32 %v3210, %v3652
      %v3831 = vsub.f32 %v3217, %v3654
      %v3832 = vsub.f32 %v3224, %v3656
      %v3833 = vsub.f32 %v3231, %v3658
      %v3834 = vsub.f32 %v3238, %v3660
      %v3835 = vsub.f32 %v3245, %v3662
      %v3836 = vsub.f32 %v3252, %v3664
      %v3837 = vsub.f32 %v3259, %v3666
      %v3838 = vsub.f32 %v3266, %v3668
      %v3839 = vsub.f32 %v3273, %v3670
      %v3840 = vsub.f32 %v3280, %v3672
      %v3841 = vsub.f32 %v3287, %v3674
      %v3842 = vsub.f32 %v3294, %v3676
      %v3843 = vsub.f32 %v3301, %v3678
      %v3844 = vsub.f32 %v3308, %v3680
      %v3845 = vsub.f32 %v3315, %v3682
      %v3846 = vsub.f32 %v3322, %v3684
      %v3847 = vsub.f32 %v3329, %v3686
      %v3848 = vsub.f32 %v3336, %v3688
      %v3849 = vsub.f32 %v3343, %v3690
      %v3850 = vsub.f32 %v3350, %v3692
      %v3851 = vsub.f32 %v3357, %v3694
      %v3852 = vsub.f32 %v3364, %v3696
      %v3853 = vsub.f32 %v3371, %v3698
      %v3854 = vsub.f32 %v3378, %v3700
      %v3855 = vsub.f32 %v3385, %v3702
      %v3856 = vsub.f32 %v3392, %v3704
      %v3857 = vsub.f32 %v3399, %v3706
      %v3858 = vsub.f32 %v3406, %v3708
      %v3859 = vsub.f32 %v3413, %v3710
      %v3860 = vsub.f32 %v3420, %v3712
      %v3861 = vsub.f32 %v3427, %v3714
      %v3862 = vsub.f32 %v3434, %v3716
      %v3863 = vsub.f32 %v3441, %v3718
      %v3864 = vsub.f32 %v3448, %v3720
      %v3865 = vsub.f32 %v3455, %v3722
      %v3866 = vsub.f32 %v3462, %v3724
      %v3867 = vsub.f32 %v3469, %v3726
      %v3868 = vsub.f32 %v3476, %v3728
      %v3869 = vsub.f32 %v3483, %v3730
      %v3870 = vsub.f32 %v3490, %v3732
      %v3871 = vsub.f32 %v3497, %v3734
      %v3872 = vsub.f32 %v3504, %v3736
      %v3873 = vsub.f32 %v3511, %v3738
      %v3874 = vsub.f32 %v3518, %v3740
      %v3875 = vsub.f32 %v3525, %v3742
      %v3876 = vsub.f32 %v3532, %v3744
      %v3877 = vsub.f32 %v3539, %v3746
      %v3878 = vsub.f32 %v3546, %v3748
      %v3879 = vsub.f32 %v3553, %v3750
      %v3880 = vsub.f32 %v3560, %v3752
      %v3881 = vadd.f32 %v3817, 1.0
      %v3882 = vadd.f32 %v3818, 1.0
      %v3883 = vadd.f32 %v3819, 1.0
      %v3884 = vadd.f32 %v3820, 1.0
      %v3885 = vadd.f32 %v3821, 1.0
      %v3886 = vadd.f32 %v3822, 1.0
      %v3887 = vadd.f32 %v3823, 1.0
      %v3888 = vadd.f32 %v3824, 1.0
      %v3889 = vadd.f32 %v3825, 1.0
      %v3890 = vadd.f32 %v3826, 1.0
      %v3891 = vadd.f32 %v3827, 1.0
      %v3892 = vadd.f32 %v3828, 1.0
      %v3893 = vadd.f32 %v3829, 1.0
      %v3894 = vadd.f32 %v3830, 1.0
      %v3895 = vadd.f32 %v3831, 1.0
      %v3896 = vadd.f32 %v3832, 1.0
      %v3897 = vadd.f32 %v3833, 1.0
      %v3898 = vadd.f32 %v3834, 1.0
      %v3899 = vadd.f32 %v3835, 1.0
      %v3900 = vadd.f32 %v3836, 1.0
      %v3901 = vadd.f32 %v3837, 1.0
      %v3902 = vadd.f32 %v3838, 1.0
      %v3903 = vadd.f32 %v3839, 1.0
      %v3904 = vadd.f32 %v3840, 1.0
      %v3905 = vadd.f32 %v3841, 1.0
      %v3906 = vadd.f32 %v3842, 1.0
      %v3907 = vadd.f32 %v3843, 1.0
      %v3908 = vadd.f32 %v3844, 1.0
      %v3909 = vadd.f32 %v3845, 1.0
      %v3910 = vadd.f32 %v3846, 1.0
      %v3911 = vadd.f32 %v3847, 1.0
      %v3912 = vadd.f32 %v3848, 1.0
      %v3913 = vadd.f32 %v3849, 1.0
      %v3914 = vadd.f32 %v3850, 1.0
      %v3915 = vadd.f32 %v3851, 1.0
      %v3916 = vadd.f32 %v3852, 1.0
      %v3917 = vadd.f32 %v3853, 1.0
      %v3918 = vadd.f32 %v3854, 1.0
      %v3919 = vadd.f32 %v3855, 1.0
      %v3920 = vadd.f32 %v3856, 1.0
      %v3921 = vadd.f32 %v3857, 1.0
      %v3922 = vadd.f32 %v3858, 1.0
      %v3923 = vadd.f32 %v3859, 1.0
      %v3924 = vadd.f32 %v3860, 1.0
      %v3925 = vadd.f32 %v3861, 1.0
      %v3926 = vadd.f32 %v3862, 1.0
      %v3927 = vadd.f32 %v3863, 1.0
      %v3928 = vadd.f32 %v3864, 1.0
      %v3929 = vadd.f32 %v3865, 1.0
      %v3930 = vadd.f32 %v3866, 1.0
      %v3931 = vadd.f32 %v3867, 1.0
      %v3932 = vadd.f32 %v3868, 1.0
      %v3933 = vadd.f32 %v3869, 1.0
      %v3934 = vadd.f32 %v3870, 1.0
      %v3935 = vadd.f32 %v3871, 1.0
      %v3936 = vadd.f32 %v3872, 1.0
      %v3937 = vadd.f32 %v3873, 1.0
      %v3938 = vadd.f32 %v3874, 1.0
      %v3939 = vadd.f32 %v3875, 1.0
      %v3940 = vadd.f32 %v3876, 1.0
      %v3941 = vadd.f32 %v3877, 1.0
      %v3942 = vadd.f32 %v3878, 1.0
      %v3943 = vadd.f32 %v3879, 1.0
      %v3944 = vadd.f32 %v3880, 1.0
      %v3945 = vmax.f32 %v3881, 0.0
      %v3946 = vmax.f32 %v3882, 0.0
      %v3947 = vmax.f32 %v3883, 0.0
      %v3948 = vmax.f32 %v3884, 0.0
      %v3949 = vmax.f32 %v3885, 0.0
      %v3950 = vmax.f32 %v3886, 0.0
      %v3951 = vmax.f32 %v3887, 0.0
      %v3952 = vmax.f32 %v3888, 0.0
      %v3953 = vmax.f32 %v3889, 0.0
      %v3954 = vmax.f32 %v3890, 0.0
      %v3955 = vmax.f32 %v3891, 0.0
      %v3956 = vmax.f32 %v3892, 0.0
      %v3957 = vmax.f32 %v3893, 0.0
      %v3958 = vmax.f32 %v3894, 0.0
      %v3959 = vmax.f32 %v3895, 0.0
      %v3960 = vmax.f32 %v3896, 0.0
      %v3961 = vmax.f32 %v3897, 0.0
      %v3962 = vmax.f32 %v3898, 0.0
      %v3963 = vmax.f32 %v3899, 0.0
      %v3964 = vmax.f32 %v3900, 0.0
      %v3965 = vmax.f32 %v3901, 0.0
      %v3966 = vmax.f32 %v3902, 0.0
      %v3967 = vmax.f32 %v3903, 0.0
      %v3968 = vmax.f32 %v3904, 0.0
      %v3969 = vmax.f32 %v3905, 0.0
      %v3970 = vmax.f32 %v3906, 0.0
      %v3971 = vmax.f32 %v3907, 0.0
      %v3972 = vmax.f32 %v3908, 0.0
      %v3973 = vmax.f32 %v3909, 0.0
      %v3974 = vmax.f32 %v3910, 0.0
      %v3975 = vmax.f32 %v3911, 0.0
      %v3976 = vmax.f32 %v3912, 0.0
      %v3977 = vmax.f32 %v3913, 0.0
      %v3978 = vmax.f32 %v3914, 0.0
      %v3979 = vmax.f32 %v3915, 0.0
      %v3980 = vmax.f32 %v3916, 0.0
      %v3981 = vmax.f32 %v3917, 0.0
      %v3982 = vmax.f32 %v3918, 0.0
      %v3983 = vmax.f32 %v3919, 0.0
      %v3984 = vmax.f32 %v3920, 0.0
      %v3985 = vmax.f32 %v3921, 0.0
      %v3986 = vmax.f32 %v3922, 0.0
      %v3987 = vmax.f32 %v3923, 0.0
      %v3988 = vmax.f32 %v3924, 0.0
      %v3989 = vmax.f32 %v3925, 0.0
      %v3990 = vmax.f32 %v3926, 0.0
      %v3991 = vmax.f32 %v3927, 0.0
      %v3992 = vmax.f32 %v3928, 0.0
      %v3993 = vmax.f32 %v3929, 0.0
      %v3994 = vmax.f32 %v3930, 0.0
      %v3995 = vmax.f32 %v3931, 0.0
      %v3996 = vmax.f32 %v3932, 0.0
      %v3997 = vmax.f32 %v3933, 0.0
      %v3998 = vmax.f32 %v3934, 0.0
      %v3999 = vmax.f32 %v3935, 0.0
      %v4000 = vmax.f32 %v3936, 0.0
      %v4001 = vmax.f32 %v3937, 0.0
      %v4002 = vmax.f32 %v3938, 0.0
      %v4003 = vmax.f32 %v3939, 0.0
      %v4004 = vmax.f32 %v3940, 0.0
      %v4005 = vmax.f32 %v3941, 0.0
      %v4006 = vmax.f32 %v3942, 0.0
      %v4007 = vmax.f32 %v3943, 0.0
      %v4008 = vmax.f32 %v3944, 0.0
      %s4009 = smul.u32 %s13, 512
      %v4010 = vlaneseq
      %v4011 = vshrl.u32 %v4010, 7
      %v4012 = vadd.s32 %v4011, 8
      %v4013 = vadd.s32 %v4011, 16
      %v4014 = vadd.s32 %v4011, 24
      %v4015 = vadd.s32 %v4011, 32
      %v4016 = vadd.s32 %v4011, 40
      %v4017 = vadd.s32 %v4011, 48
      %v4018 = vadd.s32 %v4011, 56
      %v4019 = vadd.s32 %v4011, 64
      %v4020 = vadd.s32 %v4011, 72
      %v4021 = vadd.s32 %v4011, 80
      %v4022 = vadd.s32 %v4011, 88
      %v4023 = vadd.s32 %v4011, 96
      %v4024 = vadd.s32 %v4011, 104
      %v4025 = vadd.s32 %v4011, 112
      %v4026 = vadd.s32 %v4011, 120
      %v4027 = vadd.s32 %v4011, 128
      %v4028 = vadd.s32 %v4011, 136
      %v4029 = vadd.s32 %v4011, 144
      %v4030 = vadd.s32 %v4011, 152
      %v4031 = vadd.s32 %v4011, 160
      %v4032 = vadd.s32 %v4011, 168
      %v4033 = vadd.s32 %v4011, 176
      %v4034 = vadd.s32 %v4011, 184
      %v4035 = vadd.s32 %v4011, 192
      %v4036 = vadd.s32 %v4011, 200
      %v4037 = vadd.s32 %v4011, 208
      %v4038 = vadd.s32 %v4011, 216
      %v4039 = vadd.s32 %v4011, 224
      %v4040 = vadd.s32 %v4011, 232
      %v4041 = vadd.s32 %v4011, 240
      %v4042 = vadd.s32 %v4011, 248
      %v4043 = vadd.s32 %v4011, 256
      %v4044 = vadd.s32 %v4011, 264
      %v4045 = vadd.s32 %v4011, 272
      %v4046 = vadd.s32 %v4011, 280
      %v4047 = vadd.s32 %v4011, 288
      %v4048 = vadd.s32 %v4011, 296
      %v4049 = vadd.s32 %v4011, 304
      %v4050 = vadd.s32 %v4011, 312
      %v4051 = vadd.s32 %v4011, 320
      %v4052 = vadd.s32 %v4011, 328
      %v4053 = vadd.s32 %v4011, 336
      %v4054 = vadd.s32 %v4011, 344
      %v4055 = vadd.s32 %v4011, 352
      %v4056 = vadd.s32 %v4011, 360
      %v4057 = vadd.s32 %v4011, 368
      %v4058 = vadd.s32 %v4011, 376
      %v4059 = vadd.s32 %v4011, 384
      %v4060 = vadd.s32 %v4011, 392
      %v4061 = vadd.s32 %v4011, 400
      %v4062 = vadd.s32 %v4011, 408
      %v4063 = vadd.s32 %v4011, 416
      %v4064 = vadd.s32 %v4011, 424
      %v4065 = vadd.s32 %v4011, 432
      %v4066 = vadd.s32 %v4011, 440
      %v4067 = vadd.s32 %v4011, 448
      %v4068 = vadd.s32 %v4011, 456
      %v4069 = vadd.s32 %v4011, 464
      %v4070 = vadd.s32 %v4011, 472
      %v4071 = vadd.s32 %v4011, 480
      %v4072 = vadd.s32 %v4011, 488
      %v4073 = vadd.s32 %v4011, 496
      %v4074 = vadd.s32 %v4011, 504
      %v4075 = vstv %s4009
      %v4076 = vadd.s32 %v4075, %v4011
      %v4077 = vadd.s32 %v4075, %v4012
      %v4078 = vadd.s32 %v4075, %v4013
      %v4079 = vadd.s32 %v4075, %v4014
      %v4080 = vadd.s32 %v4075, %v4015
      %v4081 = vadd.s32 %v4075, %v4016
      %v4082 = vadd.s32 %v4075, %v4017
      %v4083 = vadd.s32 %v4075, %v4018
      %v4084 = vadd.s32 %v4075, %v4019
      %v4085 = vadd.s32 %v4075, %v4020
      %v4086 = vadd.s32 %v4075, %v4021
      %v4087 = vadd.s32 %v4075, %v4022
      %v4088 = vadd.s32 %v4075, %v4023
      %v4089 = vadd.s32 %v4075, %v4024
      %v4090 = vadd.s32 %v4075, %v4025
      %v4091 = vadd.s32 %v4075, %v4026
      %v4092 = vadd.s32 %v4075, %v4027
      %v4093 = vadd.s32 %v4075, %v4028
      %v4094 = vadd.s32 %v4075, %v4029
      %v4095 = vadd.s32 %v4075, %v4030
      %v4096 = vadd.s32 %v4075, %v4031
      %v4097 = vadd.s32 %v4075, %v4032
      %v4098 = vadd.s32 %v4075, %v4033
      %v4099 = vadd.s32 %v4075, %v4034
      %v4100 = vadd.s32 %v4075, %v4035
      %v4101 = vadd.s32 %v4075, %v4036
      %v4102 = vadd.s32 %v4075, %v4037
      %v4103 = vadd.s32 %v4075, %v4038
      %v4104 = vadd.s32 %v4075, %v4039
      %v4105 = vadd.s32 %v4075, %v4040
      %v4106 = vadd.s32 %v4075, %v4041
      %v4107 = vadd.s32 %v4075, %v4042
      %v4108 = vadd.s32 %v4075, %v4043
      %v4109 = vadd.s32 %v4075, %v4044
      %v4110 = vadd.s32 %v4075, %v4045
      %v4111 = vadd.s32 %v4075, %v4046
      %v4112 = vadd.s32 %v4075, %v4047
      %v4113 = vadd.s32 %v4075, %v4048
      %v4114 = vadd.s32 %v4075, %v4049
      %v4115 = vadd.s32 %v4075, %v4050
      %v4116 = vadd.s32 %v4075, %v4051
      %v4117 = vadd.s32 %v4075, %v4052
      %v4118 = vadd.s32 %v4075, %v4053
      %v4119 = vadd.s32 %v4075, %v4054
      %v4120 = vadd.s32 %v4075, %v4055
      %v4121 = vadd.s32 %v4075, %v4056
      %v4122 = vadd.s32 %v4075, %v4057
      %v4123 = vadd.s32 %v4075, %v4058
      %v4124 = vadd.s32 %v4075, %v4059
      %v4125 = vadd.s32 %v4075, %v4060
      %v4126 = vadd.s32 %v4075, %v4061
      %v4127 = vadd.s32 %v4075, %v4062
      %v4128 = vadd.s32 %v4075, %v4063
      %v4129 = vadd.s32 %v4075, %v4064
      %v4130 = vadd.s32 %v4075, %v4065
      %v4131 = vadd.s32 %v4075, %v4066
      %v4132 = vadd.s32 %v4075, %v4067
      %v4133 = vadd.s32 %v4075, %v4068
      %v4134 = vadd.s32 %v4075, %v4069
      %v4135 = vadd.s32 %v4075, %v4070
      %v4136 = vadd.s32 %v4075, %v4071
      %v4137 = vadd.s32 %v4075, %v4072
      %v4138 = vadd.s32 %v4075, %v4073
      %v4139 = vadd.s32 %v4075, %v4074
      %vm4140 = vcmp.lt.s32.totalorder %v4076, 1584
      %vm4141 = vcmp.lt.s32.totalorder %v4077, 1584
      %vm4142 = vcmp.lt.s32.totalorder %v4078, 1584
      %vm4143 = vcmp.lt.s32.totalorder %v4079, 1584
      %vm4144 = vcmp.lt.s32.totalorder %v4080, 1584
      %vm4145 = vcmp.lt.s32.totalorder %v4081, 1584
      %vm4146 = vcmp.lt.s32.totalorder %v4082, 1584
      %vm4147 = vcmp.lt.s32.totalorder %v4083, 1584
      %vm4148 = vcmp.lt.s32.totalorder %v4084, 1584
      %vm4149 = vcmp.lt.s32.totalorder %v4085, 1584
      %vm4150 = vcmp.lt.s32.totalorder %v4086, 1584
      %vm4151 = vcmp.lt.s32.totalorder %v4087, 1584
      %vm4152 = vcmp.lt.s32.totalorder %v4088, 1584
      %vm4153 = vcmp.lt.s32.totalorder %v4089, 1584
      %vm4154 = vcmp.lt.s32.totalorder %v4090, 1584
      %vm4155 = vcmp.lt.s32.totalorder %v4091, 1584
      %vm4156 = vcmp.lt.s32.totalorder %v4092, 1584
      %vm4157 = vcmp.lt.s32.totalorder %v4093, 1584
      %vm4158 = vcmp.lt.s32.totalorder %v4094, 1584
      %vm4159 = vcmp.lt.s32.totalorder %v4095, 1584
      %vm4160 = vcmp.lt.s32.totalorder %v4096, 1584
      %vm4161 = vcmp.lt.s32.totalorder %v4097, 1584
      %vm4162 = vcmp.lt.s32.totalorder %v4098, 1584
      %vm4163 = vcmp.lt.s32.totalorder %v4099, 1584
      %vm4164 = vcmp.lt.s32.totalorder %v4100, 1584
      %vm4165 = vcmp.lt.s32.totalorder %v4101, 1584
      %vm4166 = vcmp.lt.s32.totalorder %v4102, 1584
      %vm4167 = vcmp.lt.s32.totalorder %v4103, 1584
      %vm4168 = vcmp.lt.s32.totalorder %v4104, 1584
      %vm4169 = vcmp.lt.s32.totalorder %v4105, 1584
      %vm4170 = vcmp.lt.s32.totalorder %v4106, 1584
      %vm4171 = vcmp.lt.s32.totalorder %v4107, 1584
      %vm4172 = vcmp.lt.s32.totalorder %v4108, 1584
      %vm4173 = vcmp.lt.s32.totalorder %v4109, 1584
      %vm4174 = vcmp.lt.s32.totalorder %v4110, 1584
      %vm4175 = vcmp.lt.s32.totalorder %v4111, 1584
      %vm4176 = vcmp.lt.s32.totalorder %v4112, 1584
      %vm4177 = vcmp.lt.s32.totalorder %v4113, 1584
      %vm4178 = vcmp.lt.s32.totalorder %v4114, 1584
      %vm4179 = vcmp.lt.s32.totalorder %v4115, 1584
      %vm4180 = vcmp.lt.s32.totalorder %v4116, 1584
      %vm4181 = vcmp.lt.s32.totalorder %v4117, 1584
      %vm4182 = vcmp.lt.s32.totalorder %v4118, 1584
      %vm4183 = vcmp.lt.s32.totalorder %v4119, 1584
      %vm4184 = vcmp.lt.s32.totalorder %v4120, 1584
      %vm4185 = vcmp.lt.s32.totalorder %v4121, 1584
      %vm4186 = vcmp.lt.s32.totalorder %v4122, 1584
      %vm4187 = vcmp.lt.s32.totalorder %v4123, 1584
      %vm4188 = vcmp.lt.s32.totalorder %v4124, 1584
      %vm4189 = vcmp.lt.s32.totalorder %v4125, 1584
      %vm4190 = vcmp.lt.s32.totalorder %v4126, 1584
      %vm4191 = vcmp.lt.s32.totalorder %v4127, 1584
      %vm4192 = vcmp.lt.s32.totalorder %v4128, 1584
      %vm4193 = vcmp.lt.s32.totalorder %v4129, 1584
      %vm4194 = vcmp.lt.s32.totalorder %v4130, 1584
      %vm4195 = vcmp.lt.s32.totalorder %v4131, 1584
      %vm4196 = vcmp.lt.s32.totalorder %v4132, 1584
      %vm4197 = vcmp.lt.s32.totalorder %v4133, 1584
      %vm4198 = vcmp.lt.s32.totalorder %v4134, 1584
      %vm4199 = vcmp.lt.s32.totalorder %v4135, 1584
      %vm4200 = vcmp.lt.s32.totalorder %v4136, 1584
      %vm4201 = vcmp.lt.s32.totalorder %v4137, 1584
      %vm4202 = vcmp.lt.s32.totalorder %v4138, 1584
      %vm4203 = vcmp.lt.s32.totalorder %v4139, 1584
      %v4204 = vmul.f32 %v3945, %v3945
      %v4205 = vmul.f32 %v3946, %v3946
      %v4206 = vmul.f32 %v3947, %v3947
      %v4207 = vmul.f32 %v3948, %v3948
      %v4208 = vmul.f32 %v3949, %v3949
      %v4209 = vmul.f32 %v3950, %v3950
      %v4210 = vmul.f32 %v3951, %v3951
      %v4211 = vmul.f32 %v3952, %v3952
      %v4212 = vmul.f32 %v3953, %v3953
      %v4213 = vmul.f32 %v3954, %v3954
      %v4214 = vmul.f32 %v3955, %v3955
      %v4215 = vmul.f32 %v3956, %v3956
      %v4216 = vmul.f32 %v3957, %v3957
      %v4217 = vmul.f32 %v3958, %v3958
      %v4218 = vmul.f32 %v3959, %v3959
      %v4219 = vmul.f32 %v3960, %v3960
      %v4220 = vmul.f32 %v3961, %v3961
      %v4221 = vmul.f32 %v3962, %v3962
      %v4222 = vmul.f32 %v3963, %v3963
      %v4223 = vmul.f32 %v3964, %v3964
      %v4224 = vmul.f32 %v3965, %v3965
      %v4225 = vmul.f32 %v3966, %v3966
      %v4226 = vmul.f32 %v3967, %v3967
      %v4227 = vmul.f32 %v3968, %v3968
      %v4228 = vmul.f32 %v3969, %v3969
      %v4229 = vmul.f32 %v3970, %v3970
      %v4230 = vmul.f32 %v3971, %v3971
      %v4231 = vmul.f32 %v3972, %v3972
      %v4232 = vmul.f32 %v3973, %v3973
      %v4233 = vmul.f32 %v3974, %v3974
      %v4234 = vmul.f32 %v3975, %v3975
      %v4235 = vmul.f32 %v3976, %v3976
      %v4236 = vmul.f32 %v3977, %v3977
      %v4237 = vmul.f32 %v3978, %v3978
      %v4238 = vmul.f32 %v3979, %v3979
      %v4239 = vmul.f32 %v3980, %v3980
      %v4240 = vmul.f32 %v3981, %v3981
      %v4241 = vmul.f32 %v3982, %v3982
      %v4242 = vmul.f32 %v3983, %v3983
      %v4243 = vmul.f32 %v3984, %v3984
      %v4244 = vmul.f32 %v3985, %v3985
      %v4245 = vmul.f32 %v3986, %v3986
      %v4246 = vmul.f32 %v3987, %v3987
      %v4247 = vmul.f32 %v3988, %v3988
      %v4248 = vmul.f32 %v3989, %v3989
      %v4249 = vmul.f32 %v3990, %v3990
      %v4250 = vmul.f32 %v3991, %v3991
      %v4251 = vmul.f32 %v3992, %v3992
      %v4252 = vmul.f32 %v3993, %v3993
      %v4253 = vmul.f32 %v3994, %v3994
      %v4254 = vmul.f32 %v3995, %v3995
      %v4255 = vmul.f32 %v3996, %v3996
      %v4256 = vmul.f32 %v3997, %v3997
      %v4257 = vmul.f32 %v3998, %v3998
      %v4258 = vmul.f32 %v3999, %v3999
      %v4259 = vmul.f32 %v4000, %v4000
      %v4260 = vmul.f32 %v4001, %v4001
      %v4261 = vmul.f32 %v4002, %v4002
      %v4262 = vmul.f32 %v4003, %v4003
      %v4263 = vmul.f32 %v4004, %v4004
      %v4264 = vmul.f32 %v4005, %v4005
      %v4265 = vmul.f32 %v4006, %v4006
      %v4266 = vmul.f32 %v4007, %v4007
      %v4267 = vmul.f32 %v4008, %v4008
      %v4268 = vsel %vm4140, %v4204, 0.0
      %v4269 = vsel %vm4141, %v4205, 0.0
      %v4270 = vsel %vm4142, %v4206, 0.0
      %v4271 = vsel %vm4143, %v4207, 0.0
      %v4272 = vsel %vm4144, %v4208, 0.0
      %v4273 = vsel %vm4145, %v4209, 0.0
      %v4274 = vsel %vm4146, %v4210, 0.0
      %v4275 = vsel %vm4147, %v4211, 0.0
      %v4276 = vsel %vm4148, %v4212, 0.0
      %v4277 = vsel %vm4149, %v4213, 0.0
      %v4278 = vsel %vm4150, %v4214, 0.0
      %v4279 = vsel %vm4151, %v4215, 0.0
      %v4280 = vsel %vm4152, %v4216, 0.0
      %v4281 = vsel %vm4153, %v4217, 0.0
      %v4282 = vsel %vm4154, %v4218, 0.0
      %v4283 = vsel %vm4155, %v4219, 0.0
      %v4284 = vsel %vm4156, %v4220, 0.0
      %v4285 = vsel %vm4157, %v4221, 0.0
      %v4286 = vsel %vm4158, %v4222, 0.0
      %v4287 = vsel %vm4159, %v4223, 0.0
      %v4288 = vsel %vm4160, %v4224, 0.0
      %v4289 = vsel %vm4161, %v4225, 0.0
      %v4290 = vsel %vm4162, %v4226, 0.0
      %v4291 = vsel %vm4163, %v4227, 0.0
      %v4292 = vsel %vm4164, %v4228, 0.0
      %v4293 = vsel %vm4165, %v4229, 0.0
      %v4294 = vsel %vm4166, %v4230, 0.0
      %v4295 = vsel %vm4167, %v4231, 0.0
      %v4296 = vsel %vm4168, %v4232, 0.0
      %v4297 = vsel %vm4169, %v4233, 0.0
      %v4298 = vsel %vm4170, %v4234, 0.0
      %v4299 = vsel %vm4171, %v4235, 0.0
      %v4300 = vsel %vm4172, %v4236, 0.0
      %v4301 = vsel %vm4173, %v4237, 0.0
      %v4302 = vsel %vm4174, %v4238, 0.0
      %v4303 = vsel %vm4175, %v4239, 0.0
      %v4304 = vsel %vm4176, %v4240, 0.0
      %v4305 = vsel %vm4177, %v4241, 0.0
      %v4306 = vsel %vm4178, %v4242, 0.0
      %v4307 = vsel %vm4179, %v4243, 0.0
      %v4308 = vsel %vm4180, %v4244, 0.0
      %v4309 = vsel %vm4181, %v4245, 0.0
      %v4310 = vsel %vm4182, %v4246, 0.0
      %v4311 = vsel %vm4183, %v4247, 0.0
      %v4312 = vsel %vm4184, %v4248, 0.0
      %v4313 = vsel %vm4185, %v4249, 0.0
      %v4314 = vsel %vm4186, %v4250, 0.0
      %v4315 = vsel %vm4187, %v4251, 0.0
      %v4316 = vsel %vm4188, %v4252, 0.0
      %v4317 = vsel %vm4189, %v4253, 0.0
      %v4318 = vsel %vm4190, %v4254, 0.0
      %v4319 = vsel %vm4191, %v4255, 0.0
      %v4320 = vsel %vm4192, %v4256, 0.0
      %v4321 = vsel %vm4193, %v4257, 0.0
      %v4322 = vsel %vm4194, %v4258, 0.0
      %v4323 = vsel %vm4195, %v4259, 0.0
      %v4324 = vsel %vm4196, %v4260, 0.0
      %v4325 = vsel %vm4197, %v4261, 0.0
      %v4326 = vsel %vm4198, %v4262, 0.0
      %v4327 = vsel %vm4199, %v4263, 0.0
      %v4328 = vsel %vm4200, %v4264, 0.0
      %v4329 = vsel %vm4201, %v4265, 0.0
      %v4330 = vsel %vm4202, %v4266, 0.0
      %v4331 = vsel %vm4203, %v4267, 0.0
      %4332 = vst.msk [vmem:[%s145] sm:$0xff] %vm3048, %v4268
      %4333 = vst.msk [vmem:[%s145 + $0x8] sm:$0xff] %vm3048, %v4269
      %4334 = vst.msk [vmem:[%s145 + $0x10] sm:$0xff] %vm3048, %v4270
      %4335 = vst.msk [vmem:[%s145 + $0x18] sm:$0xff] %vm3048, %v4271
      %4336 = vst.msk [vmem:[%s145 + $0x20] sm:$0xff] %vm3048, %v4272
      %4337 = vst.msk [vmem:[%s145 + $0x28] sm:$0xff] %vm3048, %v4273
      %4338 = vst.msk [vmem:[%s145 + $0x30] sm:$0xff] %vm3048, %v4274
      %4339 = vst.msk [vmem:[%s145 + $0x38] sm:$0xff] %vm3048, %v4275
      %4340 = vst.msk [vmem:[%s145 + $0x40] sm:$0xff] %vm3048, %v4276
      %4341 = vst.msk [vmem:[%s145 + $0x48] sm:$0xff] %vm3048, %v4277
      %4342 = vst.msk [vmem:[%s145 + $0x50] sm:$0xff] %vm3048, %v4278
      %4343 = vst.msk [vmem:[%s145 + $0x58] sm:$0xff] %vm3048, %v4279
      %4344 = vst.msk [vmem:[%s145 + $0x60] sm:$0xff] %vm3048, %v4280
      %4345 = vst.msk [vmem:[%s145 + $0x68] sm:$0xff] %vm3048, %v4281
      %4346 = vst.msk [vmem:[%s145 + $0x70] sm:$0xff] %vm3048, %v4282
      %4347 = vst.msk [vmem:[%s145 + $0x78] sm:$0xff] %vm3048, %v4283
      %4348 = vst.msk [vmem:[%s145 + $0x80] sm:$0xff] %vm3048, %v4284
      %4349 = vst.msk [vmem:[%s145 + $0x88] sm:$0xff] %vm3048, %v4285
      %4350 = vst.msk [vmem:[%s145 + $0x90] sm:$0xff] %vm3048, %v4286
      %4351 = vst.msk [vmem:[%s145 + $0x98] sm:$0xff] %vm3048, %v4287
      %4352 = vst.msk [vmem:[%s145 + $0xa0] sm:$0xff] %vm3048, %v4288
      %4353 = vst.msk [vmem:[%s145 + $0xa8] sm:$0xff] %vm3048, %v4289
      %4354 = vst.msk [vmem:[%s145 + $0xb0] sm:$0xff] %vm3048, %v4290
      %4355 = vst.msk [vmem:[%s145 + $0xb8] sm:$0xff] %vm3048, %v4291
      %4356 = vst.msk [vmem:[%s145 + $0xc0] sm:$0xff] %vm3048, %v4292
      %4357 = vst.msk [vmem:[%s145 + $0xc8] sm:$0xff] %vm3048, %v4293
      %4358 = vst.msk [vmem:[%s145 + $0xd0] sm:$0xff] %vm3048, %v4294
      %4359 = vst.msk [vmem:[%s145 + $0xd8] sm:$0xff] %vm3048, %v4295
      %4360 = vst.msk [vmem:[%s145 + $0xe0] sm:$0xff] %vm3048, %v4296
      %4361 = vst.msk [vmem:[%s145 + $0xe8] sm:$0xff] %vm3048, %v4297
      %4362 = vst.msk [vmem:[%s145 + $0xf0] sm:$0xff] %vm3048, %v4298
      %4363 = vst.msk [vmem:[%s145 + $0xf8] sm:$0xff] %vm3048, %v4299
      %4364 = vst.msk [vmem:[%s145 + $0x100] sm:$0xff] %vm3048, %v4300
      %4365 = vst.msk [vmem:[%s145 + $0x108] sm:$0xff] %vm3048, %v4301
      %4366 = vst.msk [vmem:[%s145 + $0x110] sm:$0xff] %vm3048, %v4302
      %4367 = vst.msk [vmem:[%s145 + $0x118] sm:$0xff] %vm3048, %v4303
      %4368 = vst.msk [vmem:[%s145 + $0x120] sm:$0xff] %vm3048, %v4304
      %4369 = vst.msk [vmem:[%s145 + $0x128] sm:$0xff] %vm3048, %v4305
      %4370 = vst.msk [vmem:[%s145 + $0x130] sm:$0xff] %vm3048, %v4306
      %4371 = vst.msk [vmem:[%s145 + $0x138] sm:$0xff] %vm3048, %v4307
      %4372 = vst.msk [vmem:[%s145 + $0x140] sm:$0xff] %vm3048, %v4308
      %4373 = vst.msk [vmem:[%s145 + $0x148] sm:$0xff] %vm3048, %v4309
      %4374 = vst.msk [vmem:[%s145 + $0x150] sm:$0xff] %vm3048, %v4310
      %4375 = vst.msk [vmem:[%s145 + $0x158] sm:$0xff] %vm3048, %v4311
      %4376 = vst.msk [vmem:[%s145 + $0x160] sm:$0xff] %vm3048, %v4312
      %4377 = vst.msk [vmem:[%s145 + $0x168] sm:$0xff] %vm3048, %v4313
      %4378 = vst.msk [vmem:[%s145 + $0x170] sm:$0xff] %vm3048, %v4314
      %4379 = vst.msk [vmem:[%s145 + $0x178] sm:$0xff] %vm3048, %v4315
      %4380 = vst.msk [vmem:[%s145 + $0x180] sm:$0xff] %vm3048, %v4316
      %4381 = vst.msk [vmem:[%s145 + $0x188] sm:$0xff] %vm3048, %v4317
      %4382 = vst.msk [vmem:[%s145 + $0x190] sm:$0xff] %vm3048, %v4318
      %4383 = vst.msk [vmem:[%s145 + $0x198] sm:$0xff] %vm3048, %v4319
      %4384 = vst.msk [vmem:[%s145 + $0x1a0] sm:$0xff] %vm3048, %v4320
      %4385 = vst.msk [vmem:[%s145 + $0x1a8] sm:$0xff] %vm3048, %v4321
      %4386 = vst.msk [vmem:[%s145 + $0x1b0] sm:$0xff] %vm3048, %v4322
      %4387 = vst.msk [vmem:[%s145 + $0x1b8] sm:$0xff] %vm3048, %v4323
      %4388 = vst.msk [vmem:[%s145 + $0x1c0] sm:$0xff] %vm3048, %v4324
      %4389 = vst.msk [vmem:[%s145 + $0x1c8] sm:$0xff] %vm3048, %v4325
      %4390 = vst.msk [vmem:[%s145 + $0x1d0] sm:$0xff] %vm3048, %v4326
      %4391 = vst.msk [vmem:[%s145 + $0x1d8] sm:$0xff] %vm3048, %v4327
      %4392 = vst.msk [vmem:[%s145 + $0x1e0] sm:$0xff] %vm3048, %v4328
      %4393 = vst.msk [vmem:[%s145 + $0x1e8] sm:$0xff] %vm3048, %v4329
      %4394 = vst.msk [vmem:[%s145 + $0x1f0] sm:$0xff] %vm3048, %v4330
      %4395 = vst.msk [vmem:[%s145 + $0x1f8] sm:$0xff] %vm3048, %v4331
      %s4396 = smul.u32 64, %s13
      %p4397 = scmp.lt.s32.totalorder %s4396, 255
      %s4398 = scalar_select %p4397, %s4396, 255
      %s4399 = smul.addr %s4398, 8
      %s4400 = scalar_lea.vmem %s2, %s4399
      // Predicated region
      $region29: #{tpu_custom_call.1} parent=27 // pred_check
        %p4401 = pneg %p78
      $region30: #{tpu_custom_call.1} parent=27 // pred_check_branch
        %4403 = sbr.rel (%p4401) target = $region32
      $region31: #{tpu_custom_call.1} parent=27 // pred_region
        %s4404 = smul.u32 64, %s13
      $region32: #{tpu_custom_call.1} parent=27 // pred_fallthru
        _
    $region28: #{tpu_custom_call.1} parent=5 // pred_fallthru
      _
    %p4405 = scmp.le.s32.totalorder 2, %s8
    // Predicated region
    $region33: #{tpu_custom_call.1} parent=5 // pred_check
      %p4406 = pneg %p4405
    $region34: #{tpu_custom_call.1} parent=5 // pred_check_branch
      %4408 = sbr.rel (%p4406) target = $region36
    $region35: #{tpu_custom_call.1} parent=5 // pred_region
      %s4409 = ssub.s32 %s8, 2
      // Predicated region
      $region37: #{tpu_custom_call.1} parent=35 // pred_check
        %p4410 = pneg %p84
      $region38: #{tpu_custom_call.1} parent=35 // pred_check_branch
        %4412 = sbr.rel (%p4410) target = $region40
      $region39: #{tpu_custom_call.1} parent=35 // pred_region
        %s4413 = smul.u32 64, %s14
        %p4414 = scmp.lt.s32.totalorder %s4413, 255
        %s4415 = scalar_select %p4414, %s4413, 255
        %s4416 = smul.addr %s4415, 8
        %s4417 = scalar_lea.vmem %s2, %s4416
      $region40: #{tpu_custom_call.1} parent=35 // pred_fallthru
        _
    $region36: #{tpu_custom_call.1} parent=5 // pred_fallthru
      _
  $region6: #{tpu_custom_call.1} parent=0 // loop_footer
    %s12 = sadd.s32 1, %s8
  $region7: #{tpu_custom_call.1} parent=0 // loop_footer_branch
    %7 = sbr.rel target = $region3
  $region8: #{tpu_custom_call.1} parent=0 // loop_exit
    _

</llo_original>
